<compile_context>
chip_gen: v6e
topology: v6e:2x2x1
jax: 0.10.0
libtpu: 0.0.40
codegen_flags: <defaults>
</compile_context>

<pallas_src>
import functools
import numpy as np
import jax
import jax.numpy as jnp
from jax.experimental import pallas as pl
from jax.experimental.pallas import tpu as pltpu

# ---- model dimensions (PyTorch defaults) ----
INPUT_DIM = 5
H1 = 256                 # hidden_dim1
H2 = 512                 # hidden_dim2
OUT_DIM = 181
EDGE_HID = H1 // 2       # 128
EIG_HID = H2             # 512
EIG_OUT = OUT_DIM - 1    # 180
RESHAPE_DIM = 16
SEQ_LEN = EIG_HID // RESHAPE_DIM   # 32
LN_EPS = 1e-5

OUT_PAD = 256            # lane-dense padded output width (col 0 = edge, cols 1..180 = eig)


def _ln(x, w, b):
    """LayerNorm over last dim (biased variance, eps=1e-5), matching nn.LayerNorm."""
    mu = jnp.mean(x, axis=-1, keepdims=True)
    xc = x - mu
    var = jnp.mean(xc * xc, axis=-1, keepdims=True)
    return xc * jax.lax.rsqrt(var + LN_EPS) * w + b


def _gelu_erf(x):
    """Exact (erf-based) GELU -- matches torch.nn.GELU() default. Pure VPU polynomial."""
    return 0.5 * x * (1.0 + jax.lax.erf(x * 0.7071067811865476))


def _gelu_tanh(x):
    """tanh-approx GELU (torch GELU(approximate='tanh')).  tanh goes to the EUP slot,
    leaving only ~6-8 VALU ops/element -- this removes the erf VALU wall."""
    c = 0.7978845608028654  # sqrt(2/pi)
    return 0.5 * x * (1.0 + jnp.tanh(c * (x + 0.044715 * x * x * x)))


def _mm(a, w_ref, b_ref):
    """MXU matmul: cast the activation to the weight's storage dtype (bf16 or f32),
    accumulate in f32, add the f32 bias."""
    w = w_ref[...]
    return jnp.dot(a.astype(w.dtype), w, preferred_element_type=jnp.float32) + b_ref[...]


def make_bdg_kernel(gelu):
    """Kernel factory so the GELU flavour (erf vs tanh) is a trace-time choice."""

    def bdg_kernel(x_ref,
                   # feature extractor
                   w_in_ref, b_in_ref, ln1_w_ref, ln1_b_ref,
                   w_hid_ref, b_hid_ref, ln2_w_ref, ln2_b_ref,
                   w_res_ref, b_res_ref,
                   # edge localization head
                   we1_ref, be1_ref, eln_w_ref, eln_b_ref, we2_row_ref, be2_ref,
                   # eigenvalue spectrum head
                   wg1_ref, bg1_ref, gln1_w_ref, gln1_b_ref,
                   wconv_ref, bconv_ref, lnc_w_ref, lnc_b_ref,
                   wg2_ref, bg2_ref,
                   # output (lane-dense, 256 wide)
                   out_ref):
        x = x_ref[...]

        # ---- FeatureExtractor ----
        x1 = gelu(_ln(_mm(x, w_in_ref, b_in_ref), ln1_w_ref[...], ln1_b_ref[...]))
        # dropout1: identity (eval)
        resid = _mm(x1, w_res_ref, b_res_ref)
        x2 = gelu(_ln(_mm(x1, w_hid_ref, b_hid_ref), ln2_w_ref[...], ln2_b_ref[...]))
        # dropout2: identity (eval)
        feats = x2 + resid

        # ---- EdgeLocalizationHead ----
        e = gelu(_ln(_mm(feats, we1_ref, be1_ref), eln_w_ref[...], eln_b_ref[...]))
        # N=1 matmul replaced by VPU multiply + lane (XLU) reduction: frees the MXU
        # and avoids a 1-lane masked store.
        edge = jnp.sum(e * we2_row_ref[...], axis=-1, keepdims=True) + be2_ref[...]

        # ---- EigenvalueSpectrumHead ----
        g = gelu(_ln(_mm(feats, wg1_ref, bg1_ref), gln1_w_ref[...], gln1_b_ref[...]))
        # conv1d folded into a dense matmul (flattened channel*seq order == torch .view order)
        c = _mm(g, wconv_ref, bconv_ref)
        c = gelu(_ln(c, lnc_w_ref[...], lnc_b_ref[...])) + g   # LN over all 512, gelu, residual
        eig_pad = _mm(c, wg2_ref, bg2_ref)   # (tb, 256); cols 1..180 real, col 0 & 181.. exact 0

        # single unmasked, lane-dense store: col 0 = edge, cols 1..180 = eigenvalues.
        # eig_pad[:, 0] is exactly zero, so an add with a one-hot column is exact.
        col0 = (jax.lax.broadcasted_iota(jnp.int32, (1, OUT_PAD), 1) == 0
                ).astype(jnp.float32)
        out_ref[...] = eig_pad + edge * col0

    return bdg_kernel


def conv1d_to_dense(conv_w, conv_b):
    """Fold nn.Conv1d(16, 16, 3, padding=1) into a dense [512, 512] matmul + bias,
    in the flattened index order (channel * SEQ_LEN + seq) used by torch .view().
    Each dense entry is a single copy of a conv weight (no accumulation), so casting
    the dense matrix to bf16 is identical to casting the conv weights first."""
    W = np.asarray(conv_w)        # (out_ch, in_ch, K)
    C, S, K = RESHAPE_DIM, SEQ_LEN, 3
    dense = np.zeros((C * S, C * S), np.float32)
    for k in range(K):
        for s in range(S):
            t = s + k - 1         # input seq position (padding=1)
            if 0 <= t < S:
                rows = np.arange(C) * S + t    # flattened input index  i*S + t
                cols = np.arange(C) * S + s    # flattened output index o*S + s
                dense[np.ix_(rows, cols)] += W[:, :, k].T   # [i, o] = W[o, i, k]
    bflat = np.repeat(np.asarray(conv_b), S).astype(np.float32)
    return jnp.asarray(dense), jnp.asarray(bflat).reshape(1, C * S)


def init_params(key):
    keys = jax.random.split(key, 20)

    def linear(k, fin, fout):
        k1, k2 = jax.random.split(k)
        bound = 1.0 / np.sqrt(fin)
        w = jax.random.uniform(k1, (fin, fout), jnp.float32, -bound, bound)
        b = jax.random.uniform(k2, (1, fout), jnp.float32, -bound, bound)
        return w, b

    def ln_params(k, n):
        k1, k2 = jax.random.split(k)
        w = 1.0 + 0.1 * jax.random.normal(k1, (1, n), jnp.float32)
        b = 0.1 * jax.random.normal(k2, (1, n), jnp.float32)
        return w, b

    p = {}
    # FeatureExtractor
    p['w_in'], p['b_in'] = linear(keys[0], INPUT_DIM, H1)
    p['ln1_w'], p['ln1_b'] = ln_params(keys[1], H1)
    p['w_hid'], p['b_hid'] = linear(keys[2], H1, H2)
    p['ln2_w'], p['ln2_b'] = ln_params(keys[3], H2)
    p['w_res'], p['b_res'] = linear(keys[4], H1, H2)
    # EdgeLocalizationHead
    p['we1'], p['be1'] = linear(keys[5], H2, EDGE_HID)
    p['eln_w'], p['eln_b'] = ln_params(keys[6], EDGE_HID)
    p['we2'], p['be2'] = linear(keys[7], EDGE_HID, 1)
    # EigenvalueSpectrumHead
    p['wg1'], p['bg1'] = linear(keys[8], H2, EIG_HID)
    p['gln1_w'], p['gln1_b'] = ln_params(keys[9], EIG_HID)
    cb = 1.0 / np.sqrt(RESHAPE_DIM * 3)
    p['conv_w'] = jax.random.uniform(keys[10], (RESHAPE_DIM, RESHAPE_DIM, 3),
                                     jnp.float32, -cb, cb)
    p['conv_b'] = jax.random.uniform(keys[11], (RESHAPE_DIM,), jnp.float32, -cb, cb)
    lw, lb = ln_params(keys[12], RESHAPE_DIM * SEQ_LEN)
    p['lnc_w'] = lw.reshape(RESHAPE_DIM, SEQ_LEN)   # nn.LayerNorm([16, 32]) weight
    p['lnc_b'] = lb.reshape(RESHAPE_DIM, SEQ_LEN)
    p['wg2'], p['bg2'] = linear(keys[13], EIG_HID, EIG_OUT)
    return p


def bdg_forward(x, p, *, tile_b=256, weights_dtype=jnp.bfloat16,
                use_tanh_gelu=True, core_parallel=False,
                vmem_limit_bytes=32 * 1024 * 1024):
    """Pallas forward pass.

    Batch is tiled onto the grid; all weights stay VMEM-resident (constant index_map).
    weights_dtype: storage/MXU dtype of the large interior weights (w_hid, w_res, we1,
                   wg1, wconv, wg2); biases / LN params / accumulation stay f32.
    use_tanh_gelu: tanh-approx GELU (EUP, fast) vs exact erf GELU (torch parity).
    core_parallel: use pltpu.CORE_PARALLEL dimension semantics (v7x 2-TC sharding);
                   default "parallel" is the safe portable setting.
    """
    B = x.shape[0]
    wd = weights_dtype

    wconv_dense, bconv_flat = conv1d_to_dense(p['conv_w'], p['conv_b'])

    # Pad wg2/bg2 to a lane-dense 256-wide output: eigenvalues live in columns 1..180,
    # column 0 (edge slot) and columns 181..255 are exact zeros.
    wg2_pad = jnp.zeros((EIG_HID, OUT_PAD), jnp.float32).at[:, 1:1 + EIG_OUT].set(p['wg2'])
    bg2_pad = jnp.zeros((1, OUT_PAD), jnp.float32).at[:, 1:1 + EIG_OUT].set(p['bg2'])

    args = [
        p['w_in'], p['b_in'], p['ln1_w'], p['ln1_b'],           # tiny input matmul stays f32
        p['w_hid'].astype(wd), p['b_hid'], p['ln2_w'], p['ln2_b'],
        p['w_res'].astype(wd), p['b_res'],
        p['we1'].astype(wd), p['be1'], p['eln_w'], p['eln_b'],
        p['we2'].reshape(1, EDGE_HID), p['be2'],
        p['wg1'].astype(wd), p['bg1'], p['gln1_w'], p['gln1_b'],
        wconv_dense.astype(wd), bconv_flat,
        p['lnc_w'].reshape(1, RESHAPE_DIM * SEQ_LEN),
        p['lnc_b'].reshape(1, RESHAPE_DIM * SEQ_LEN),
        wg2_pad.astype(wd), bg2_pad,                             # bf16 operand, f32 acc+bias
    ]

    # Batch tiling: tile must be a multiple of 8 (sublane).  Cap the tile at
    # round_up(ceil(B/2), 8) so the grid always has >= 2 steps for B > 8 (keeps both
    # v7x TensorCores busy for small/medium batches); pad B up to a whole grid.
    half = ((-(-B // 2)) + 7) // 8 * 8
    tb = max(8, min(tile_b, half))
    n_tiles = pl.cdiv(B, tb)
    Bp = n_tiles * tb
    x_pad = x if Bp == B else jnp.zeros((Bp, INPUT_DIM), x.dtype).at[:B].set(x)

    in_specs = ([pl.BlockSpec((tb, INPUT_DIM), lambda i: (i, 0))] +
                [pl.BlockSpec(a.shape, lambda i: (0, 0)) for a in args])
    out_spec = pl.BlockSpec((tb, OUT_PAD), lambda i: (i, 0))

    dim_sem = (pltpu.CORE_PARALLEL,) if core_parallel else ("parallel",)

    kernel = make_bdg_kernel(_gelu_tanh if use_tanh_gelu else _gelu_erf)

    out = pl.pallas_call(
        kernel,
        out_shape=jax.ShapeDtypeStruct((Bp, OUT_PAD), jnp.float32),
        grid_spec=pltpu.PrefetchScalarGridSpec(
            num_scalar_prefetch=0,
            grid=(n_tiles,),
            in_specs=in_specs,
            out_specs=out_spec,
        ),
        compiler_params=pltpu.CompilerParams(
            dimension_semantics=dim_sem,
            # ~5-6 MB footprint at tb=256; 32 MiB is safe on v5e/v6e (128 MiB) and
            # v7x (64 MiB).  Recompute before raising tile_b beyond ~512 on v7x.
            vmem_limit_bytes=vmem_limit_bytes,
        ),
    )(x_pad, *args)

    # Columns 0..180 are already [edge | eigenvalues] == torch.cat([edge_loc, eig], dim=1)
    return out[:B, :OUT_DIM]


def reference_forward(x, p, weights_dtype=jnp.float32, use_tanh_gelu=False):
    """Pure-JAX reference matching the PyTorch module (eval mode) with explicit conv1d.
    With weights_dtype=bf16 / use_tanh_gelu=True it mirrors the kernel's
    mixed-precision + tanh-GELU schedule exactly."""
    wd = weights_dtype
    gelu = _gelu_tanh if use_tanh_gelu else _gelu_erf

    def ln(v, w, b):
        mu = v.mean(-1, keepdims=True)
        var = ((v - mu) ** 2).mean(-1, keepdims=True)
        return (v - mu) / jnp.sqrt(var + LN_EPS) * w + b

    def mm_lp(a, w):   # the matmuls the kernel runs at weights_dtype precision
        return jnp.dot(a.astype(wd), w.astype(wd), preferred_element_type=jnp.float32)

    B = x.shape[0]
    x1 = gelu(ln(x @ p['w_in'] + p['b_in'], p['ln1_w'], p['ln1_b']))          # f32
    resid = mm_lp(x1, p['w_res']) + p['b_res']
    x2 = gelu(ln(mm_lp(x1, p['w_hid']) + p['b_hid'], p['ln2_w'], p['ln2_b']))
    feats = x2 + resid
    # edge head (note: torch module assigns `residual = x` but never uses it)
    e = gelu(ln(mm_lp(feats, p['we1']) + p['be1'], p['eln_w'], p['eln_b']))
    edge = e @ p['we2'] + p['be2']                                            # f32
    # eigenvalue head
    h = gelu(ln(mm_lp(feats, p['wg1']) + p['bg1'], p['gln1_w'], p['gln1_b']))
    xr = h.reshape(B, RESHAPE_DIM, SEQ_LEN)
    xp = jnp.pad(xr.astype(wd), ((0, 0), (0, 0), (1, 1)))
    conv = p['conv_b'][None, :, None].astype(jnp.float32)
    for k in range(3):
        conv = conv + jnp.einsum('oi,bis->bos', p['conv_w'][:, :, k].astype(wd),
                                 xp[:, :, k:k + SEQ_LEN],
                                 preferred_element_type=jnp.float32)
    mu = conv.mean(axis=(-2, -1), keepdims=True)
    var = ((conv - mu) ** 2).mean(axis=(-2, -1), keepdims=True)
    c = (conv - mu) / jnp.sqrt(var + LN_EPS) * p['lnc_w'][None] + p['lnc_b'][None]
    c = gelu(c) + xr
    eig = mm_lp(c.reshape(B, -1), p['wg2']) + p['bg2']
    return jnp.concatenate([edge, eig], axis=1)


if __name__ == "__main__":
    key = jax.random.PRNGKey(0)
    pkey, xkey = jax.random.split(key)
    params = init_params(pkey)

    # Small batch, deliberately not a multiple of 8, to exercise batch padding and a
    # 2-step grid (tile is capped at round_up(ceil(B/2), 8) = 16 here).
    B = 20
    x = jax.random.normal(xkey, (B, INPUT_DIM), jnp.float32)

    # 1) strict-parity path: f32 weights + erf GELU vs. faithful pure-JAX reference
    out_f32 = jax.block_until_ready(
        bdg_forward(x, params, weights_dtype=jnp.float32, use_tanh_gelu=False))
    assert out_f32.shape == (B, OUT_DIM), out_f32.shape
    ref_f32 = reference_forward(x, params, weights_dtype=jnp.float32, use_tanh_gelu=False)
    np.testing.assert_allclose(np.asarray(out_f32), np.asarray(ref_f32),
                               rtol=2e-3, atol=2e-3)

    # 2) default fast path: bf16 interior weights + tanh GELU vs. precision-matched ref
    out_fast = jax.block_until_ready(bdg_forward(x, params))
    assert out_fast.shape == (B, OUT_DIM), out_fast.shape
    ref_fast = reference_forward(x, params, weights_dtype=jnp.bfloat16, use_tanh_gelu=True)
    np.testing.assert_allclose(np.asarray(out_fast), np.asarray(ref_fast),
                               rtol=2e-3, atol=2e-3)

    print("KERNEL_OK")
</pallas_src>

<mosaic_0001>
module attributes {stable_mosaic.version = 11 : i64} {
  func.func @bdg_kernel(%arg0: i32, %arg1: memref<16x5xf32, #tpu.memory_space<vmem>>, %arg2: memref<5x256xf32, #tpu.memory_space<vmem>>, %arg3: memref<1x256xf32, #tpu.memory_space<vmem>>, %arg4: memref<1x256xf32, #tpu.memory_space<vmem>>, %arg5: memref<1x256xf32, #tpu.memory_space<vmem>>, %arg6: memref<256x512xf32, #tpu.memory_space<vmem>>, %arg7: memref<1x512xf32, #tpu.memory_space<vmem>>, %arg8: memref<1x512xf32, #tpu.memory_space<vmem>>, %arg9: memref<1x512xf32, #tpu.memory_space<vmem>>, %arg10: memref<256x512xf32, #tpu.memory_space<vmem>>, %arg11: memref<1x512xf32, #tpu.memory_space<vmem>>, %arg12: memref<512x128xf32, #tpu.memory_space<vmem>>, %arg13: memref<1x128xf32, #tpu.memory_space<vmem>>, %arg14: memref<1x128xf32, #tpu.memory_space<vmem>>, %arg15: memref<1x128xf32, #tpu.memory_space<vmem>>, %arg16: memref<1x128xf32, #tpu.memory_space<vmem>>, %arg17: memref<1x1xf32, #tpu.memory_space<vmem>>, %arg18: memref<512x512xf32, #tpu.memory_space<vmem>>, %arg19: memref<1x512xf32, #tpu.memory_space<vmem>>, %arg20: memref<1x512xf32, #tpu.memory_space<vmem>>, %arg21: memref<1x512xf32, #tpu.memory_space<vmem>>, %arg22: memref<512x512xf32, #tpu.memory_space<vmem>>, %arg23: memref<1x512xf32, #tpu.memory_space<vmem>>, %arg24: memref<1x512xf32, #tpu.memory_space<vmem>>, %arg25: memref<1x512xf32, #tpu.memory_space<vmem>>, %arg26: memref<512x256xf32, #tpu.memory_space<vmem>>, %arg27: memref<1x256xf32, #tpu.memory_space<vmem>>, %arg28: memref<16x256xf32, #tpu.memory_space<vmem>>) attributes {dimension_semantics = [#tpu.dimension_semantics<parallel>], iteration_bounds = array<i64: 2>, scalar_prefetch = 0 : i64, scratch_operands = 0 : i64, tpu.core_type = #tpu.core_type<tc>, window_params = [{transform_indices = @transform_0, window_bounds = array<i64: 16, 5>}, {pipeline_mode = #tpu.pipeline_mode<synchronous>, transform_indices = @transform_1, window_bounds = array<i64: 5, 256>}, {pipeline_mode = #tpu.pipeline_mode<synchronous>, transform_indices = @transform_2, window_bounds = array<i64: 1, 256>}, {pipeline_mode = #tpu.pipeline_mode<synchronous>, transform_indices = @transform_3, window_bounds = array<i64: 1, 256>}, {pipeline_mode = #tpu.pipeline_mode<synchronous>, transform_indices = @transform_4, window_bounds = array<i64: 1, 256>}, {pipeline_mode = #tpu.pipeline_mode<synchronous>, transform_indices = @transform_5, window_bounds = array<i64: 256, 512>}, {pipeline_mode = #tpu.pipeline_mode<synchronous>, transform_indices = @transform_6, window_bounds = array<i64: 1, 512>}, {pipeline_mode = #tpu.pipeline_mode<synchronous>, transform_indices = @transform_7, window_bounds = array<i64: 1, 512>}, {pipeline_mode = #tpu.pipeline_mode<synchronous>, transform_indices = @transform_8, window_bounds = array<i64: 1, 512>}, {pipeline_mode = #tpu.pipeline_mode<synchronous>, transform_indices = @transform_9, window_bounds = array<i64: 256, 512>}, {pipeline_mode = #tpu.pipeline_mode<synchronous>, transform_indices = @transform_10, window_bounds = array<i64: 1, 512>}, {pipeline_mode = #tpu.pipeline_mode<synchronous>, transform_indices = @transform_11, window_bounds = array<i64: 512, 128>}, {pipeline_mode = #tpu.pipeline_mode<synchronous>, transform_indices = @transform_12, window_bounds = array<i64: 1, 128>}, {pipeline_mode = #tpu.pipeline_mode<synchronous>, transform_indices = @transform_13, window_bounds = array<i64: 1, 128>}, {pipeline_mode = #tpu.pipeline_mode<synchronous>, transform_indices = @transform_14, window_bounds = array<i64: 1, 128>}, {pipeline_mode = #tpu.pipeline_mode<synchronous>, transform_indices = @transform_15, window_bounds = array<i64: 1, 128>}, {pipeline_mode = #tpu.pipeline_mode<synchronous>, transform_indices = @transform_16, window_bounds = array<i64: 1, 1>}, {pipeline_mode = #tpu.pipeline_mode<synchronous>, transform_indices = @transform_17, window_bounds = array<i64: 512, 512>}, {pipeline_mode = #tpu.pipeline_mode<synchronous>, transform_indices = @transform_18, window_bounds = array<i64: 1, 512>}, {pipeline_mode = #tpu.pipeline_mode<synchronous>, transform_indices = @transform_19, window_bounds = array<i64: 1, 512>}, {pipeline_mode = #tpu.pipeline_mode<synchronous>, transform_indices = @transform_20, window_bounds = array<i64: 1, 512>}, {pipeline_mode = #tpu.pipeline_mode<synchronous>, transform_indices = @transform_21, window_bounds = array<i64: 512, 512>}, {pipeline_mode = #tpu.pipeline_mode<synchronous>, transform_indices = @transform_22, window_bounds = array<i64: 1, 512>}, {pipeline_mode = #tpu.pipeline_mode<synchronous>, transform_indices = @transform_23, window_bounds = array<i64: 1, 512>}, {pipeline_mode = #tpu.pipeline_mode<synchronous>, transform_indices = @transform_24, window_bounds = array<i64: 1, 512>}, {pipeline_mode = #tpu.pipeline_mode<synchronous>, transform_indices = @transform_25, window_bounds = array<i64: 512, 256>}, {pipeline_mode = #tpu.pipeline_mode<synchronous>, transform_indices = @transform_26, window_bounds = array<i64: 1, 256>}, {transform_indices = @transform_27, window_bounds = array<i64: 16, 256>}]} {
    %c0 = arith.constant 0 : index
    %c0_0 = arith.constant 0 : index
    %0 = vector.load %arg1[%c0, %c0_0] : memref<16x5xf32, #tpu.memory_space<vmem>>, vector<16x5xf32>
    %c0_1 = arith.constant 0 : index
    %c0_2 = arith.constant 0 : index
    %1 = vector.load %arg2[%c0_1, %c0_2] : memref<5x256xf32, #tpu.memory_space<vmem>>, vector<5x256xf32>
    %cst = arith.constant dense<0.000000e+00> : vector<16x256xf32>
    %2 = tpu.matmul %0, %1, %cst {dimension_numbers = #tpu.dot_dimension_numbers<[1], [0], [0], [1], [0, 0, 1, 1], [], []>} : vector<16x5xf32>, vector<5x256xf32>, vector<16x256xf32> -> vector<16x256xf32>
    %c0_3 = arith.constant 0 : index
    %c0_4 = arith.constant 0 : index
    %3 = vector.load %arg3[%c0_3, %c0_4] : memref<1x256xf32, #tpu.memory_space<vmem>>, vector<1x256xf32>
    %4 = vector.broadcast %3 : vector<1x256xf32> to vector<16x256xf32>
    %5 = arith.addf %2, %4 : vector<16x256xf32>
    %c0_5 = arith.constant 0 : index
    %c0_6 = arith.constant 0 : index
    %6 = vector.load %arg4[%c0_5, %c0_6] : memref<1x256xf32, #tpu.memory_space<vmem>>, vector<1x256xf32>
    %c0_7 = arith.constant 0 : index
    %c0_8 = arith.constant 0 : index
    %7 = vector.load %arg5[%c0_7, %c0_8] : memref<1x256xf32, #tpu.memory_space<vmem>>, vector<1x256xf32>
    %cst_9 = arith.constant dense<0.000000e+00> : vector<16xf32>
    %8 = vector.multi_reduction <add>, %5, %cst_9 [1] : vector<16x256xf32> to vector<16xf32>
    %9 = vector.shape_cast %8 : vector<16xf32> to vector<16x1xf32>
    %cst_10 = arith.constant 2.560000e+02 : f32
    %10 = vector.broadcast %cst_10 : f32 to vector<16x1xf32>
    %11 = arith.divf %9, %10 : vector<16x1xf32>
    %12 = vector.broadcast %11 : vector<16x1xf32> to vector<16x256xf32>
    %13 = arith.subf %5, %12 : vector<16x256xf32>
    %14 = arith.mulf %13, %13 : vector<16x256xf32>
    %cst_11 = arith.constant dense<0.000000e+00> : vector<16xf32>
    %15 = vector.multi_reduction <add>, %14, %cst_11 [1] : vector<16x256xf32> to vector<16xf32>
    %16 = vector.shape_cast %15 : vector<16xf32> to vector<16x1xf32>
    %cst_12 = arith.constant 2.560000e+02 : f32
    %17 = vector.broadcast %cst_12 : f32 to vector<16x1xf32>
    %18 = arith.divf %16, %17 : vector<16x1xf32>
    %cst_13 = arith.constant 9.99999974E-6 : f32
    %19 = vector.broadcast %cst_13 : f32 to vector<16x1xf32>
    %20 = arith.addf %18, %19 : vector<16x1xf32>
    %21 = math.rsqrt %20 : vector<16x1xf32>
    %22 = vector.broadcast %21 : vector<16x1xf32> to vector<16x256xf32>
    %23 = arith.mulf %13, %22 : vector<16x256xf32>
    %24 = vector.broadcast %6 : vector<1x256xf32> to vector<16x256xf32>
    %25 = arith.mulf %23, %24 : vector<16x256xf32>
    %26 = vector.broadcast %7 : vector<1x256xf32> to vector<16x256xf32>
    %27 = arith.addf %25, %26 : vector<16x256xf32>
    %cst_14 = arith.constant 5.000000e-01 : f32
    %28 = vector.broadcast %cst_14 : f32 to vector<16x256xf32>
    %29 = arith.mulf %28, %27 : vector<16x256xf32>
    %cst_15 = arith.constant 0.707106769 : f32
    %30 = vector.broadcast %cst_15 : f32 to vector<16x256xf32>
    %31 = arith.mulf %27, %30 : vector<16x256xf32>
    %32 = math.erf %31 : vector<16x256xf32>
    %cst_16 = arith.constant 1.000000e+00 : f32
    %33 = vector.broadcast %cst_16 : f32 to vector<16x256xf32>
    %34 = arith.addf %33, %32 : vector<16x256xf32>
    %35 = arith.mulf %29, %34 : vector<16x256xf32>
    %c0_17 = arith.constant 0 : index
    %c0_18 = arith.constant 0 : index
    %36 = vector.load %arg10[%c0_17, %c0_18] : memref<256x512xf32, #tpu.memory_space<vmem>>, vector<256x512xf32>
    %cst_19 = arith.constant dense<0.000000e+00> : vector<16x512xf32>
    %37 = tpu.matmul %35, %36, %cst_19 {dimension_numbers = #tpu.dot_dimension_numbers<[1], [0], [0], [1], [0, 0, 1, 1], [], []>} : vector<16x256xf32>, vector<256x512xf32>, vector<16x512xf32> -> vector<16x512xf32>
    %c0_20 = arith.constant 0 : index
    %c0_21 = arith.constant 0 : index
    %38 = vector.load %arg11[%c0_20, %c0_21] : memref<1x512xf32, #tpu.memory_space<vmem>>, vector<1x512xf32>
    %39 = vector.broadcast %38 : vector<1x512xf32> to vector<16x512xf32>
    %40 = arith.addf %37, %39 : vector<16x512xf32>
    %c0_22 = arith.constant 0 : index
    %c0_23 = arith.constant 0 : index
    %41 = vector.load %arg6[%c0_22, %c0_23] : memref<256x512xf32, #tpu.memory_space<vmem>>, vector<256x512xf32>
    %cst_24 = arith.constant dense<0.000000e+00> : vector<16x512xf32>
    %42 = tpu.matmul %35, %41, %cst_24 {dimension_numbers = #tpu.dot_dimension_numbers<[1], [0], [0], [1], [0, 0, 1, 1], [], []>} : vector<16x256xf32>, vector<256x512xf32>, vector<16x512xf32> -> vector<16x512xf32>
    %c0_25 = arith.constant 0 : index
    %c0_26 = arith.constant 0 : index
    %43 = vector.load %arg7[%c0_25, %c0_26] : memref<1x512xf32, #tpu.memory_space<vmem>>, vector<1x512xf32>
    %44 = vector.broadcast %43 : vector<1x512xf32> to vector<16x512xf32>
    %45 = arith.addf %42, %44 : vector<16x512xf32>
    %c0_27 = arith.constant 0 : index
    %c0_28 = arith.constant 0 : index
    %46 = vector.load %arg8[%c0_27, %c0_28] : memref<1x512xf32, #tpu.memory_space<vmem>>, vector<1x512xf32>
    %c0_29 = arith.constant 0 : index
    %c0_30 = arith.constant 0 : index
    %47 = vector.load %arg9[%c0_29, %c0_30] : memref<1x512xf32, #tpu.memory_space<vmem>>, vector<1x512xf32>
    %cst_31 = arith.constant dense<0.000000e+00> : vector<16xf32>
    %48 = vector.multi_reduction <add>, %45, %cst_31 [1] : vector<16x512xf32> to vector<16xf32>
    %49 = vector.shape_cast %48 : vector<16xf32> to vector<16x1xf32>
    %cst_32 = arith.constant 5.120000e+02 : f32
    %50 = vector.broadcast %cst_32 : f32 to vector<16x1xf32>
    %51 = arith.divf %49, %50 : vector<16x1xf32>
    %52 = vector.broadcast %51 : vector<16x1xf32> to vector<16x512xf32>
    %53 = arith.subf %45, %52 : vector<16x512xf32>
    %54 = arith.mulf %53, %53 : vector<16x512xf32>
    %cst_33 = arith.constant dense<0.000000e+00> : vector<16xf32>
    %55 = vector.multi_reduction <add>, %54, %cst_33 [1] : vector<16x512xf32> to vector<16xf32>
    %56 = vector.shape_cast %55 : vector<16xf32> to vector<16x1xf32>
    %cst_34 = arith.constant 5.120000e+02 : f32
    %57 = vector.broadcast %cst_34 : f32 to vector<16x1xf32>
    %58 = arith.divf %56, %57 : vector<16x1xf32>
    %cst_35 = arith.constant 9.99999974E-6 : f32
    %59 = vector.broadcast %cst_35 : f32 to vector<16x1xf32>
    %60 = arith.addf %58, %59 : vector<16x1xf32>
    %61 = math.rsqrt %60 : vector<16x1xf32>
    %62 = vector.broadcast %61 : vector<16x1xf32> to vector<16x512xf32>
    %63 = arith.mulf %53, %62 : vector<16x512xf32>
    %64 = vector.broadcast %46 : vector<1x512xf32> to vector<16x512xf32>
    %65 = arith.mulf %63, %64 : vector<16x512xf32>
    %66 = vector.broadcast %47 : vector<1x512xf32> to vector<16x512xf32>
    %67 = arith.addf %65, %66 : vector<16x512xf32>
    %cst_36 = arith.constant 5.000000e-01 : f32
    %68 = vector.broadcast %cst_36 : f32 to vector<16x512xf32>
    %69 = arith.mulf %68, %67 : vector<16x512xf32>
    %cst_37 = arith.constant 0.707106769 : f32
    %70 = vector.broadcast %cst_37 : f32 to vector<16x512xf32>
    %71 = arith.mulf %67, %70 : vector<16x512xf32>
    %72 = math.erf %71 : vector<16x512xf32>
    %cst_38 = arith.constant 1.000000e+00 : f32
    %73 = vector.broadcast %cst_38 : f32 to vector<16x512xf32>
    %74 = arith.addf %73, %72 : vector<16x512xf32>
    %75 = arith.mulf %69, %74 : vector<16x512xf32>
    %76 = arith.addf %75, %40 : vector<16x512xf32>
    %c0_39 = arith.constant 0 : index
    %c0_40 = arith.constant 0 : index
    %77 = vector.load %arg12[%c0_39, %c0_40] : memref<512x128xf32, #tpu.memory_space<vmem>>, vector<512x128xf32>
    %cst_41 = arith.constant dense<0.000000e+00> : vector<16x128xf32>
    %78 = tpu.matmul %76, %77, %cst_41 {dimension_numbers = #tpu.dot_dimension_numbers<[1], [0], [0], [1], [0, 0, 1, 1], [], []>} : vector<16x512xf32>, vector<512x128xf32>, vector<16x128xf32> -> vector<16x128xf32>
    %c0_42 = arith.constant 0 : index
    %c0_43 = arith.constant 0 : index
    %79 = vector.load %arg13[%c0_42, %c0_43] : memref<1x128xf32, #tpu.memory_space<vmem>>, vector<1x128xf32>
    %80 = vector.broadcast %79 : vector<1x128xf32> to vector<16x128xf32>
    %81 = arith.addf %78, %80 : vector<16x128xf32>
    %c0_44 = arith.constant 0 : index
    %c0_45 = arith.constant 0 : index
    %82 = vector.load %arg14[%c0_44, %c0_45] : memref<1x128xf32, #tpu.memory_space<vmem>>, vector<1x128xf32>
    %c0_46 = arith.constant 0 : index
    %c0_47 = arith.constant 0 : index
    %83 = vector.load %arg15[%c0_46, %c0_47] : memref<1x128xf32, #tpu.memory_space<vmem>>, vector<1x128xf32>
    %cst_48 = arith.constant dense<0.000000e+00> : vector<16xf32>
    %84 = vector.multi_reduction <add>, %81, %cst_48 [1] : vector<16x128xf32> to vector<16xf32>
    %85 = vector.shape_cast %84 : vector<16xf32> to vector<16x1xf32>
    %cst_49 = arith.constant 1.280000e+02 : f32
    %86 = vector.broadcast %cst_49 : f32 to vector<16x1xf32>
    %87 = arith.divf %85, %86 : vector<16x1xf32>
    %88 = vector.broadcast %87 : vector<16x1xf32> to vector<16x128xf32>
    %89 = arith.subf %81, %88 : vector<16x128xf32>
    %90 = arith.mulf %89, %89 : vector<16x128xf32>
    %cst_50 = arith.constant dense<0.000000e+00> : vector<16xf32>
    %91 = vector.multi_reduction <add>, %90, %cst_50 [1] : vector<16x128xf32> to vector<16xf32>
    %92 = vector.shape_cast %91 : vector<16xf32> to vector<16x1xf32>
    %cst_51 = arith.constant 1.280000e+02 : f32
    %93 = vector.broadcast %cst_51 : f32 to vector<16x1xf32>
    %94 = arith.divf %92, %93 : vector<16x1xf32>
    %cst_52 = arith.constant 9.99999974E-6 : f32
    %95 = vector.broadcast %cst_52 : f32 to vector<16x1xf32>
    %96 = arith.addf %94, %95 : vector<16x1xf32>
    %97 = math.rsqrt %96 : vector<16x1xf32>
    %98 = vector.broadcast %97 : vector<16x1xf32> to vector<16x128xf32>
    %99 = arith.mulf %89, %98 : vector<16x128xf32>
    %100 = vector.broadcast %82 : vector<1x128xf32> to vector<16x128xf32>
    %101 = arith.mulf %99, %100 : vector<16x128xf32>
    %102 = vector.broadcast %83 : vector<1x128xf32> to vector<16x128xf32>
    %103 = arith.addf %101, %102 : vector<16x128xf32>
    %cst_53 = arith.constant 5.000000e-01 : f32
    %104 = vector.broadcast %cst_53 : f32 to vector<16x128xf32>
    %105 = arith.mulf %104, %103 : vector<16x128xf32>
    %cst_54 = arith.constant 0.707106769 : f32
    %106 = vector.broadcast %cst_54 : f32 to vector<16x128xf32>
    %107 = arith.mulf %103, %106 : vector<16x128xf32>
    %108 = math.erf %107 : vector<16x128xf32>
    %cst_55 = arith.constant 1.000000e+00 : f32
    %109 = vector.broadcast %cst_55 : f32 to vector<16x128xf32>
    %110 = arith.addf %109, %108 : vector<16x128xf32>
    %111 = arith.mulf %105, %110 : vector<16x128xf32>
    %c0_56 = arith.constant 0 : index
    %c0_57 = arith.constant 0 : index
    %112 = vector.load %arg16[%c0_56, %c0_57] : memref<1x128xf32, #tpu.memory_space<vmem>>, vector<1x128xf32>
    %113 = vector.broadcast %112 : vector<1x128xf32> to vector<16x128xf32>
    %114 = arith.mulf %111, %113 : vector<16x128xf32>
    %cst_58 = arith.constant dense<0.000000e+00> : vector<16xf32>
    %115 = vector.multi_reduction <add>, %114, %cst_58 [1] : vector<16x128xf32> to vector<16xf32>
    %116 = vector.shape_cast %115 : vector<16xf32> to vector<16x1xf32>
    %c0_59 = arith.constant 0 : index
    %c0_60 = arith.constant 0 : index
    %117 = vector.load %arg17[%c0_59, %c0_60] : memref<1x1xf32, #tpu.memory_space<vmem>>, vector<1x1xf32>
    %118 = vector.broadcast %117 : vector<1x1xf32> to vector<16x1xf32>
    %119 = arith.addf %116, %118 : vector<16x1xf32>
    %c0_61 = arith.constant 0 : index
    %c0_62 = arith.constant 0 : index
    %120 = vector.load %arg18[%c0_61, %c0_62] : memref<512x512xf32, #tpu.memory_space<vmem>>, vector<512x512xf32>
    %cst_63 = arith.constant dense<0.000000e+00> : vector<16x512xf32>
    %121 = tpu.matmul %76, %120, %cst_63 {dimension_numbers = #tpu.dot_dimension_numbers<[1], [0], [0], [1], [0, 0, 1, 1], [], []>} : vector<16x512xf32>, vector<512x512xf32>, vector<16x512xf32> -> vector<16x512xf32>
    %c0_64 = arith.constant 0 : index
    %c0_65 = arith.constant 0 : index
    %122 = vector.load %arg19[%c0_64, %c0_65] : memref<1x512xf32, #tpu.memory_space<vmem>>, vector<1x512xf32>
    %123 = vector.broadcast %122 : vector<1x512xf32> to vector<16x512xf32>
    %124 = arith.addf %121, %123 : vector<16x512xf32>
    %c0_66 = arith.constant 0 : index
    %c0_67 = arith.constant 0 : index
    %125 = vector.load %arg20[%c0_66, %c0_67] : memref<1x512xf32, #tpu.memory_space<vmem>>, vector<1x512xf32>
    %c0_68 = arith.constant 0 : index
    %c0_69 = arith.constant 0 : index
    %126 = vector.load %arg21[%c0_68, %c0_69] : memref<1x512xf32, #tpu.memory_space<vmem>>, vector<1x512xf32>
    %cst_70 = arith.constant dense<0.000000e+00> : vector<16xf32>
    %127 = vector.multi_reduction <add>, %124, %cst_70 [1] : vector<16x512xf32> to vector<16xf32>
    %128 = vector.shape_cast %127 : vector<16xf32> to vector<16x1xf32>
    %cst_71 = arith.constant 5.120000e+02 : f32
    %129 = vector.broadcast %cst_71 : f32 to vector<16x1xf32>
    %130 = arith.divf %128, %129 : vector<16x1xf32>
    %131 = vector.broadcast %130 : vector<16x1xf32> to vector<16x512xf32>
    %132 = arith.subf %124, %131 : vector<16x512xf32>
    %133 = arith.mulf %132, %132 : vector<16x512xf32>
    %cst_72 = arith.constant dense<0.000000e+00> : vector<16xf32>
    %134 = vector.multi_reduction <add>, %133, %cst_72 [1] : vector<16x512xf32> to vector<16xf32>
    %135 = vector.shape_cast %134 : vector<16xf32> to vector<16x1xf32>
    %cst_73 = arith.constant 5.120000e+02 : f32
    %136 = vector.broadcast %cst_73 : f32 to vector<16x1xf32>
    %137 = arith.divf %135, %136 : vector<16x1xf32>
    %cst_74 = arith.constant 9.99999974E-6 : f32
    %138 = vector.broadcast %cst_74 : f32 to vector<16x1xf32>
    %139 = arith.addf %137, %138 : vector<16x1xf32>
    %140 = math.rsqrt %139 : vector<16x1xf32>
    %141 = vector.broadcast %140 : vector<16x1xf32> to vector<16x512xf32>
    %142 = arith.mulf %132, %141 : vector<16x512xf32>
    %143 = vector.broadcast %125 : vector<1x512xf32> to vector<16x512xf32>
    %144 = arith.mulf %142, %143 : vector<16x512xf32>
    %145 = vector.broadcast %126 : vector<1x512xf32> to vector<16x512xf32>
    %146 = arith.addf %144, %145 : vector<16x512xf32>
    %cst_75 = arith.constant 5.000000e-01 : f32
    %147 = vector.broadcast %cst_75 : f32 to vector<16x512xf32>
    %148 = arith.mulf %147, %146 : vector<16x512xf32>
    %cst_76 = arith.constant 0.707106769 : f32
    %149 = vector.broadcast %cst_76 : f32 to vector<16x512xf32>
    %150 = arith.mulf %146, %149 : vector<16x512xf32>
    %151 = math.erf %150 : vector<16x512xf32>
    %cst_77 = arith.constant 1.000000e+00 : f32
    %152 = vector.broadcast %cst_77 : f32 to vector<16x512xf32>
    %153 = arith.addf %152, %151 : vector<16x512xf32>
    %154 = arith.mulf %148, %153 : vector<16x512xf32>
    %c0_78 = arith.constant 0 : index
    %c0_79 = arith.constant 0 : index
    %155 = vector.load %arg22[%c0_78, %c0_79] : memref<512x512xf32, #tpu.memory_space<vmem>>, vector<512x512xf32>
    %cst_80 = arith.constant dense<0.000000e+00> : vector<16x512xf32>
    %156 = tpu.matmul %154, %155, %cst_80 {dimension_numbers = #tpu.dot_dimension_numbers<[1], [0], [0], [1], [0, 0, 1, 1], [], []>} : vector<16x512xf32>, vector<512x512xf32>, vector<16x512xf32> -> vector<16x512xf32>
    %c0_81 = arith.constant 0 : index
    %c0_82 = arith.constant 0 : index
    %157 = vector.load %arg23[%c0_81, %c0_82] : memref<1x512xf32, #tpu.memory_space<vmem>>, vector<1x512xf32>
    %158 = vector.broadcast %157 : vector<1x512xf32> to vector<16x512xf32>
    %159 = arith.addf %156, %158 : vector<16x512xf32>
    %c0_83 = arith.constant 0 : index
    %c0_84 = arith.constant 0 : index
    %160 = vector.load %arg24[%c0_83, %c0_84] : memref<1x512xf32, #tpu.memory_space<vmem>>, vector<1x512xf32>
    %c0_85 = arith.constant 0 : index
    %c0_86 = arith.constant 0 : index
    %161 = vector.load %arg25[%c0_85, %c0_86] : memref<1x512xf32, #tpu.memory_space<vmem>>, vector<1x512xf32>
    %cst_87 = arith.constant dense<0.000000e+00> : vector<16xf32>
    %162 = vector.multi_reduction <add>, %159, %cst_87 [1] : vector<16x512xf32> to vector<16xf32>
    %163 = vector.shape_cast %162 : vector<16xf32> to vector<16x1xf32>
    %cst_88 = arith.constant 5.120000e+02 : f32
    %164 = vector.broadcast %cst_88 : f32 to vector<16x1xf32>
    %165 = arith.divf %163, %164 : vector<16x1xf32>
    %166 = vector.broadcast %165 : vector<16x1xf32> to vector<16x512xf32>
    %167 = arith.subf %159, %166 : vector<16x512xf32>
    %168 = arith.mulf %167, %167 : vector<16x512xf32>
    %cst_89 = arith.constant dense<0.000000e+00> : vector<16xf32>
    %169 = vector.multi_reduction <add>, %168, %cst_89 [1] : vector<16x512xf32> to vector<16xf32>
    %170 = vector.shape_cast %169 : vector<16xf32> to vector<16x1xf32>
    %cst_90 = arith.constant 5.120000e+02 : f32
    %171 = vector.broadcast %cst_90 : f32 to vector<16x1xf32>
    %172 = arith.divf %170, %171 : vector<16x1xf32>
    %cst_91 = arith.constant 9.99999974E-6 : f32
    %173 = vector.broadcast %cst_91 : f32 to vector<16x1xf32>
    %174 = arith.addf %172, %173 : vector<16x1xf32>
    %175 = math.rsqrt %174 : vector<16x1xf32>
    %176 = vector.broadcast %175 : vector<16x1xf32> to vector<16x512xf32>
    %177 = arith.mulf %167, %176 : vector<16x512xf32>
    %178 = vector.broadcast %160 : vector<1x512xf32> to vector<16x512xf32>
    %179 = arith.mulf %177, %178 : vector<16x512xf32>
    %180 = vector.broadcast %161 : vector<1x512xf32> to vector<16x512xf32>
    %181 = arith.addf %179, %180 : vector<16x512xf32>
    %cst_92 = arith.constant 5.000000e-01 : f32
    %182 = vector.broadcast %cst_92 : f32 to vector<16x512xf32>
    %183 = arith.mulf %182, %181 : vector<16x512xf32>
    %cst_93 = arith.constant 0.707106769 : f32
    %184 = vector.broadcast %cst_93 : f32 to vector<16x512xf32>
    %185 = arith.mulf %181, %184 : vector<16x512xf32>
    %186 = math.erf %185 : vector<16x512xf32>
    %cst_94 = arith.constant 1.000000e+00 : f32
    %187 = vector.broadcast %cst_94 : f32 to vector<16x512xf32>
    %188 = arith.addf %187, %186 : vector<16x512xf32>
    %189 = arith.mulf %183, %188 : vector<16x512xf32>
    %190 = arith.addf %189, %154 : vector<16x512xf32>
    %c0_95 = arith.constant 0 : index
    %c0_96 = arith.constant 0 : index
    %191 = vector.load %arg26[%c0_95, %c0_96] : memref<512x256xf32, #tpu.memory_space<vmem>>, vector<512x256xf32>
    %cst_97 = arith.constant dense<0.000000e+00> : vector<16x256xf32>
    %192 = tpu.matmul %190, %191, %cst_97 {dimension_numbers = #tpu.dot_dimension_numbers<[1], [0], [0], [1], [0, 0, 1, 1], [], []>} : vector<16x512xf32>, vector<512x256xf32>, vector<16x256xf32> -> vector<16x256xf32>
    %c0_98 = arith.constant 0 : index
    %c0_99 = arith.constant 0 : index
    %193 = vector.load %arg27[%c0_98, %c0_99] : memref<1x256xf32, #tpu.memory_space<vmem>>, vector<1x256xf32>
    %194 = vector.broadcast %193 : vector<1x256xf32> to vector<16x256xf32>
    %195 = arith.addf %192, %194 : vector<16x256xf32>
    %196 = tpu.iota {dimensions = array<i32: 1>} : vector<1x256xi32>
    %c0_i32 = arith.constant 0 : i32
    %197 = vector.broadcast %c0_i32 : i32 to vector<1x256xi32>
    %198 = arith.cmpi eq, %196, %197 : vector<1x256xi32>
    %199 = arith.extui %198 : vector<1x256xi1> to vector<1x256xi32>
    %200 = arith.sitofp %199 : vector<1x256xi32> to vector<1x256xf32>
    %201 = vector.broadcast %119 : vector<16x1xf32> to vector<16x256xf32>
    %202 = vector.broadcast %200 : vector<1x256xf32> to vector<16x256xf32>
    %203 = arith.mulf %201, %202 : vector<16x256xf32>
    %204 = arith.addf %195, %203 : vector<16x256xf32>
    %c0_100 = arith.constant 0 : index
    %c0_101 = arith.constant 0 : index
    %205 = vector.load %arg28[%c0_100, %c0_101] : memref<16x256xf32, #tpu.memory_space<vmem>>, vector<16x256xf32>
    tpu.vector_store %arg28[%c0_100, %c0_101], %204 {strides = array<i32>} : memref<16x256xf32, #tpu.memory_space<vmem>>, vector<16x256xf32>,
    return
  }
  func.func @transform_0(%arg0: i32) -> (i32, i32) {
    %c0_i32 = arith.constant 0 : i32
    %c0_i32_0 = arith.constant 0 : i32
    return %arg0, %c0_i32 : i32, i32
  }
  func.func @transform_1(%arg0: i32) -> (i32, i32) {
    %c0_i32 = arith.constant 0 : i32
    %c0_i32_0 = arith.constant 0 : i32
    %c0_i32_1 = arith.constant 0 : i32
    return %c0_i32, %c0_i32_0 : i32, i32
  }
  func.func @transform_2(%arg0: i32) -> (i32, i32) {
    %c0_i32 = arith.constant 0 : i32
    %c0_i32_0 = arith.constant 0 : i32
    %c0_i32_1 = arith.constant 0 : i32
    return %c0_i32, %c0_i32_0 : i32, i32
  }
  func.func @transform_3(%arg0: i32) -> (i32, i32) {
    %c0_i32 = arith.constant 0 : i32
    %c0_i32_0 = arith.constant 0 : i32
    %c0_i32_1 = arith.constant 0 : i32
    return %c0_i32, %c0_i32_0 : i32, i32
  }
  func.func @transform_4(%arg0: i32) -> (i32, i32) {
    %c0_i32 = arith.constant 0 : i32
    %c0_i32_0 = arith.constant 0 : i32
    %c0_i32_1 = arith.constant 0 : i32
    return %c0_i32, %c0_i32_0 : i32, i32
  }
  func.func @transform_5(%arg0: i32) -> (i32, i32) {
    %c0_i32 = arith.constant 0 : i32
    %c0_i32_0 = arith.constant 0 : i32
    %c0_i32_1 = arith.constant 0 : i32
    return %c0_i32, %c0_i32_0 : i32, i32
  }
  func.func @transform_6(%arg0: i32) -> (i32, i32) {
    %c0_i32 = arith.constant 0 : i32
    %c0_i32_0 = arith.constant 0 : i32
    %c0_i32_1 = arith.constant 0 : i32
    return %c0_i32, %c0_i32_0 : i32, i32
  }
  func.func @transform_7(%arg0: i32) -> (i32, i32) {
    %c0_i32 = arith.constant 0 : i32
    %c0_i32_0 = arith.constant 0 : i32
    %c0_i32_1 = arith.constant 0 : i32
    return %c0_i32, %c0_i32_0 : i32, i32
  }
  func.func @transform_8(%arg0: i32) -> (i32, i32) {
    %c0_i32 = arith.constant 0 : i32
    %c0_i32_0 = arith.constant 0 : i32
    %c0_i32_1 = arith.constant 0 : i32
    return %c0_i32, %c0_i32_0 : i32, i32
  }
  func.func @transform_9(%arg0: i32) -> (i32, i32) {
    %c0_i32 = arith.constant 0 : i32
    %c0_i32_0 = arith.constant 0 : i32
    %c0_i32_1 = arith.constant 0 : i32
    return %c0_i32, %c0_i32_0 : i32, i32
  }
  func.func @transform_10(%arg0: i32) -> (i32, i32) {
    %c0_i32 = arith.constant 0 : i32
    %c0_i32_0 = arith.constant 0 : i32
    %c0_i32_1 = arith.constant 0 : i32
    return %c0_i32, %c0_i32_0 : i32, i32
  }
  func.func @transform_11(%arg0: i32) -> (i32, i32) {
    %c0_i32 = arith.constant 0 : i32
    %c0_i32_0 = arith.constant 0 : i32
    %c0_i32_1 = arith.constant 0 : i32
    return %c0_i32, %c0_i32_0 : i32, i32
  }
  func.func @transform_12(%arg0: i32) -> (i32, i32) {
    %c0_i32 = arith.constant 0 : i32
    %c0_i32_0 = arith.constant 0 : i32
    %c0_i32_1 = arith.constant 0 : i32
    return %c0_i32, %c0_i32_0 : i32, i32
  }
  func.func @transform_13(%arg0: i32) -> (i32, i32) {
    %c0_i32 = arith.constant 0 : i32
    %c0_i32_0 = arith.constant 0 : i32
    %c0_i32_1 = arith.constant 0 : i32
    return %c0_i32, %c0_i32_0 : i32, i32
  }
  func.func @transform_14(%arg0: i32) -> (i32, i32) {
    %c0_i32 = arith.constant 0 : i32
    %c0_i32_0 = arith.constant 0 : i32
    %c0_i32_1 = arith.constant 0 : i32
    return %c0_i32, %c0_i32_0 : i32, i32
  }
  func.func @transform_15(%arg0: i32) -> (i32, i32) {
    %c0_i32 = arith.constant 0 : i32
    %c0_i32_0 = arith.constant 0 : i32
    %c0_i32_1 = arith.constant 0 : i32
    return %c0_i32, %c0_i32_0 : i32, i32
  }
  func.func @transform_16(%arg0: i32) -> (i32, i32) {
    %c0_i32 = arith.constant 0 : i32
    %c0_i32_0 = arith.constant 0 : i32
    %c0_i32_1 = arith.constant 0 : i32
    return %c0_i32, %c0_i32_0 : i32, i32
  }
  func.func @transform_17(%arg0: i32) -> (i32, i32) {
    %c0_i32 = arith.constant 0 : i32
    %c0_i32_0 = arith.constant 0 : i32
    %c0_i32_1 = arith.constant 0 : i32
    return %c0_i32, %c0_i32_0 : i32, i32
  }
  func.func @transform_18(%arg0: i32) -> (i32, i32) {
    %c0_i32 = arith.constant 0 : i32
    %c0_i32_0 = arith.constant 0 : i32
    %c0_i32_1 = arith.constant 0 : i32
    return %c0_i32, %c0_i32_0 : i32, i32
  }
  func.func @transform_19(%arg0: i32) -> (i32, i32) {
    %c0_i32 = arith.constant 0 : i32
    %c0_i32_0 = arith.constant 0 : i32
    %c0_i32_1 = arith.constant 0 : i32
    return %c0_i32, %c0_i32_0 : i32, i32
  }
  func.func @transform_20(%arg0: i32) -> (i32, i32) {
    %c0_i32 = arith.constant 0 : i32
    %c0_i32_0 = arith.constant 0 : i32
    %c0_i32_1 = arith.constant 0 : i32
    return %c0_i32, %c0_i32_0 : i32, i32
  }
  func.func @transform_21(%arg0: i32) -> (i32, i32) {
    %c0_i32 = arith.constant 0 : i32
    %c0_i32_0 = arith.constant 0 : i32
    %c0_i32_1 = arith.constant 0 : i32
    return %c0_i32, %c0_i32_0 : i32, i32
  }
  func.func @transform_22(%arg0: i32) -> (i32, i32) {
    %c0_i32 = arith.constant 0 : i32
    %c0_i32_0 = arith.constant 0 : i32
    %c0_i32_1 = arith.constant 0 : i32
    return %c0_i32, %c0_i32_0 : i32, i32
  }
  func.func @transform_23(%arg0: i32) -> (i32, i32) {
    %c0_i32 = arith.constant 0 : i32
    %c0_i32_0 = arith.constant 0 : i32
    %c0_i32_1 = arith.constant 0 : i32
    return %c0_i32, %c0_i32_0 : i32, i32
  }
  func.func @transform_24(%arg0: i32) -> (i32, i32) {
    %c0_i32 = arith.constant 0 : i32
    %c0_i32_0 = arith.constant 0 : i32
    %c0_i32_1 = arith.constant 0 : i32
    return %c0_i32, %c0_i32_0 : i32, i32
  }
  func.func @transform_25(%arg0: i32) -> (i32, i32) {
    %c0_i32 = arith.constant 0 : i32
    %c0_i32_0 = arith.constant 0 : i32
    %c0_i32_1 = arith.constant 0 : i32
    return %c0_i32, %c0_i32_0 : i32, i32
  }
  func.func @transform_26(%arg0: i32) -> (i32, i32) {
    %c0_i32 = arith.constant 0 : i32
    %c0_i32_0 = arith.constant 0 : i32
    %c0_i32_1 = arith.constant 0 : i32
    return %c0_i32, %c0_i32_0 : i32, i32
  }
  func.func @transform_27(%arg0: i32) -> (i32, i32) {
    %c0_i32 = arith.constant 0 : i32
    %c0_i32_0 = arith.constant 0 : i32
    return %arg0, %c0_i32 : i32, i32
  }
}

</mosaic_0001>

<llo_original>
// kernel: tpu_custom_call.1
$region0: #{tpu_custom_call.1}
  #allocation0 [shape = 'u32[]', space=smem, size = 0x4, offset = 0x4, fixed_abs, tag = 'smem constant byte address 0x4 - core index']
  #allocation1 [shape = 'u32[144,128]{1,0:T(1,128)}', space=vmem, size = 0x12000, scoped, tag = 'internal scratch']
  #allocation2 [shape = 'f32[1,1]{1,0:T(1,128)S(1)}', space=vmem, size = 0x200, scoped, tag = 'scoped memory for tpu_custom_call.1']
  %s0 = inlined_call_operand.vmem [shape: f32[32,5], index: 0, kind: input, shape index: {}]
  %s1 = inlined_call_operand.vmem [shape: f32[5,256], index: 1, kind: input, shape index: {}]
  %s2 = inlined_call_operand.hbm [shape: f32[1,256], index: 2, kind: input, shape index: {}]
  %s3 = inlined_call_operand.hbm [shape: f32[1,256], index: 3, kind: input, shape index: {}]
  %s4 = inlined_call_operand.hbm [shape: f32[1,256], index: 4, kind: input, shape index: {}]
  %s5 = inlined_call_operand.hbm [shape: f32[256,512], index: 5, kind: input, shape index: {}]
  %s6 = inlined_call_operand.vmem [shape: f32[1,512], index: 6, kind: input, shape index: {}]
  %s7 = inlined_call_operand.vmem [shape: f32[1,512], index: 7, kind: input, shape index: {}]
  %s8 = inlined_call_operand.vmem [shape: f32[1,512], index: 8, kind: input, shape index: {}]
  %s9 = inlined_call_operand.hbm [shape: f32[256,512], index: 9, kind: input, shape index: {}]
  %s10 = inlined_call_operand.vmem [shape: f32[1,512], index: 10, kind: input, shape index: {}]
  %s11 = inlined_call_operand.hbm [shape: f32[512,128], index: 11, kind: input, shape index: {}]
  %s12 = inlined_call_operand.vmem [shape: f32[1,128], index: 12, kind: input, shape index: {}]
  %s13 = inlined_call_operand.vmem [shape: f32[1,128], index: 13, kind: input, shape index: {}]
  %s14 = inlined_call_operand.vmem [shape: f32[1,128], index: 14, kind: input, shape index: {}]
  %s15 = inlined_call_operand.vmem [shape: f32[1,128], index: 15, kind: input, shape index: {}]
  %s16 = inlined_call_operand.<no memory space> [shape: f32[1,1], index: 16, kind: input, shape index: {}]
  %s17 = inlined_call_operand.hbm [shape: f32[512,512], index: 17, kind: input, shape index: {}]
  %s18 = inlined_call_operand.vmem [shape: f32[1,512], index: 18, kind: input, shape index: {}]
  %s19 = inlined_call_operand.vmem [shape: f32[1,512], index: 19, kind: input, shape index: {}]
  %s20 = inlined_call_operand.vmem [shape: f32[1,512], index: 20, kind: input, shape index: {}]
  %s21 = inlined_call_operand.hbm [shape: f32[512,512], index: 21, kind: input, shape index: {}]
  %s22 = inlined_call_operand.vmem [shape: f32[1,512], index: 22, kind: input, shape index: {}]
  %s23 = inlined_call_operand.vmem [shape: f32[1,512], index: 23, kind: input, shape index: {}]
  %s24 = inlined_call_operand.vmem [shape: f32[1,512], index: 24, kind: input, shape index: {}]
  %s25 = inlined_call_operand.hbm [shape: f32[512,256], index: 25, kind: input, shape index: {}]
  %s26 = inlined_call_operand.vmem [shape: f32[1,256], index: 26, kind: input, shape index: {}]
  %s27 = inlined_call_operand.hbm [shape: f32[32,256], index: 27, kind: output, shape index: {}]
  %s28 = sld [smem:[#allocation0]]
  $region177: #{tpu_custom_call.1} parent=0
    _
  %s30 = ssub.s32 1, %s28
  %s31 = scalar_select 0, %s30, %s28
  %v32 = vstv %s16
  %33 = vst [vmem:[#allocation2] sm:$0x1] %v32
  $region1: #{tpu_custom_call.1} parent=0
    #allocation3 [shape = 'u8[1024]{0}', space=vmem, size = 0x400, scoped, tag = 'input window, operand 2, single buffered']
    #allocation4 [shape = 's32[2]{0}', space=sflag, size = 0x8, scoped, tag = 'scoped memory for tpu_custom_call.1']
    #allocation5 [shape = 's32[2]{0}', space=sflag, size = 0x8, scoped, tag = 'scoped memory for tpu_custom_call.1']
    #allocation6 [shape = 'u8[1024]{0}', space=vmem, size = 0x400, scoped, tag = 'input window, operand 3, single buffered']
    #allocation7 [shape = 's32[1]{0}', space=sflag, size = 0x4, scoped, tag = 'scoped memory for tpu_custom_call.1']
    #allocation8 [shape = 'u8[1024]{0}', space=vmem, size = 0x400, scoped, tag = 'input window, operand 4, single buffered']
    #allocation9 [shape = 'u8[524288]{0}', space=vmem, size = 0x80000, scoped, tag = 'input window, operand 5, single buffered']
    #allocation10 [shape = 's32[1]{0}', space=sflag, size = 0x4, scoped, tag = 'scoped memory for tpu_custom_call.1']
    #allocation11 [shape = 'u8[524288]{0}', space=vmem, size = 0x80000, scoped, tag = 'input window, operand 9, single buffered']
    #allocation12 [shape = 'u8[262144]{0}', space=vmem, size = 0x40000, scoped, tag = 'input window, operand 11, single buffered']
    #allocation13 [shape = 's32[1]{0}', space=sflag, size = 0x4, scoped, tag = 'scoped memory for tpu_custom_call.1']
    #allocation14 [shape = 'u8[1048576]{0}', space=vmem, size = 0x100000, scoped, tag = 'input window, operand 17, single buffered']
    #allocation15 [shape = 'u8[1048576]{0}', space=vmem, size = 0x100000, scoped, tag = 'input window, operand 21, single buffered']
    #allocation16 [shape = 's32[1]{0}', space=sflag, size = 0x4, scoped, tag = 'scoped memory for tpu_custom_call.1']
    #allocation17 [shape = 'u8[524288]{0}', space=vmem, size = 0x80000, scoped, tag = 'input window, operand 25, single buffered']
    #allocation18 [shape = 'u8[32768]{0}', space=vmem, size = 0x8000, scoped, tag = 'output window, operand 0']
    %34 = vsyncpa [#allocation4], 0
    %35 = vsyncpa [#allocation7], 0
    %36 = vsyncpa [#allocation10], 0
    %37 = vsyncpa [#allocation13], 0
    %38 = vsyncpa [#allocation16], 0
    %39 = vsyncpa [#allocation5], 0
    %s40 = scalar_lea.sflag [#allocation5], 1
    %41 = vsyncpa %s40, 0
    loop: start=0, step=1, limit=4
    $region2: #{tpu_custom_call.1} parent=1 // loop_pre_header
      _
    $region3: #{tpu_custom_call.1} parent=1 // loop_header
      %s43 = sphi 0, %s47
      %p44 = scmp.ge.s32.totalorder %s43, 4
      %s53 = sphi 0, %s55
      %s56 = sphi 0, %s53
      %s57 = sphi 0, %s56
      %s73 = sphi 0, %s57
      %s77 = sphi 0, %s77
      %s79 = sphi 0, %s77
      %s80 = sphi 0, %s79
      %s94 = sphi 0, %s80
      %s98 = sphi 0, %s98
      %s100 = sphi 0, %s98
      %s101 = sphi 0, %s100
      %s115 = sphi 0, %s101
      %s119 = sphi 0, %s119
      %s121 = sphi 0, %s119
      %s122 = sphi 0, %s121
      %s136 = sphi 0, %s122
      %s140 = sphi 0, %s140
      %s142 = sphi 0, %s140
      %s143 = sphi 0, %s142
      %s157 = sphi 0, %s143
      %s161 = sphi 0, %s161
      %s163 = sphi 0, %s161
      %s164 = sphi 0, %s163
      %s178 = sphi 0, %s164
      %s182 = sphi 0, %s182
      %s184 = sphi 0, %s182
      %s185 = sphi 0, %s184
      %s199 = sphi 0, %s185
      %s203 = sphi 0, %s203
      %s205 = sphi 0, %s203
      %s206 = sphi 0, %s205
      %s220 = sphi 0, %s206
      %s224 = sphi 0, %s224
      %s226 = sphi 0, %s224
      %s227 = sphi 0, %s226
      %s241 = sphi 0, %s227
      %s245 = sphi 0, %s245
      %s247 = sphi 0, %s245
      %s248 = sphi 0, %s247
      %s262 = sphi 0, %s248
      %s266 = sphi 0, %s266
      %s268 = sphi 0, %s266
      %s269 = sphi 0, %s268
      %s283 = sphi 0, %s269
      %s287 = sphi 0, %s287
      %s289 = sphi 0, %s287
      %s290 = sphi 0, %s289
      %s304 = sphi 0, %s290
      %s308 = sphi 0, %s308
      %s310 = sphi 0, %s308
      %s311 = sphi 0, %s310
      %s325 = sphi 0, %s311
      %s329 = sphi 0, %s329
      %s331 = sphi 0, %s329
      %s332 = sphi 0, %s331
      %s346 = sphi 0, %s332
      %s350 = sphi 0, %s350
      %s352 = sphi 0, %s350
      %s353 = sphi 0, %s352
      %s367 = sphi 0, %s353
      %s371 = sphi 0, %s371
      %s373 = sphi 0, %s371
      %s374 = sphi 0, %s373
      %s388 = sphi 0, %s374
      %s392 = sphi 0, %s392
      %s394 = sphi 0, %s392
      %s395 = sphi 0, %s394
      %s409 = sphi 0, %s395
      %s413 = sphi 0, %s413
      %s415 = sphi 0, %s413
      %s416 = sphi 0, %s415
      %s430 = sphi 0, %s416
      %s434 = sphi 0, %s434
      %s436 = sphi 0, %s434
      %s437 = sphi 0, %s436
      %s451 = sphi 0, %s437
      %s455 = sphi 0, %s455
      %s457 = sphi 0, %s455
      %s458 = sphi 0, %s457
      %s472 = sphi 0, %s458
      %s476 = sphi 0, %s476
      %s478 = sphi 0, %s476
      %s479 = sphi 0, %s478
      %s493 = sphi 0, %s479
      %s497 = sphi 0, %s497
      %s499 = sphi 0, %s497
      %s500 = sphi 0, %s499
      %s514 = sphi 0, %s500
      %s518 = sphi 0, %s518
      %s520 = sphi 0, %s518
      %s521 = sphi 0, %s520
      %s535 = sphi 0, %s521
      %s539 = sphi 0, %s539
      %s541 = sphi 0, %s539
      %s542 = sphi 0, %s541
      %s556 = sphi 0, %s542
      %s560 = sphi 0, %s560
      %s562 = sphi 0, %s560
      %s563 = sphi 0, %s562
      %s577 = sphi 0, %s563
      %s581 = sphi 0, %s581
      %s583 = sphi 0, %s581
      %s584 = sphi 0, %s583
      %s598 = sphi 0, %s584
      %s602 = sphi 0, %s602
      %s604 = sphi 0, %s602
      %s605 = sphi 0, %s604
      %s619 = sphi 0, %s605
      %s625 = sphi 0, %s627
      %s628 = sphi 0, %s625
      %s629 = sphi 0, %s628
      %s645 = sphi 0, %s629
    $region4: #{tpu_custom_call.1} parent=1 // loop_header_branch
      %46 = sbr.rel (%p44) target = $region8
    $region5: #{tpu_custom_call.1} parent=1 // loop_body
      %s48 = ssub.s32 %s43, 1
      %s49 = ssub.s32 %s43, 2
      %s50 = sadd.s32 %s43, 1
      %s51 = ssub.s32 %s43, %s50
      %p52 = scmp.eq.s32.totalorder %s51, 0
      %s54 = sadd.s32 %s53, 1
      %s55 = scalar_select %p52, %s53, %s54
      %p58 = pneg %p52
      %p59 = scmp.eq.s32.totalorder %s43, 1
      %p60 = por %p58, %p59
      %p61 = scmp.ne.s32.totalorder %s53, %s56
      %p62 = scmp.eq.s32.totalorder %s43, 0
      %p63 = por %p61, %p62
      %p64 = scmp.ne.s32.totalorder %s53, %s56
      %p65 = scmp.eq.s32.totalorder %s48, 1
      %p66 = por %p64, %p65
      %p67 = scmp.ne.s32.totalorder %s56, %s57
      %p68 = scmp.eq.s32.totalorder %s48, 0
      %p69 = por %p67, %p68
      %p70 = scmp.ne.s32.totalorder %s56, %s57
      %p71 = scmp.eq.s32.totalorder %s49, 1
      %p72 = por %p70, %p71
      %p74 = scmp.ne.s32.totalorder %s57, %s73
      %p75 = scmp.eq.s32.totalorder %s49, 0
      %p76 = por %p74, %p75
      %s78 = sadd.s32 %s77, 1
      %p81 = scmp.eq.s32.totalorder %s43, 1
      %p82 = scmp.ne.s32.totalorder %s77, %s79
      %p83 = scmp.eq.s32.totalorder %s43, 0
      %p84 = por %p82, %p83
      %p85 = scmp.ne.s32.totalorder %s77, %s79
      %p86 = scmp.eq.s32.totalorder %s48, 1
      %p87 = por %p85, %p86
      %p88 = scmp.ne.s32.totalorder %s79, %s80
      %p89 = scmp.eq.s32.totalorder %s48, 0
      %p90 = por %p88, %p89
      %p91 = scmp.ne.s32.totalorder %s79, %s80
      %p92 = scmp.eq.s32.totalorder %s49, 1
      %p93 = por %p91, %p92
      %p95 = scmp.ne.s32.totalorder %s80, %s94
      %p96 = scmp.eq.s32.totalorder %s49, 0
      %p97 = por %p95, %p96
      %s99 = sadd.s32 %s98, 1
      %p102 = scmp.eq.s32.totalorder %s43, 1
      %p103 = scmp.ne.s32.totalorder %s98, %s100
      %p104 = scmp.eq.s32.totalorder %s43, 0
      %p105 = por %p103, %p104
      %p106 = scmp.ne.s32.totalorder %s98, %s100
      %p107 = scmp.eq.s32.totalorder %s48, 1
      %p108 = por %p106, %p107
      %p109 = scmp.ne.s32.totalorder %s100, %s101
      %p110 = scmp.eq.s32.totalorder %s48, 0
      %p111 = por %p109, %p110
      %p112 = scmp.ne.s32.totalorder %s100, %s101
      %p113 = scmp.eq.s32.totalorder %s49, 1
      %p114 = por %p112, %p113
      %p116 = scmp.ne.s32.totalorder %s101, %s115
      %p117 = scmp.eq.s32.totalorder %s49, 0
      %p118 = por %p116, %p117
      %s120 = sadd.s32 %s119, 1
      %p123 = scmp.eq.s32.totalorder %s43, 1
      %p124 = scmp.ne.s32.totalorder %s119, %s121
      %p125 = scmp.eq.s32.totalorder %s43, 0
      %p126 = por %p124, %p125
      %p127 = scmp.ne.s32.totalorder %s119, %s121
      %p128 = scmp.eq.s32.totalorder %s48, 1
      %p129 = por %p127, %p128
      %p130 = scmp.ne.s32.totalorder %s121, %s122
      %p131 = scmp.eq.s32.totalorder %s48, 0
      %p132 = por %p130, %p131
      %p133 = scmp.ne.s32.totalorder %s121, %s122
      %p134 = scmp.eq.s32.totalorder %s49, 1
      %p135 = por %p133, %p134
      %p137 = scmp.ne.s32.totalorder %s122, %s136
      %p138 = scmp.eq.s32.totalorder %s49, 0
      %p139 = por %p137, %p138
      %s141 = sadd.s32 %s140, 1
      %p144 = scmp.eq.s32.totalorder %s43, 1
      %p145 = scmp.ne.s32.totalorder %s140, %s142
      %p146 = scmp.eq.s32.totalorder %s43, 0
      %p147 = por %p145, %p146
      %p148 = scmp.ne.s32.totalorder %s140, %s142
      %p149 = scmp.eq.s32.totalorder %s48, 1
      %p150 = por %p148, %p149
      %p151 = scmp.ne.s32.totalorder %s142, %s143
      %p152 = scmp.eq.s32.totalorder %s48, 0
      %p153 = por %p151, %p152
      %p154 = scmp.ne.s32.totalorder %s142, %s143
      %p155 = scmp.eq.s32.totalorder %s49, 1
      %p156 = por %p154, %p155
      %p158 = scmp.ne.s32.totalorder %s143, %s157
      %p159 = scmp.eq.s32.totalorder %s49, 0
      %p160 = por %p158, %p159
      %s162 = sadd.s32 %s161, 1
      %p165 = scmp.eq.s32.totalorder %s43, 1
      %p166 = scmp.ne.s32.totalorder %s161, %s163
      %p167 = scmp.eq.s32.totalorder %s43, 0
      %p168 = por %p166, %p167
      %p169 = scmp.ne.s32.totalorder %s161, %s163
      %p170 = scmp.eq.s32.totalorder %s48, 1
      %p171 = por %p169, %p170
      %p172 = scmp.ne.s32.totalorder %s163, %s164
      %p173 = scmp.eq.s32.totalorder %s48, 0
      %p174 = por %p172, %p173
      %p175 = scmp.ne.s32.totalorder %s163, %s164
      %p176 = scmp.eq.s32.totalorder %s49, 1
      %p177 = por %p175, %p176
      %p179 = scmp.ne.s32.totalorder %s164, %s178
      %p180 = scmp.eq.s32.totalorder %s49, 0
      %p181 = por %p179, %p180
      %s183 = sadd.s32 %s182, 1
      %p186 = scmp.eq.s32.totalorder %s43, 1
      %p187 = scmp.ne.s32.totalorder %s182, %s184
      %p188 = scmp.eq.s32.totalorder %s43, 0
      %p189 = por %p187, %p188
      %p190 = scmp.ne.s32.totalorder %s182, %s184
      %p191 = scmp.eq.s32.totalorder %s48, 1
      %p192 = por %p190, %p191
      %p193 = scmp.ne.s32.totalorder %s184, %s185
      %p194 = scmp.eq.s32.totalorder %s48, 0
      %p195 = por %p193, %p194
      %p196 = scmp.ne.s32.totalorder %s184, %s185
      %p197 = scmp.eq.s32.totalorder %s49, 1
      %p198 = por %p196, %p197
      %p200 = scmp.ne.s32.totalorder %s185, %s199
      %p201 = scmp.eq.s32.totalorder %s49, 0
      %p202 = por %p200, %p201
      %s204 = sadd.s32 %s203, 1
      %p207 = scmp.eq.s32.totalorder %s43, 1
      %p208 = scmp.ne.s32.totalorder %s203, %s205
      %p209 = scmp.eq.s32.totalorder %s43, 0
      %p210 = por %p208, %p209
      %p211 = scmp.ne.s32.totalorder %s203, %s205
      %p212 = scmp.eq.s32.totalorder %s48, 1
      %p213 = por %p211, %p212
      %p214 = scmp.ne.s32.totalorder %s205, %s206
      %p215 = scmp.eq.s32.totalorder %s48, 0
      %p216 = por %p214, %p215
      %p217 = scmp.ne.s32.totalorder %s205, %s206
      %p218 = scmp.eq.s32.totalorder %s49, 1
      %p219 = por %p217, %p218
      %p221 = scmp.ne.s32.totalorder %s206, %s220
      %p222 = scmp.eq.s32.totalorder %s49, 0
      %p223 = por %p221, %p222
      %s225 = sadd.s32 %s224, 1
      %p228 = scmp.eq.s32.totalorder %s43, 1
      %p229 = scmp.ne.s32.totalorder %s224, %s226
      %p230 = scmp.eq.s32.totalorder %s43, 0
      %p231 = por %p229, %p230
      %p232 = scmp.ne.s32.totalorder %s224, %s226
      %p233 = scmp.eq.s32.totalorder %s48, 1
      %p234 = por %p232, %p233
      %p235 = scmp.ne.s32.totalorder %s226, %s227
      %p236 = scmp.eq.s32.totalorder %s48, 0
      %p237 = por %p235, %p236
      %p238 = scmp.ne.s32.totalorder %s226, %s227
      %p239 = scmp.eq.s32.totalorder %s49, 1
      %p240 = por %p238, %p239
      %p242 = scmp.ne.s32.totalorder %s227, %s241
      %p243 = scmp.eq.s32.totalorder %s49, 0
      %p244 = por %p242, %p243
      %s246 = sadd.s32 %s245, 1
      %p249 = scmp.eq.s32.totalorder %s43, 1
      %p250 = scmp.ne.s32.totalorder %s245, %s247
      %p251 = scmp.eq.s32.totalorder %s43, 0
      %p252 = por %p250, %p251
      %p253 = scmp.ne.s32.totalorder %s245, %s247
      %p254 = scmp.eq.s32.totalorder %s48, 1
      %p255 = por %p253, %p254
      %p256 = scmp.ne.s32.totalorder %s247, %s248
      %p257 = scmp.eq.s32.totalorder %s48, 0
      %p258 = por %p256, %p257
      %p259 = scmp.ne.s32.totalorder %s247, %s248
      %p260 = scmp.eq.s32.totalorder %s49, 1
      %p261 = por %p259, %p260
      %p263 = scmp.ne.s32.totalorder %s248, %s262
      %p264 = scmp.eq.s32.totalorder %s49, 0
      %p265 = por %p263, %p264
      %s267 = sadd.s32 %s266, 1
      %p270 = scmp.eq.s32.totalorder %s43, 1
      %p271 = scmp.ne.s32.totalorder %s266, %s268
      %p272 = scmp.eq.s32.totalorder %s43, 0
      %p273 = por %p271, %p272
      %p274 = scmp.ne.s32.totalorder %s266, %s268
      %p275 = scmp.eq.s32.totalorder %s48, 1
      %p276 = por %p274, %p275
      %p277 = scmp.ne.s32.totalorder %s268, %s269
      %p278 = scmp.eq.s32.totalorder %s48, 0
      %p279 = por %p277, %p278
      %p280 = scmp.ne.s32.totalorder %s268, %s269
      %p281 = scmp.eq.s32.totalorder %s49, 1
      %p282 = por %p280, %p281
      %p284 = scmp.ne.s32.totalorder %s269, %s283
      %p285 = scmp.eq.s32.totalorder %s49, 0
      %p286 = por %p284, %p285
      %s288 = sadd.s32 %s287, 1
      %p291 = scmp.eq.s32.totalorder %s43, 1
      %p292 = scmp.ne.s32.totalorder %s287, %s289
      %p293 = scmp.eq.s32.totalorder %s43, 0
      %p294 = por %p292, %p293
      %p295 = scmp.ne.s32.totalorder %s287, %s289
      %p296 = scmp.eq.s32.totalorder %s48, 1
      %p297 = por %p295, %p296
      %p298 = scmp.ne.s32.totalorder %s289, %s290
      %p299 = scmp.eq.s32.totalorder %s48, 0
      %p300 = por %p298, %p299
      %p301 = scmp.ne.s32.totalorder %s289, %s290
      %p302 = scmp.eq.s32.totalorder %s49, 1
      %p303 = por %p301, %p302
      %p305 = scmp.ne.s32.totalorder %s290, %s304
      %p306 = scmp.eq.s32.totalorder %s49, 0
      %p307 = por %p305, %p306
      %s309 = sadd.s32 %s308, 1
      %p312 = scmp.eq.s32.totalorder %s43, 1
      %p313 = scmp.ne.s32.totalorder %s308, %s310
      %p314 = scmp.eq.s32.totalorder %s43, 0
      %p315 = por %p313, %p314
      %p316 = scmp.ne.s32.totalorder %s308, %s310
      %p317 = scmp.eq.s32.totalorder %s48, 1
      %p318 = por %p316, %p317
      %p319 = scmp.ne.s32.totalorder %s310, %s311
      %p320 = scmp.eq.s32.totalorder %s48, 0
      %p321 = por %p319, %p320
      %p322 = scmp.ne.s32.totalorder %s310, %s311
      %p323 = scmp.eq.s32.totalorder %s49, 1
      %p324 = por %p322, %p323
      %p326 = scmp.ne.s32.totalorder %s311, %s325
      %p327 = scmp.eq.s32.totalorder %s49, 0
      %p328 = por %p326, %p327
      %s330 = sadd.s32 %s329, 1
      %p333 = scmp.eq.s32.totalorder %s43, 1
      %p334 = scmp.ne.s32.totalorder %s329, %s331
      %p335 = scmp.eq.s32.totalorder %s43, 0
      %p336 = por %p334, %p335
      %p337 = scmp.ne.s32.totalorder %s329, %s331
      %p338 = scmp.eq.s32.totalorder %s48, 1
      %p339 = por %p337, %p338
      %p340 = scmp.ne.s32.totalorder %s331, %s332
      %p341 = scmp.eq.s32.totalorder %s48, 0
      %p342 = por %p340, %p341
      %p343 = scmp.ne.s32.totalorder %s331, %s332
      %p344 = scmp.eq.s32.totalorder %s49, 1
      %p345 = por %p343, %p344
      %p347 = scmp.ne.s32.totalorder %s332, %s346
      %p348 = scmp.eq.s32.totalorder %s49, 0
      %p349 = por %p347, %p348
      %s351 = sadd.s32 %s350, 1
      %p354 = scmp.eq.s32.totalorder %s43, 1
      %p355 = scmp.ne.s32.totalorder %s350, %s352
      %p356 = scmp.eq.s32.totalorder %s43, 0
      %p357 = por %p355, %p356
      %p358 = scmp.ne.s32.totalorder %s350, %s352
      %p359 = scmp.eq.s32.totalorder %s48, 1
      %p360 = por %p358, %p359
      %p361 = scmp.ne.s32.totalorder %s352, %s353
      %p362 = scmp.eq.s32.totalorder %s48, 0
      %p363 = por %p361, %p362
      %p364 = scmp.ne.s32.totalorder %s352, %s353
      %p365 = scmp.eq.s32.totalorder %s49, 1
      %p366 = por %p364, %p365
      %p368 = scmp.ne.s32.totalorder %s353, %s367
      %p369 = scmp.eq.s32.totalorder %s49, 0
      %p370 = por %p368, %p369
      %s372 = sadd.s32 %s371, 1
      %p375 = scmp.eq.s32.totalorder %s43, 1
      %p376 = scmp.ne.s32.totalorder %s371, %s373
      %p377 = scmp.eq.s32.totalorder %s43, 0
      %p378 = por %p376, %p377
      %p379 = scmp.ne.s32.totalorder %s371, %s373
      %p380 = scmp.eq.s32.totalorder %s48, 1
      %p381 = por %p379, %p380
      %p382 = scmp.ne.s32.totalorder %s373, %s374
      %p383 = scmp.eq.s32.totalorder %s48, 0
      %p384 = por %p382, %p383
      %p385 = scmp.ne.s32.totalorder %s373, %s374
      %p386 = scmp.eq.s32.totalorder %s49, 1
      %p387 = por %p385, %p386
      %p389 = scmp.ne.s32.totalorder %s374, %s388
      %p390 = scmp.eq.s32.totalorder %s49, 0
      %p391 = por %p389, %p390
      %s393 = sadd.s32 %s392, 1
      %p396 = scmp.eq.s32.totalorder %s43, 1
      %p397 = scmp.ne.s32.totalorder %s392, %s394
      %p398 = scmp.eq.s32.totalorder %s43, 0
      %p399 = por %p397, %p398
      %p400 = scmp.ne.s32.totalorder %s392, %s394
      %p401 = scmp.eq.s32.totalorder %s48, 1
      %p402 = por %p400, %p401
      %p403 = scmp.ne.s32.totalorder %s394, %s395
      %p404 = scmp.eq.s32.totalorder %s48, 0
      %p405 = por %p403, %p404
      %p406 = scmp.ne.s32.totalorder %s394, %s395
      %p407 = scmp.eq.s32.totalorder %s49, 1
      %p408 = por %p406, %p407
      %p410 = scmp.ne.s32.totalorder %s395, %s409
      %p411 = scmp.eq.s32.totalorder %s49, 0
      %p412 = por %p410, %p411
      %s414 = sadd.s32 %s413, 1
      %p417 = scmp.eq.s32.totalorder %s43, 1
      %p418 = scmp.ne.s32.totalorder %s413, %s415
      %p419 = scmp.eq.s32.totalorder %s43, 0
      %p420 = por %p418, %p419
      %p421 = scmp.ne.s32.totalorder %s413, %s415
      %p422 = scmp.eq.s32.totalorder %s48, 1
      %p423 = por %p421, %p422
      %p424 = scmp.ne.s32.totalorder %s415, %s416
      %p425 = scmp.eq.s32.totalorder %s48, 0
      %p426 = por %p424, %p425
      %p427 = scmp.ne.s32.totalorder %s415, %s416
      %p428 = scmp.eq.s32.totalorder %s49, 1
      %p429 = por %p427, %p428
      %p431 = scmp.ne.s32.totalorder %s416, %s430
      %p432 = scmp.eq.s32.totalorder %s49, 0
      %p433 = por %p431, %p432
      %s435 = sadd.s32 %s434, 1
      %p438 = scmp.eq.s32.totalorder %s43, 1
      %p439 = scmp.ne.s32.totalorder %s434, %s436
      %p440 = scmp.eq.s32.totalorder %s43, 0
      %p441 = por %p439, %p440
      %p442 = scmp.ne.s32.totalorder %s434, %s436
      %p443 = scmp.eq.s32.totalorder %s48, 1
      %p444 = por %p442, %p443
      %p445 = scmp.ne.s32.totalorder %s436, %s437
      %p446 = scmp.eq.s32.totalorder %s48, 0
      %p447 = por %p445, %p446
      %p448 = scmp.ne.s32.totalorder %s436, %s437
      %p449 = scmp.eq.s32.totalorder %s49, 1
      %p450 = por %p448, %p449
      %p452 = scmp.ne.s32.totalorder %s437, %s451
      %p453 = scmp.eq.s32.totalorder %s49, 0
      %p454 = por %p452, %p453
      %s456 = sadd.s32 %s455, 1
      %p459 = scmp.eq.s32.totalorder %s43, 1
      %p460 = scmp.ne.s32.totalorder %s455, %s457
      %p461 = scmp.eq.s32.totalorder %s43, 0
      %p462 = por %p460, %p461
      %p463 = scmp.ne.s32.totalorder %s455, %s457
      %p464 = scmp.eq.s32.totalorder %s48, 1
      %p465 = por %p463, %p464
      %p466 = scmp.ne.s32.totalorder %s457, %s458
      %p467 = scmp.eq.s32.totalorder %s48, 0
      %p468 = por %p466, %p467
      %p469 = scmp.ne.s32.totalorder %s457, %s458
      %p470 = scmp.eq.s32.totalorder %s49, 1
      %p471 = por %p469, %p470
      %p473 = scmp.ne.s32.totalorder %s458, %s472
      %p474 = scmp.eq.s32.totalorder %s49, 0
      %p475 = por %p473, %p474
      %s477 = sadd.s32 %s476, 1
      %p480 = scmp.eq.s32.totalorder %s43, 1
      %p481 = scmp.ne.s32.totalorder %s476, %s478
      %p482 = scmp.eq.s32.totalorder %s43, 0
      %p483 = por %p481, %p482
      %p484 = scmp.ne.s32.totalorder %s476, %s478
      %p485 = scmp.eq.s32.totalorder %s48, 1
      %p486 = por %p484, %p485
      %p487 = scmp.ne.s32.totalorder %s478, %s479
      %p488 = scmp.eq.s32.totalorder %s48, 0
      %p489 = por %p487, %p488
      %p490 = scmp.ne.s32.totalorder %s478, %s479
      %p491 = scmp.eq.s32.totalorder %s49, 1
      %p492 = por %p490, %p491
      %p494 = scmp.ne.s32.totalorder %s479, %s493
      %p495 = scmp.eq.s32.totalorder %s49, 0
      %p496 = por %p494, %p495
      %s498 = sadd.s32 %s497, 1
      %p501 = scmp.eq.s32.totalorder %s43, 1
      %p502 = scmp.ne.s32.totalorder %s497, %s499
      %p503 = scmp.eq.s32.totalorder %s43, 0
      %p504 = por %p502, %p503
      %p505 = scmp.ne.s32.totalorder %s497, %s499
      %p506 = scmp.eq.s32.totalorder %s48, 1
      %p507 = por %p505, %p506
      %p508 = scmp.ne.s32.totalorder %s499, %s500
      %p509 = scmp.eq.s32.totalorder %s48, 0
      %p510 = por %p508, %p509
      %p511 = scmp.ne.s32.totalorder %s499, %s500
      %p512 = scmp.eq.s32.totalorder %s49, 1
      %p513 = por %p511, %p512
      %p515 = scmp.ne.s32.totalorder %s500, %s514
      %p516 = scmp.eq.s32.totalorder %s49, 0
      %p517 = por %p515, %p516
      %s519 = sadd.s32 %s518, 1
      %p522 = scmp.eq.s32.totalorder %s43, 1
      %p523 = scmp.ne.s32.totalorder %s518, %s520
      %p524 = scmp.eq.s32.totalorder %s43, 0
      %p525 = por %p523, %p524
      %p526 = scmp.ne.s32.totalorder %s518, %s520
      %p527 = scmp.eq.s32.totalorder %s48, 1
      %p528 = por %p526, %p527
      %p529 = scmp.ne.s32.totalorder %s520, %s521
      %p530 = scmp.eq.s32.totalorder %s48, 0
      %p531 = por %p529, %p530
      %p532 = scmp.ne.s32.totalorder %s520, %s521
      %p533 = scmp.eq.s32.totalorder %s49, 1
      %p534 = por %p532, %p533
      %p536 = scmp.ne.s32.totalorder %s521, %s535
      %p537 = scmp.eq.s32.totalorder %s49, 0
      %p538 = por %p536, %p537
      %s540 = sadd.s32 %s539, 1
      %p543 = scmp.eq.s32.totalorder %s43, 1
      %p544 = scmp.ne.s32.totalorder %s539, %s541
      %p545 = scmp.eq.s32.totalorder %s43, 0
      %p546 = por %p544, %p545
      %p547 = scmp.ne.s32.totalorder %s539, %s541
      %p548 = scmp.eq.s32.totalorder %s48, 1
      %p549 = por %p547, %p548
      %p550 = scmp.ne.s32.totalorder %s541, %s542
      %p551 = scmp.eq.s32.totalorder %s48, 0
      %p552 = por %p550, %p551
      %p553 = scmp.ne.s32.totalorder %s541, %s542
      %p554 = scmp.eq.s32.totalorder %s49, 1
      %p555 = por %p553, %p554
      %p557 = scmp.ne.s32.totalorder %s542, %s556
      %p558 = scmp.eq.s32.totalorder %s49, 0
      %p559 = por %p557, %p558
      %s561 = sadd.s32 %s560, 1
      %p564 = scmp.eq.s32.totalorder %s43, 1
      %p565 = scmp.ne.s32.totalorder %s560, %s562
      %p566 = scmp.eq.s32.totalorder %s43, 0
      %p567 = por %p565, %p566
      %p568 = scmp.ne.s32.totalorder %s560, %s562
      %p569 = scmp.eq.s32.totalorder %s48, 1
      %p570 = por %p568, %p569
      %p571 = scmp.ne.s32.totalorder %s562, %s563
      %p572 = scmp.eq.s32.totalorder %s48, 0
      %p573 = por %p571, %p572
      %p574 = scmp.ne.s32.totalorder %s562, %s563
      %p575 = scmp.eq.s32.totalorder %s49, 1
      %p576 = por %p574, %p575
      %p578 = scmp.ne.s32.totalorder %s563, %s577
      %p579 = scmp.eq.s32.totalorder %s49, 0
      %p580 = por %p578, %p579
      %s582 = sadd.s32 %s581, 1
      %p585 = scmp.eq.s32.totalorder %s43, 1
      %p586 = scmp.ne.s32.totalorder %s581, %s583
      %p587 = scmp.eq.s32.totalorder %s43, 0
      %p588 = por %p586, %p587
      %p589 = scmp.ne.s32.totalorder %s581, %s583
      %p590 = scmp.eq.s32.totalorder %s48, 1
      %p591 = por %p589, %p590
      %p592 = scmp.ne.s32.totalorder %s583, %s584
      %p593 = scmp.eq.s32.totalorder %s48, 0
      %p594 = por %p592, %p593
      %p595 = scmp.ne.s32.totalorder %s583, %s584
      %p596 = scmp.eq.s32.totalorder %s49, 1
      %p597 = por %p595, %p596
      %p599 = scmp.ne.s32.totalorder %s584, %s598
      %p600 = scmp.eq.s32.totalorder %s49, 0
      %p601 = por %p599, %p600
      %s603 = sadd.s32 %s602, 1
      %p606 = scmp.eq.s32.totalorder %s43, 1
      %p607 = scmp.ne.s32.totalorder %s602, %s604
      %p608 = scmp.eq.s32.totalorder %s43, 0
      %p609 = por %p607, %p608
      %p610 = scmp.ne.s32.totalorder %s602, %s604
      %p611 = scmp.eq.s32.totalorder %s48, 1
      %p612 = por %p610, %p611
      %p613 = scmp.ne.s32.totalorder %s604, %s605
      %p614 = scmp.eq.s32.totalorder %s48, 0
      %p615 = por %p613, %p614
      %p616 = scmp.ne.s32.totalorder %s604, %s605
      %p617 = scmp.eq.s32.totalorder %s49, 1
      %p618 = por %p616, %p617
      %p620 = scmp.ne.s32.totalorder %s605, %s619
      %p621 = scmp.eq.s32.totalorder %s49, 0
      %p622 = por %p620, %p621
      %s623 = ssub.s32 %s43, %s50
      %p624 = scmp.eq.s32.totalorder %s623, 0
      %s626 = sadd.s32 %s625, 1
      %s627 = scalar_select %p624, %s625, %s626
      %p630 = pneg %p624
      %p631 = scmp.eq.s32.totalorder %s43, 1
      %p632 = por %p630, %p631
      %p633 = scmp.ne.s32.totalorder %s625, %s628
      %p634 = scmp.eq.s32.totalorder %s43, 0
      %p635 = por %p633, %p634
      %p636 = scmp.ne.s32.totalorder %s625, %s628
      %p637 = scmp.eq.s32.totalorder %s48, 1
      %p638 = por %p636, %p637
      %p639 = scmp.ne.s32.totalorder %s628, %s629
      %p640 = scmp.eq.s32.totalorder %s48, 0
      %p641 = por %p639, %p640
      %p642 = scmp.ne.s32.totalorder %s628, %s629
      %p643 = scmp.eq.s32.totalorder %s49, 1
      %p644 = por %p642, %p643
      %p646 = scmp.ne.s32.totalorder %s629, %s645
      %p647 = scmp.eq.s32.totalorder %s49, 0
      %p648 = por %p646, %p647
      %p649 = scmp.le.s32.totalorder 1, %s43
      %p650 = scmp.lt.s32.totalorder %s43, 3
      %p651 = pnand %p649, %p650
      %p652 = pneg %p651
      // Predicated region
      $region9: #{tpu_custom_call.1} parent=5 // pred_check
        _
      $region10: #{tpu_custom_call.1} parent=5 // pred_check_branch
        %654 = sbr.rel (%p651) target = $region12
      $region11: #{tpu_custom_call.1} parent=5 // pred_region
        %s655 = ssub.s32 %s43, 1
        // Predicated region
        $region13: #{tpu_custom_call.1} parent=11 // pred_check
          %p656 = pneg %p90
        $region14: #{tpu_custom_call.1} parent=11 // pred_check_branch
          %658 = sbr.rel (%p656) target = $region16
        $region15: #{tpu_custom_call.1} parent=11 // pred_region
          _
        $region16: #{tpu_custom_call.1} parent=11 // pred_fallthru
          _
        // Predicated region
        $region17: #{tpu_custom_call.1} parent=11 // pred_check
          %p659 = pneg %p111
        $region18: #{tpu_custom_call.1} parent=11 // pred_check_branch
          %661 = sbr.rel (%p659) target = $region20
        $region19: #{tpu_custom_call.1} parent=11 // pred_region
          %s663 = ssub.s32 32, 32
          %664 = vsyncadd [#allocation4], %s663
          %s666 = sshll.u32 [#allocation3], 4
          %s667 = int_to_ptr.vmem [resolvable:$true] %s666
          %669 = dma.hbm_to_vmem [thread:$0]  %s2, 32, %s667, [#allocation4]
        $region20: #{tpu_custom_call.1} parent=11 // pred_fallthru
          _
        // Predicated region
        $region21: #{tpu_custom_call.1} parent=11 // pred_check
          %p670 = pneg %p132
        $region22: #{tpu_custom_call.1} parent=11 // pred_check_branch
          %672 = sbr.rel (%p670) target = $region24
        $region23: #{tpu_custom_call.1} parent=11 // pred_region
          %s674 = ssub.s32 32, 32
          %675 = vsyncadd [#allocation7], %s674
          %s677 = sshll.u32 [#allocation6], 4
          %s678 = int_to_ptr.vmem [resolvable:$true] %s677
          %680 = dma.hbm_to_vmem [thread:$0]  %s3, 32, %s678, [#allocation7]
        $region24: #{tpu_custom_call.1} parent=11 // pred_fallthru
          _
        // Predicated region
        $region25: #{tpu_custom_call.1} parent=11 // pred_check
          %p681 = pneg %p153
        $region26: #{tpu_custom_call.1} parent=11 // pred_check_branch
          %683 = sbr.rel (%p681) target = $region28
        $region27: #{tpu_custom_call.1} parent=11 // pred_region
          %s685 = ssub.s32 32, 32
          %686 = vsyncadd [#allocation7], %s685
          %s688 = sshll.u32 [#allocation8], 4
          %s689 = int_to_ptr.vmem [resolvable:$true] %s688
          %691 = dma.hbm_to_vmem [thread:$0]  %s4, 32, %s689, [#allocation7]
        $region28: #{tpu_custom_call.1} parent=11 // pred_fallthru
          _
        // Predicated region
        $region29: #{tpu_custom_call.1} parent=11 // pred_check
          %p692 = pneg %p174
        $region30: #{tpu_custom_call.1} parent=11 // pred_check_branch
          %694 = sbr.rel (%p692) target = $region32
        $region31: #{tpu_custom_call.1} parent=11 // pred_region
          %s696 = ssub.s32 16384, 16384
          %697 = vsyncadd [#allocation10], %s696
          %s698 = sshll.u32 [#allocation9], 4
          %s699 = int_to_ptr.vmem [resolvable:$true] %s698
          %704 = dma.hbm_to_vmem [thread:$0]  %s5, 16384, %s699, [#allocation10], 512, 512, 32
        $region32: #{tpu_custom_call.1} parent=11 // pred_fallthru
          _
        // Predicated region
        $region33: #{tpu_custom_call.1} parent=11 // pred_check
          %p705 = pneg %p195
        $region34: #{tpu_custom_call.1} parent=11 // pred_check_branch
          %707 = sbr.rel (%p705) target = $region36
        $region35: #{tpu_custom_call.1} parent=11 // pred_region
          _
        $region36: #{tpu_custom_call.1} parent=11 // pred_fallthru
          _
        // Predicated region
        $region37: #{tpu_custom_call.1} parent=11 // pred_check
          %p708 = pneg %p216
        $region38: #{tpu_custom_call.1} parent=11 // pred_check_branch
          %710 = sbr.rel (%p708) target = $region40
        $region39: #{tpu_custom_call.1} parent=11 // pred_region
          _
        $region40: #{tpu_custom_call.1} parent=11 // pred_fallthru
          _
        // Predicated region
        $region41: #{tpu_custom_call.1} parent=11 // pred_check
          %p711 = pneg %p237
        $region42: #{tpu_custom_call.1} parent=11 // pred_check_branch
          %713 = sbr.rel (%p711) target = $region44
        $region43: #{tpu_custom_call.1} parent=11 // pred_region
          _
        $region44: #{tpu_custom_call.1} parent=11 // pred_fallthru
          _
        // Predicated region
        $region45: #{tpu_custom_call.1} parent=11 // pred_check
          %p714 = pneg %p258
        $region46: #{tpu_custom_call.1} parent=11 // pred_check_branch
          %716 = sbr.rel (%p714) target = $region48
        $region47: #{tpu_custom_call.1} parent=11 // pred_region
          %s718 = ssub.s32 16384, 16384
          %719 = vsyncadd [#allocation10], %s718
          %s720 = sshll.u32 [#allocation11], 4
          %s721 = int_to_ptr.vmem [resolvable:$true] %s720
          %726 = dma.hbm_to_vmem [thread:$0]  %s9, 16384, %s721, [#allocation10], 512, 512, 32
        $region48: #{tpu_custom_call.1} parent=11 // pred_fallthru
          _
        // Predicated region
        $region49: #{tpu_custom_call.1} parent=11 // pred_check
          %p727 = pneg %p279
        $region50: #{tpu_custom_call.1} parent=11 // pred_check_branch
          %729 = sbr.rel (%p727) target = $region52
        $region51: #{tpu_custom_call.1} parent=11 // pred_region
          _
        $region52: #{tpu_custom_call.1} parent=11 // pred_fallthru
          _
        // Predicated region
        $region53: #{tpu_custom_call.1} parent=11 // pred_check
          %p730 = pneg %p300
        $region54: #{tpu_custom_call.1} parent=11 // pred_check_branch
          %732 = sbr.rel (%p730) target = $region56
        $region55: #{tpu_custom_call.1} parent=11 // pred_region
          %s734 = ssub.s32 8192, 8192
          %735 = vsyncadd [#allocation13], %s734
          %s736 = sshll.u32 [#allocation12], 4
          %s737 = int_to_ptr.vmem [resolvable:$true] %s736
          %742 = dma.hbm_to_vmem [thread:$0]  %s11, 8192, %s737, [#allocation13], 128, 128, 8
        $region56: #{tpu_custom_call.1} parent=11 // pred_fallthru
          _
        // Predicated region
        $region57: #{tpu_custom_call.1} parent=11 // pred_check
          %p743 = pneg %p321
        $region58: #{tpu_custom_call.1} parent=11 // pred_check_branch
          %745 = sbr.rel (%p743) target = $region60
        $region59: #{tpu_custom_call.1} parent=11 // pred_region
          _
        $region60: #{tpu_custom_call.1} parent=11 // pred_fallthru
          _
        // Predicated region
        $region61: #{tpu_custom_call.1} parent=11 // pred_check
          %p746 = pneg %p342
        $region62: #{tpu_custom_call.1} parent=11 // pred_check_branch
          %748 = sbr.rel (%p746) target = $region64
        $region63: #{tpu_custom_call.1} parent=11 // pred_region
          _
        $region64: #{tpu_custom_call.1} parent=11 // pred_fallthru
          _
        // Predicated region
        $region65: #{tpu_custom_call.1} parent=11 // pred_check
          %p749 = pneg %p363
        $region66: #{tpu_custom_call.1} parent=11 // pred_check_branch
          %751 = sbr.rel (%p749) target = $region68
        $region67: #{tpu_custom_call.1} parent=11 // pred_region
          _
        $region68: #{tpu_custom_call.1} parent=11 // pred_fallthru
          _
        // Predicated region
        $region69: #{tpu_custom_call.1} parent=11 // pred_check
          %p752 = pneg %p384
        $region70: #{tpu_custom_call.1} parent=11 // pred_check_branch
          %754 = sbr.rel (%p752) target = $region72
        $region71: #{tpu_custom_call.1} parent=11 // pred_region
          _
        $region72: #{tpu_custom_call.1} parent=11 // pred_fallthru
          _
        // Predicated region
        $region73: #{tpu_custom_call.1} parent=11 // pred_check
          %p755 = pneg %p405
        $region74: #{tpu_custom_call.1} parent=11 // pred_check_branch
          %757 = sbr.rel (%p755) target = $region76
        $region75: #{tpu_custom_call.1} parent=11 // pred_region
          _
        $region76: #{tpu_custom_call.1} parent=11 // pred_fallthru
          _
        // Predicated region
        $region77: #{tpu_custom_call.1} parent=11 // pred_check
          %p758 = pneg %p426
        $region78: #{tpu_custom_call.1} parent=11 // pred_check_branch
          %760 = sbr.rel (%p758) target = $region80
        $region79: #{tpu_custom_call.1} parent=11 // pred_region
          %s762 = ssub.s32 32768, 32768
          %763 = vsyncadd [#allocation13], %s762
          %s764 = sshll.u32 [#allocation14], 4
          %s765 = int_to_ptr.vmem [resolvable:$true] %s764
          %770 = dma.hbm_to_vmem [thread:$0]  %s17, 32768, %s765, [#allocation13], 512, 512, 32
        $region80: #{tpu_custom_call.1} parent=11 // pred_fallthru
          _
        // Predicated region
        $region81: #{tpu_custom_call.1} parent=11 // pred_check
          %p771 = pneg %p447
        $region82: #{tpu_custom_call.1} parent=11 // pred_check_branch
          %773 = sbr.rel (%p771) target = $region84
        $region83: #{tpu_custom_call.1} parent=11 // pred_region
          _
        $region84: #{tpu_custom_call.1} parent=11 // pred_fallthru
          _
        // Predicated region
        $region85: #{tpu_custom_call.1} parent=11 // pred_check
          %p774 = pneg %p468
        $region86: #{tpu_custom_call.1} parent=11 // pred_check_branch
          %776 = sbr.rel (%p774) target = $region88
        $region87: #{tpu_custom_call.1} parent=11 // pred_region
          _
        $region88: #{tpu_custom_call.1} parent=11 // pred_fallthru
          _
        // Predicated region
        $region89: #{tpu_custom_call.1} parent=11 // pred_check
          %p777 = pneg %p489
        $region90: #{tpu_custom_call.1} parent=11 // pred_check_branch
          %779 = sbr.rel (%p777) target = $region92
        $region91: #{tpu_custom_call.1} parent=11 // pred_region
          _
        $region92: #{tpu_custom_call.1} parent=11 // pred_fallthru
          _
        // Predicated region
        $region93: #{tpu_custom_call.1} parent=11 // pred_check
          %p780 = pneg %p510
        $region94: #{tpu_custom_call.1} parent=11 // pred_check_branch
          %782 = sbr.rel (%p780) target = $region96
        $region95: #{tpu_custom_call.1} parent=11 // pred_region
          %s784 = ssub.s32 32768, 32768
          %785 = vsyncadd [#allocation16], %s784
          %s786 = sshll.u32 [#allocation15], 4
          %s787 = int_to_ptr.vmem [resolvable:$true] %s786
          %792 = dma.hbm_to_vmem [thread:$0]  %s21, 32768, %s787, [#allocation16], 512, 512, 32
        $region96: #{tpu_custom_call.1} parent=11 // pred_fallthru
          _
        // Predicated region
        $region97: #{tpu_custom_call.1} parent=11 // pred_check
          %p793 = pneg %p531
        $region98: #{tpu_custom_call.1} parent=11 // pred_check_branch
          %795 = sbr.rel (%p793) target = $region100
        $region99: #{tpu_custom_call.1} parent=11 // pred_region
          _
        $region100: #{tpu_custom_call.1} parent=11 // pred_fallthru
          _
        // Predicated region
        $region101: #{tpu_custom_call.1} parent=11 // pred_check
          %p796 = pneg %p552
        $region102: #{tpu_custom_call.1} parent=11 // pred_check_branch
          %798 = sbr.rel (%p796) target = $region104
        $region103: #{tpu_custom_call.1} parent=11 // pred_region
          _
        $region104: #{tpu_custom_call.1} parent=11 // pred_fallthru
          _
        // Predicated region
        $region105: #{tpu_custom_call.1} parent=11 // pred_check
          %p799 = pneg %p573
        $region106: #{tpu_custom_call.1} parent=11 // pred_check_branch
          %801 = sbr.rel (%p799) target = $region108
        $region107: #{tpu_custom_call.1} parent=11 // pred_region
          _
        $region108: #{tpu_custom_call.1} parent=11 // pred_fallthru
          _
        // Predicated region
        $region109: #{tpu_custom_call.1} parent=11 // pred_check
          %p802 = pneg %p594
        $region110: #{tpu_custom_call.1} parent=11 // pred_check_branch
          %804 = sbr.rel (%p802) target = $region112
        $region111: #{tpu_custom_call.1} parent=11 // pred_region
          %s806 = ssub.s32 16384, 16384
          %807 = vsyncadd [#allocation16], %s806
          %s808 = sshll.u32 [#allocation17], 4
          %s809 = int_to_ptr.vmem [resolvable:$true] %s808
          %814 = dma.hbm_to_vmem [thread:$0]  %s25, 16384, %s809, [#allocation16], 256, 256, 16
        $region112: #{tpu_custom_call.1} parent=11 // pred_fallthru
          _
        // Predicated region
        $region113: #{tpu_custom_call.1} parent=11 // pred_check
          %p815 = pneg %p615
        $region114: #{tpu_custom_call.1} parent=11 // pred_check_branch
          %817 = sbr.rel (%p815) target = $region116
        $region115: #{tpu_custom_call.1} parent=11 // pred_region
          _
        $region116: #{tpu_custom_call.1} parent=11 // pred_fallthru
          _
      $region12: #{tpu_custom_call.1} parent=5 // pred_fallthru
        _
      %p818 = scmp.lt.s32.totalorder %s43, 2
      // Predicated region
      $region117: #{tpu_custom_call.1} parent=5 // pred_check
        %p819 = pneg %p818
      $region118: #{tpu_custom_call.1} parent=5 // pred_check_branch
        %821 = sbr.rel (%p819) target = $region120
      $region119: #{tpu_custom_call.1} parent=5 // pred_region
        // Predicated region
        $region121: #{tpu_custom_call.1} parent=119 // pred_check
          %p822 = pneg %p63
        $region122: #{tpu_custom_call.1} parent=119 // pred_check_branch
          %824 = sbr.rel (%p822) target = $region124
        $region123: #{tpu_custom_call.1} parent=119 // pred_region
          %s825 = smul.u32 2, %s43
          %p826 = scmp.lt.s32.totalorder %s825, 3
          %s827 = scalar_select %p826, %s825, 3
          %s828 = smul.addr %s827, 8
          %s829 = scalar_lea.vmem %s0, %s828
          %s830 = smul.u32 2, %s43
        $region124: #{tpu_custom_call.1} parent=119 // pred_fallthru
          _
      $region120: #{tpu_custom_call.1} parent=5 // pred_fallthru
        _
      %p831 = scmp.le.s32.totalorder 1, %s43
      %p832 = scmp.lt.s32.totalorder %s43, 3
      %p833 = pnand %p831, %p832
      %p834 = pneg %p833
      // Predicated region
      $region125: #{tpu_custom_call.1} parent=5 // pred_check
        _
      $region126: #{tpu_custom_call.1} parent=5 // pred_check_branch
        %836 = sbr.rel (%p833) target = $region128
      $region127: #{tpu_custom_call.1} parent=5 // pred_region
        %s837 = ssub.s32 %s43, 1
        // Predicated region
        $region129: #{tpu_custom_call.1} parent=127 // pred_check
          %p838 = pneg %p111
        $region130: #{tpu_custom_call.1} parent=127 // pred_check_branch
          %840 = sbr.rel (%p838) target = $region132
        $region131: #{tpu_custom_call.1} parent=127 // pred_region
          %841 = dma.done [#allocation4], 32
        $region132: #{tpu_custom_call.1} parent=127 // pred_fallthru
          _
        // Predicated region
        $region133: #{tpu_custom_call.1} parent=127 // pred_check
          %p842 = pneg %p132
        $region134: #{tpu_custom_call.1} parent=127 // pred_check_branch
          %844 = sbr.rel (%p842) target = $region136
        $region135: #{tpu_custom_call.1} parent=127 // pred_region
          %845 = dma.done [#allocation7], 32
        $region136: #{tpu_custom_call.1} parent=127 // pred_fallthru
          _
        // Predicated region
        $region137: #{tpu_custom_call.1} parent=127 // pred_check
          %p846 = pneg %p153
        $region138: #{tpu_custom_call.1} parent=127 // pred_check_branch
          %848 = sbr.rel (%p846) target = $region140
        $region139: #{tpu_custom_call.1} parent=127 // pred_region
          %849 = dma.done [#allocation7], 32
        $region140: #{tpu_custom_call.1} parent=127 // pred_fallthru
          _
        // Predicated region
        $region141: #{tpu_custom_call.1} parent=127 // pred_check
          %p850 = pneg %p174
        $region142: #{tpu_custom_call.1} parent=127 // pred_check_branch
          %852 = sbr.rel (%p850) target = $region144
        $region143: #{tpu_custom_call.1} parent=127 // pred_region
          %853 = dma.done [#allocation10], 16384
        $region144: #{tpu_custom_call.1} parent=127 // pred_fallthru
          _
        // Predicated region
        $region145: #{tpu_custom_call.1} parent=127 // pred_check
          %p854 = pneg %p258
        $region146: #{tpu_custom_call.1} parent=127 // pred_check_branch
          %856 = sbr.rel (%p854) target = $region148
        $region147: #{tpu_custom_call.1} parent=127 // pred_region
          %857 = dma.done [#allocation10], 16384
        $region148: #{tpu_custom_call.1} parent=127 // pred_fallthru
          _
        // Predicated region
        $region149: #{tpu_custom_call.1} parent=127 // pred_check
          %p858 = pneg %p300
        $region150: #{tpu_custom_call.1} parent=127 // pred_check_branch
          %860 = sbr.rel (%p858) target = $region152
        $region151: #{tpu_custom_call.1} parent=127 // pred_region
          %861 = dma.done [#allocation13], 8192
        $region152: #{tpu_custom_call.1} parent=127 // pred_fallthru
          _
        // Predicated region
        $region153: #{tpu_custom_call.1} parent=127 // pred_check
          %p862 = pneg %p426
        $region154: #{tpu_custom_call.1} parent=127 // pred_check_branch
          %864 = sbr.rel (%p862) target = $region156
        $region155: #{tpu_custom_call.1} parent=127 // pred_region
          %865 = dma.done [#allocation13], 32768
        $region156: #{tpu_custom_call.1} parent=127 // pred_fallthru
          _
        // Predicated region
        $region157: #{tpu_custom_call.1} parent=127 // pred_check
          %p866 = pneg %p510
        $region158: #{tpu_custom_call.1} parent=127 // pred_check_branch
          %868 = sbr.rel (%p866) target = $region160
        $region159: #{tpu_custom_call.1} parent=127 // pred_region
          %869 = dma.done [#allocation16], 32768
        $region160: #{tpu_custom_call.1} parent=127 // pred_fallthru
          _
        // Predicated region
        $region161: #{tpu_custom_call.1} parent=127 // pred_check
          %p870 = pneg %p594
        $region162: #{tpu_custom_call.1} parent=127 // pred_check_branch
          %872 = sbr.rel (%p870) target = $region164
        $region163: #{tpu_custom_call.1} parent=127 // pred_region
          %873 = dma.done [#allocation16], 16384
        $region164: #{tpu_custom_call.1} parent=127 // pred_fallthru
          _
        %s874 = smul.u32 2, %s48
        %p875 = scmp.lt.s32.totalorder %s874, 3
        %s876 = scalar_select %p875, %s874, 3
        %s877 = smul.addr %s876, 8
        %s878 = scalar_lea.vmem %s0, %s877
        %p879 = pneg %p69
        %p880 = pneg %p66
        %p881 = pneg %p90
        %p882 = pneg %p87
        %p883 = pneg %p111
        %p884 = pneg %p108
        %p885 = pneg %p132
        %p886 = pneg %p129
        %p887 = pneg %p153
        %p888 = pneg %p150
        %p889 = pneg %p174
        %p890 = pneg %p171
        %p891 = pneg %p195
        %p892 = pneg %p192
        %p893 = pneg %p216
        %p894 = pneg %p213
        %p895 = pneg %p237
        %p896 = pneg %p234
        %p897 = pneg %p258
        %p898 = pneg %p255
        %p899 = pneg %p279
        %p900 = pneg %p276
        %p901 = pneg %p300
        %p902 = pneg %p297
        %p903 = pneg %p321
        %p904 = pneg %p318
        %p905 = pneg %p342
        %p906 = pneg %p339
        %p907 = pneg %p363
        %p908 = pneg %p360
        %p909 = pneg %p384
        %p910 = pneg %p381
        %p911 = pneg %p405
        %p912 = pneg %p402
        %p913 = pneg %p426
        %p914 = pneg %p423
        %p915 = pneg %p447
        %p916 = pneg %p444
        %p917 = pneg %p468
        %p918 = pneg %p465
        %p919 = pneg %p489
        %p920 = pneg %p486
        %p921 = pneg %p510
        %p922 = pneg %p507
        %p923 = pneg %p531
        %p924 = pneg %p528
        %p925 = pneg %p552
        %p926 = pneg %p549
        %p927 = pneg %p573
        %p928 = pneg %p570
        %p929 = pneg %p594
        %p930 = pneg %p591
        %p931 = pneg %p615
        %p932 = pneg %p612
        %p933 = pneg %p641
        %p934 = pneg %p638
        %s935 = sand.u32 %s628, 1
        %s936 = scalar_lea.sflag [#allocation5], %s935
        %s937 = sand.u32 %s628, 1
        %s938 = smul.addr %s937, 32
        %s939 = scalar_lea.vmem [#allocation18], %s938
        %s940 = smul.u32 2, %s48
        %p941 = scmp.lt.s32.totalorder %s940, 3
        %s942 = scalar_select %p941, %s940, 3
        %s943 = smul.addr %s942, 8
        %s944 = scalar_lea.vmem %s0, %s943
        %s945 = smul.u32 2, %s48
        %s946 = smul.u32 2, %s48
        %v947 = vld [vmem:[%s944] sm:$0xff]
        %v948 = vld [vmem:[%s944 + $0x8] sm:$0xff]
        %v949 = vld [vmem:[%s1] sm:$0x1f]
        %v950 = vld [vmem:[%s1 + $0x8] sm:$0x1f]
        %v951 = vld [vmem:[#allocation3] sm:$0x3]
        %v953 = vlaneseq
        %v954 = vshrl.u32 %v953, 7
        %v955 = vsub.s32 0, %v954
        %v956 = vrot.slane %v951, %v955
        %v957 = vlaneseq
        %v958 = vshrl.u32 %v957, 7
        %v959 = vsub.s32 1, %v958
        %v960 = vrot.slane %v951, %v959
        %vm963 = vcmask 39936
        %v965 = vsel %vm963, %v947, 0
        %v968 = vsel %vm963, %v948, 0
        %vm970 = vcmask 1044480
        %v972 = vsel %vm970, %v949, 0
        %v975 = vsel %vm970, %v950, 0
        %977 = vmatprep.subr.mxu0 0.0
        %978 = vmatpush1.msra.mxu0 0.0
        %979 = vmatprep.subr.mxu0 0.0
        %980 = vmatpush1.msra.mxu0 0.0
        %981 = vmatprep.subr.mxu0 0.0
        %982 = vmatpush1.msra.mxu0 0.0
        %983 = vmatprep.subr.mxu0 0.0
        %984 = vmatpush1.msra.mxu0 0.0
        %985 = vmatprep.subr.mxu0 0.0
        %986 = vmatpush1.msra.mxu0 0.0
        %987 = vmatprep.subr.mxu0 0.0
        %988 = vmatpush1.msra.mxu0 0.0
        %989 = vmatprep.subr.mxu0 0.0
        %990 = vmatpush1.msra.mxu0 0.0
        %991 = vmatprep.subr.mxu0 0.0
        %992 = vmatpush1.msra.mxu0 0.0
        %993 = vmatprep.subr.mxu0 0.0
        %994 = vmatpush1.msra.mxu0 0.0
        %995 = vmatprep.subr.mxu0 0.0
        %996 = vmatpush1.msra.mxu0 0.0
        %997 = vmatprep.subr.mxu0 0.0
        %998 = vmatpush1.msra.mxu0 0.0
        %999 = vmatprep.subr.mxu0 0.0
        %1000 = vmatpush1.msra.mxu0 0.0
        %1001 = vmatprep.subr.mxu0 0.0
        %1002 = vmatpush1.msra.mxu0 0.0
        %1003 = vmatprep.subr.mxu0 0.0
        %1004 = vmatpush1.msra.mxu0 0.0
        %1005 = vmatprep.subr.mxu0 0.0
        %1006 = vmatpush1.msra.mxu0 0.0
        %1007 = vmatprep.subr.mxu0 %v975
        %1008 = vmatpush1.msra.mxu0 %v972
        %1009 = vmatprep.subr.mxu0 0.0
        %1010 = vmatpush2.msra.mxu0 0.0
        %1011 = vmatprep.subr.mxu0 0.0
        %1012 = vmatpush2.msra.mxu0 0.0
        %1013 = vmatprep.subr.mxu0 0.0
        %1014 = vmatpush2.msra.mxu0 0.0
        %1015 = vmatprep.subr.mxu0 0.0
        %1016 = vmatpush2.msra.mxu0 0.0
        %1017 = vmatprep.subr.mxu0 0.0
        %1018 = vmatpush2.msra.mxu0 0.0
        %1019 = vmatprep.subr.mxu0 0.0
        %1020 = vmatpush2.msra.mxu0 0.0
        %1021 = vmatprep.subr.mxu0 0.0
        %1022 = vmatpush2.msra.mxu0 0.0
        %1023 = vmatprep.subr.mxu0 0.0
        %1024 = vmatpush2.msra.mxu0 0.0
        %1025 = vmatprep.subr.mxu0 0.0
        %1026 = vmatpush2.msra.mxu0 0.0
        %1027 = vmatprep.subr.mxu0 0.0
        %1028 = vmatpush2.msra.mxu0 0.0
        %1029 = vmatprep.subr.mxu0 0.0
        %1030 = vmatpush2.msra.mxu0 0.0
        %1031 = vmatprep.subr.mxu0 0.0
        %1032 = vmatpush2.msra.mxu0 0.0
        %1033 = vmatprep.subr.mxu0 0.0
        %1034 = vmatpush2.msra.mxu0 0.0
        %1035 = vmatprep.subr.mxu0 0.0
        %1036 = vmatpush2.msra.mxu0 0.0
        %1037 = vmatprep.subr.mxu0 0.0
        %1038 = vmatpush2.msra.mxu0 0.0
        %1039 = vmatprep.subr.mxu0 0.0
        %1040 = vmatpush2.msra.mxu0 0.0
        %1041 = vmatprep.mubr.f32.mxu0 0.0
        %1042 = vmatmul.mubr.f32.gmra.mxu0 %v965
        %v1043 = vpop.f32.mrf.mxu0
        %v1044 = vadd.f32 %v956, %v1043
        %v1045 = vpop.f32.mrf.mxu0
        %v1046 = vadd.f32 %v960, %v1045
        %1047 = vmatprep.mubr.f32.mxu0 0.0
        %1048 = vmatmul.mubr.f32.gmra.mxu0 %v968
        %v1049 = vpop.f32.mrf.mxu0
        %v1050 = vadd.f32 %v956, %v1049
        %v1051 = vpop.f32.mrf.mxu0
        %v1052 = vadd.f32 %v960, %v1051
        %1053 = vdwg.mxu0
        %v1054 = vld [vmem:[#allocation6] sm:$0x3]
        %v1055 = vld [vmem:[#allocation8] sm:$0x3]
        %v1056 = vadd.f32 %v1044, %v1046
        %1057 = vadd.xlane.f32.xlu0 %v1056
        %v1058 = vpop.xlane.xlu0 %1057
        %v1059 = vadd.f32 %v1050, %v1052
        %1060 = vadd.xlane.f32.xlu0 %v1059
        %v1061 = vpop.xlane.xlu0 %1060
        %v1062 = vrcp.pop 256.0
        %v1063 = vmul.f32 %v1058, %v1062
        %v1064 = vmul.f32 %v1061, %v1062
        %v1065 = vsub.f32 %v1044, %v1063
        %v1066 = vsub.f32 %v1046, %v1063
        %v1067 = vsub.f32 %v1050, %v1064
        %v1068 = vsub.f32 %v1052, %v1064
        %v1069 = vmul.f32 %v1065, %v1065
        %v1070 = vmul.f32 %v1066, %v1066
        %v1071 = vmul.f32 %v1067, %v1067
        %v1072 = vmul.f32 %v1068, %v1068
        %v1073 = vadd.f32 %v1069, %v1070
        %1074 = vadd.xlane.f32.xlu0 %v1073
        %v1075 = vpop.xlane.xlu0 %1074
        %v1076 = vadd.f32 %v1071, %v1072
        %1077 = vadd.xlane.f32.xlu0 %v1076
        %v1078 = vpop.xlane.xlu0 %1077
        %v1079 = vmul.f32 %v1075, %v1062
        %v1080 = vmul.f32 %v1078, %v1062
        %v1081 = vadd.f32 %v1079, 1e-05
        %v1082 = vadd.f32 %v1080, 1e-05
        %v1083 = vrsqrt.pop %v1081
        %v1084 = vrsqrt.pop %v1082
        %v1085 = vmul.f32 %v1065, %v1083
        %v1086 = vmul.f32 %v1066, %v1083
        %v1087 = vmul.f32 %v1067, %v1084
        %v1088 = vmul.f32 %v1068, %v1084
        %v1090 = vlaneseq
        %v1091 = vshrl.u32 %v1090, 7
        %v1092 = vsub.s32 0, %v1091
        %v1093 = vrot.slane %v1054, %v1092
        %v1094 = vlaneseq
        %v1095 = vshrl.u32 %v1094, 7
        %v1096 = vsub.s32 1, %v1095
        %v1097 = vrot.slane %v1054, %v1096
        %v1100 = vmul.f32 %v1085, %v1093
        %v1101 = vmul.f32 %v1086, %v1097
        %v1102 = vmul.f32 %v1087, %v1093
        %v1103 = vmul.f32 %v1088, %v1097
        %v1105 = vlaneseq
        %v1106 = vshrl.u32 %v1105, 7
        %v1107 = vsub.s32 0, %v1106
        %v1108 = vrot.slane %v1055, %v1107
        %v1109 = vlaneseq
        %v1110 = vshrl.u32 %v1109, 7
        %v1111 = vsub.s32 1, %v1110
        %v1112 = vrot.slane %v1055, %v1111
        %v1115 = vadd.f32 %v1100, %v1108
        %v1116 = vadd.f32 %v1101, %v1112
        %v1117 = vadd.f32 %v1102, %v1108
        %v1118 = vadd.f32 %v1103, %v1112
        %v1119 = vmul.f32 %v1115, 0.5
        %v1120 = vmul.f32 %v1116, 0.5
        %v1121 = vmul.f32 %v1117, 0.5
        %v1122 = vmul.f32 %v1118, 0.5
        %v1123 = vmul.f32 %v1115, 0.70710677
        %v1124 = vmul.f32 %v1116, 0.70710677
        %v1125 = vmul.f32 %v1117, 0.70710677
        %v1126 = vmul.f32 %v1118, 0.70710677
        %v1127 = verf.f32.pop %v1123
        %v1128 = verf.f32.pop %v1124
        %v1129 = verf.f32.pop %v1125
        %v1130 = verf.f32.pop %v1126
        %v1131 = vadd.f32 %v1127, 1.0
        %v1132 = vadd.f32 %v1128, 1.0
        %v1133 = vadd.f32 %v1129, 1.0
        %v1134 = vadd.f32 %v1130, 1.0
        %v1135 = vmul.f32 %v1119, %v1131
        %v1136 = vmul.f32 %v1120, %v1132
        %v1137 = vmul.f32 %v1121, %v1133
        %v1138 = vmul.f32 %v1122, %v1134
        %v1139 = vld [vmem:[#allocation11] sm:$0xff]
        %v1140 = vld [vmem:[#allocation11 + $0x8] sm:$0xff]
        %v1141 = vld [vmem:[#allocation11 + $0x10] sm:$0xff]
        %v1142 = vld [vmem:[#allocation11 + $0x18] sm:$0xff]
        %v1143 = vld [vmem:[#allocation11 + $0x20] sm:$0xff]
        %v1144 = vld [vmem:[#allocation11 + $0x28] sm:$0xff]
        %v1145 = vld [vmem:[#allocation11 + $0x30] sm:$0xff]
        %v1146 = vld [vmem:[#allocation11 + $0x38] sm:$0xff]
        %v1147 = vld [vmem:[#allocation11 + $0x40] sm:$0xff]
        %v1148 = vld [vmem:[#allocation11 + $0x48] sm:$0xff]
        %v1149 = vld [vmem:[#allocation11 + $0x50] sm:$0xff]
        %v1150 = vld [vmem:[#allocation11 + $0x58] sm:$0xff]
        %v1151 = vld [vmem:[#allocation11 + $0x60] sm:$0xff]
        %v1152 = vld [vmem:[#allocation11 + $0x68] sm:$0xff]
        %v1153 = vld [vmem:[#allocation11 + $0x70] sm:$0xff]
        %v1154 = vld [vmem:[#allocation11 + $0x78] sm:$0xff]
        %v1155 = vld [vmem:[#allocation11 + $0x80] sm:$0xff]
        %v1156 = vld [vmem:[#allocation11 + $0x88] sm:$0xff]
        %v1157 = vld [vmem:[#allocation11 + $0x90] sm:$0xff]
        %v1158 = vld [vmem:[#allocation11 + $0x98] sm:$0xff]
        %v1159 = vld [vmem:[#allocation11 + $0xa0] sm:$0xff]
        %v1160 = vld [vmem:[#allocation11 + $0xa8] sm:$0xff]
        %v1161 = vld [vmem:[#allocation11 + $0xb0] sm:$0xff]
        %v1162 = vld [vmem:[#allocation11 + $0xb8] sm:$0xff]
        %v1163 = vld [vmem:[#allocation11 + $0xc0] sm:$0xff]
        %v1164 = vld [vmem:[#allocation11 + $0xc8] sm:$0xff]
        %v1165 = vld [vmem:[#allocation11 + $0xd0] sm:$0xff]
        %v1166 = vld [vmem:[#allocation11 + $0xd8] sm:$0xff]
        %v1167 = vld [vmem:[#allocation11 + $0xe0] sm:$0xff]
        %v1168 = vld [vmem:[#allocation11 + $0xe8] sm:$0xff]
        %v1169 = vld [vmem:[#allocation11 + $0xf0] sm:$0xff]
        %v1170 = vld [vmem:[#allocation11 + $0xf8] sm:$0xff]
        %v1171 = vld [vmem:[#allocation11 + $0x100] sm:$0xff]
        %v1172 = vld [vmem:[#allocation11 + $0x108] sm:$0xff]
        %v1173 = vld [vmem:[#allocation11 + $0x110] sm:$0xff]
        %v1174 = vld [vmem:[#allocation11 + $0x118] sm:$0xff]
        %v1175 = vld [vmem:[#allocation11 + $0x120] sm:$0xff]
        %v1176 = vld [vmem:[#allocation11 + $0x128] sm:$0xff]
        %v1177 = vld [vmem:[#allocation11 + $0x130] sm:$0xff]
        %v1178 = vld [vmem:[#allocation11 + $0x138] sm:$0xff]
        %v1179 = vld [vmem:[#allocation11 + $0x140] sm:$0xff]
        %v1180 = vld [vmem:[#allocation11 + $0x148] sm:$0xff]
        %v1181 = vld [vmem:[#allocation11 + $0x150] sm:$0xff]
        %v1182 = vld [vmem:[#allocation11 + $0x158] sm:$0xff]
        %v1183 = vld [vmem:[#allocation11 + $0x160] sm:$0xff]
        %v1184 = vld [vmem:[#allocation11 + $0x168] sm:$0xff]
        %v1185 = vld [vmem:[#allocation11 + $0x170] sm:$0xff]
        %v1186 = vld [vmem:[#allocation11 + $0x178] sm:$0xff]
        %v1187 = vld [vmem:[#allocation11 + $0x180] sm:$0xff]
        %v1188 = vld [vmem:[#allocation11 + $0x188] sm:$0xff]
        %v1189 = vld [vmem:[#allocation11 + $0x190] sm:$0xff]
        %v1190 = vld [vmem:[#allocation11 + $0x198] sm:$0xff]
        %v1191 = vld [vmem:[#allocation11 + $0x1a0] sm:$0xff]
        %v1192 = vld [vmem:[#allocation11 + $0x1a8] sm:$0xff]
        %v1193 = vld [vmem:[#allocation11 + $0x1b0] sm:$0xff]
        %v1194 = vld [vmem:[#allocation11 + $0x1b8] sm:$0xff]
        %v1195 = vld [vmem:[#allocation11 + $0x1c0] sm:$0xff]
        %v1196 = vld [vmem:[#allocation11 + $0x1c8] sm:$0xff]
        %v1197 = vld [vmem:[#allocation11 + $0x1d0] sm:$0xff]
        %v1198 = vld [vmem:[#allocation11 + $0x1d8] sm:$0xff]
        %v1199 = vld [vmem:[#allocation11 + $0x1e0] sm:$0xff]
        %v1200 = vld [vmem:[#allocation11 + $0x1e8] sm:$0xff]
        %v1201 = vld [vmem:[#allocation11 + $0x1f0] sm:$0xff]
        %v1202 = vld [vmem:[#allocation11 + $0x1f8] sm:$0xff]
        %v1203 = vld [vmem:[#allocation11 + $0x200] sm:$0xff]
        %v1204 = vld [vmem:[#allocation11 + $0x208] sm:$0xff]
        %v1205 = vld [vmem:[#allocation11 + $0x210] sm:$0xff]
        %v1206 = vld [vmem:[#allocation11 + $0x218] sm:$0xff]
        %v1207 = vld [vmem:[#allocation11 + $0x220] sm:$0xff]
        %v1208 = vld [vmem:[#allocation11 + $0x228] sm:$0xff]
        %v1209 = vld [vmem:[#allocation11 + $0x230] sm:$0xff]
        %v1210 = vld [vmem:[#allocation11 + $0x238] sm:$0xff]
        %v1211 = vld [vmem:[#allocation11 + $0x240] sm:$0xff]
        %v1212 = vld [vmem:[#allocation11 + $0x248] sm:$0xff]
        %v1213 = vld [vmem:[#allocation11 + $0x250] sm:$0xff]
        %v1214 = vld [vmem:[#allocation11 + $0x258] sm:$0xff]
        %v1215 = vld [vmem:[#allocation11 + $0x260] sm:$0xff]
        %v1216 = vld [vmem:[#allocation11 + $0x268] sm:$0xff]
        %v1217 = vld [vmem:[#allocation11 + $0x270] sm:$0xff]
        %v1218 = vld [vmem:[#allocation11 + $0x278] sm:$0xff]
        %v1219 = vld [vmem:[#allocation11 + $0x280] sm:$0xff]
        %v1220 = vld [vmem:[#allocation11 + $0x288] sm:$0xff]
        %v1221 = vld [vmem:[#allocation11 + $0x290] sm:$0xff]
        %v1222 = vld [vmem:[#allocation11 + $0x298] sm:$0xff]
        %v1223 = vld [vmem:[#allocation11 + $0x2a0] sm:$0xff]
        %v1224 = vld [vmem:[#allocation11 + $0x2a8] sm:$0xff]
        %v1225 = vld [vmem:[#allocation11 + $0x2b0] sm:$0xff]
        %v1226 = vld [vmem:[#allocation11 + $0x2b8] sm:$0xff]
        %v1227 = vld [vmem:[#allocation11 + $0x2c0] sm:$0xff]
        %v1228 = vld [vmem:[#allocation11 + $0x2c8] sm:$0xff]
        %v1229 = vld [vmem:[#allocation11 + $0x2d0] sm:$0xff]
        %v1230 = vld [vmem:[#allocation11 + $0x2d8] sm:$0xff]
        %v1231 = vld [vmem:[#allocation11 + $0x2e0] sm:$0xff]
        %v1232 = vld [vmem:[#allocation11 + $0x2e8] sm:$0xff]
        %v1233 = vld [vmem:[#allocation11 + $0x2f0] sm:$0xff]
        %v1234 = vld [vmem:[#allocation11 + $0x2f8] sm:$0xff]
        %v1235 = vld [vmem:[#allocation11 + $0x300] sm:$0xff]
        %v1236 = vld [vmem:[#allocation11 + $0x308] sm:$0xff]
        %v1237 = vld [vmem:[#allocation11 + $0x310] sm:$0xff]
        %v1238 = vld [vmem:[#allocation11 + $0x318] sm:$0xff]
        %v1239 = vld [vmem:[#allocation11 + $0x320] sm:$0xff]
        %v1240 = vld [vmem:[#allocation11 + $0x328] sm:$0xff]
        %v1241 = vld [vmem:[#allocation11 + $0x330] sm:$0xff]
        %v1242 = vld [vmem:[#allocation11 + $0x338] sm:$0xff]
        %v1243 = vld [vmem:[#allocation11 + $0x340] sm:$0xff]
        %v1244 = vld [vmem:[#allocation11 + $0x348] sm:$0xff]
        %v1245 = vld [vmem:[#allocation11 + $0x350] sm:$0xff]
        %v1246 = vld [vmem:[#allocation11 + $0x358] sm:$0xff]
        %v1247 = vld [vmem:[#allocation11 + $0x360] sm:$0xff]
        %v1248 = vld [vmem:[#allocation11 + $0x368] sm:$0xff]
        %v1249 = vld [vmem:[#allocation11 + $0x370] sm:$0xff]
        %v1250 = vld [vmem:[#allocation11 + $0x378] sm:$0xff]
        %v1251 = vld [vmem:[#allocation11 + $0x380] sm:$0xff]
        %v1252 = vld [vmem:[#allocation11 + $0x388] sm:$0xff]
        %v1253 = vld [vmem:[#allocation11 + $0x390] sm:$0xff]
        %v1254 = vld [vmem:[#allocation11 + $0x398] sm:$0xff]
        %v1255 = vld [vmem:[#allocation11 + $0x3a0] sm:$0xff]
        %v1256 = vld [vmem:[#allocation11 + $0x3a8] sm:$0xff]
        %v1257 = vld [vmem:[#allocation11 + $0x3b0] sm:$0xff]
        %v1258 = vld [vmem:[#allocation11 + $0x3b8] sm:$0xff]
        %v1259 = vld [vmem:[#allocation11 + $0x3c0] sm:$0xff]
        %v1260 = vld [vmem:[#allocation11 + $0x3c8] sm:$0xff]
        %v1261 = vld [vmem:[#allocation11 + $0x3d0] sm:$0xff]
        %v1262 = vld [vmem:[#allocation11 + $0x3d8] sm:$0xff]
        %v1263 = vld [vmem:[#allocation11 + $0x3e0] sm:$0xff]
        %v1264 = vld [vmem:[#allocation11 + $0x3e8] sm:$0xff]
        %v1265 = vld [vmem:[#allocation11 + $0x3f0] sm:$0xff]
        %v1266 = vld [vmem:[#allocation11 + $0x3f8] sm:$0xff]
        %v1267 = vld [vmem:[%s10] sm:$0xf]
        %v1269 = vlaneseq
        %v1270 = vshrl.u32 %v1269, 7
        %v1271 = vsub.s32 0, %v1270
        %v1272 = vrot.slane %v1267, %v1271
        %v1273 = vlaneseq
        %v1274 = vshrl.u32 %v1273, 7
        %v1275 = vsub.s32 1, %v1274
        %v1276 = vrot.slane %v1267, %v1275
        %v1277 = vlaneseq
        %v1278 = vshrl.u32 %v1277, 7
        %v1279 = vsub.s32 2, %v1278
        %v1280 = vrot.slane %v1267, %v1279
        %v1281 = vlaneseq
        %v1282 = vshrl.u32 %v1281, 7
        %v1283 = vsub.s32 3, %v1282
        %v1284 = vrot.slane %v1267, %v1283
        %1289 = vmatprep.subr.mxu0 %v1200
        %1290 = vmatpush1.msra.mxu0 %v1199
        %1291 = vmatprep.subr.mxu0 %v1196
        %1292 = vmatpush1.msra.mxu0 %v1195
        %1293 = vmatprep.subr.mxu0 %v1192
        %1294 = vmatpush1.msra.mxu0 %v1191
        %1295 = vmatprep.subr.mxu0 %v1188
        %1296 = vmatpush1.msra.mxu0 %v1187
        %1297 = vmatprep.subr.mxu0 %v1184
        %1298 = vmatpush1.msra.mxu0 %v1183
        %1299 = vmatprep.subr.mxu0 %v1180
        %1300 = vmatpush1.msra.mxu0 %v1179
        %1301 = vmatprep.subr.mxu0 %v1176
        %1302 = vmatpush1.msra.mxu0 %v1175
        %1303 = vmatprep.subr.mxu0 %v1172
        %1304 = vmatpush1.msra.mxu0 %v1171
        %1305 = vmatprep.subr.mxu0 %v1168
        %1306 = vmatpush1.msra.mxu0 %v1167
        %1307 = vmatprep.subr.mxu0 %v1164
        %1308 = vmatpush1.msra.mxu0 %v1163
        %1309 = vmatprep.subr.mxu0 %v1160
        %1310 = vmatpush1.msra.mxu0 %v1159
        %1311 = vmatprep.subr.mxu0 %v1156
        %1312 = vmatpush1.msra.mxu0 %v1155
        %1313 = vmatprep.subr.mxu0 %v1152
        %1314 = vmatpush1.msra.mxu0 %v1151
        %1315 = vmatprep.subr.mxu0 %v1148
        %1316 = vmatpush1.msra.mxu0 %v1147
        %1317 = vmatprep.subr.mxu0 %v1144
        %1318 = vmatpush1.msra.mxu0 %v1143
        %1319 = vmatprep.subr.mxu0 %v1140
        %1320 = vmatpush1.msra.mxu0 %v1139
        %1321 = vmatprep.subr.mxu0 %v1264
        %1322 = vmatpush2.msra.mxu0 %v1263
        %1323 = vmatprep.subr.mxu0 %v1260
        %1324 = vmatpush2.msra.mxu0 %v1259
        %1325 = vmatprep.subr.mxu0 %v1256
        %1326 = vmatpush2.msra.mxu0 %v1255
        %1327 = vmatprep.subr.mxu0 %v1252
        %1328 = vmatpush2.msra.mxu0 %v1251
        %1329 = vmatprep.subr.mxu0 %v1248
        %1330 = vmatpush2.msra.mxu0 %v1247
        %1331 = vmatprep.subr.mxu0 %v1244
        %1332 = vmatpush2.msra.mxu0 %v1243
        %1333 = vmatprep.subr.mxu0 %v1240
        %1334 = vmatpush2.msra.mxu0 %v1239
        %1335 = vmatprep.subr.mxu0 %v1236
        %1336 = vmatpush2.msra.mxu0 %v1235
        %1337 = vmatprep.subr.mxu0 %v1232
        %1338 = vmatpush2.msra.mxu0 %v1231
        %1339 = vmatprep.subr.mxu0 %v1228
        %1340 = vmatpush2.msra.mxu0 %v1227
        %1341 = vmatprep.subr.mxu0 %v1224
        %1342 = vmatpush2.msra.mxu0 %v1223
        %1343 = vmatprep.subr.mxu0 %v1220
        %1344 = vmatpush2.msra.mxu0 %v1219
        %1345 = vmatprep.subr.mxu0 %v1216
        %1346 = vmatpush2.msra.mxu0 %v1215
        %1347 = vmatprep.subr.mxu0 %v1212
        %1348 = vmatpush2.msra.mxu0 %v1211
        %1349 = vmatprep.subr.mxu0 %v1208
        %1350 = vmatpush2.msra.mxu0 %v1207
        %1351 = vmatprep.subr.mxu0 %v1204
        %1352 = vmatpush2.msra.mxu0 %v1203
        %1353 = vmatprep.mubr.f32.mxu0 %v1136
        %1354 = vmatmul.mubr.f32.gmra.mxu0 %v1135
        %v1355 = vpop.f32.mrf.mxu0
        %v1356 = vadd.f32 %v1272, %v1355
        %v1357 = vpop.f32.mrf.mxu0
        %v1358 = vadd.f32 %v1276, %v1357
        %1359 = vmatprep.mubr.f32.mxu0 %v1138
        %1360 = vmatmul.mubr.f32.gmra.mxu0 %v1137
        %v1361 = vpop.f32.mrf.mxu0
        %v1362 = vadd.f32 %v1272, %v1361
        %v1363 = vpop.f32.mrf.mxu0
        %v1364 = vadd.f32 %v1276, %v1363
        %1365 = vdwg.mxu0
        %1366 = vmatprep.subr.mxu0 %v1202
        %1367 = vmatpush1.msra.mxu0 %v1201
        %1368 = vmatprep.subr.mxu0 %v1198
        %1369 = vmatpush1.msra.mxu0 %v1197
        %1370 = vmatprep.subr.mxu0 %v1194
        %1371 = vmatpush1.msra.mxu0 %v1193
        %1372 = vmatprep.subr.mxu0 %v1190
        %1373 = vmatpush1.msra.mxu0 %v1189
        %1374 = vmatprep.subr.mxu0 %v1186
        %1375 = vmatpush1.msra.mxu0 %v1185
        %1376 = vmatprep.subr.mxu0 %v1182
        %1377 = vmatpush1.msra.mxu0 %v1181
        %1378 = vmatprep.subr.mxu0 %v1178
        %1379 = vmatpush1.msra.mxu0 %v1177
        %1380 = vmatprep.subr.mxu0 %v1174
        %1381 = vmatpush1.msra.mxu0 %v1173
        %1382 = vmatprep.subr.mxu0 %v1170
        %1383 = vmatpush1.msra.mxu0 %v1169
        %1384 = vmatprep.subr.mxu0 %v1166
        %1385 = vmatpush1.msra.mxu0 %v1165
        %1386 = vmatprep.subr.mxu0 %v1162
        %1387 = vmatpush1.msra.mxu0 %v1161
        %1388 = vmatprep.subr.mxu0 %v1158
        %1389 = vmatpush1.msra.mxu0 %v1157
        %1390 = vmatprep.subr.mxu0 %v1154
        %1391 = vmatpush1.msra.mxu0 %v1153
        %1392 = vmatprep.subr.mxu0 %v1150
        %1393 = vmatpush1.msra.mxu0 %v1149
        %1394 = vmatprep.subr.mxu0 %v1146
        %1395 = vmatpush1.msra.mxu0 %v1145
        %1396 = vmatprep.subr.mxu0 %v1142
        %1397 = vmatpush1.msra.mxu0 %v1141
        %1398 = vmatprep.subr.mxu0 %v1266
        %1399 = vmatpush2.msra.mxu0 %v1265
        %1400 = vmatprep.subr.mxu0 %v1262
        %1401 = vmatpush2.msra.mxu0 %v1261
        %1402 = vmatprep.subr.mxu0 %v1258
        %1403 = vmatpush2.msra.mxu0 %v1257
        %1404 = vmatprep.subr.mxu0 %v1254
        %1405 = vmatpush2.msra.mxu0 %v1253
        %1406 = vmatprep.subr.mxu0 %v1250
        %1407 = vmatpush2.msra.mxu0 %v1249
        %1408 = vmatprep.subr.mxu0 %v1246
        %1409 = vmatpush2.msra.mxu0 %v1245
        %1410 = vmatprep.subr.mxu0 %v1242
        %1411 = vmatpush2.msra.mxu0 %v1241
        %1412 = vmatprep.subr.mxu0 %v1238
        %1413 = vmatpush2.msra.mxu0 %v1237
        %1414 = vmatprep.subr.mxu0 %v1234
        %1415 = vmatpush2.msra.mxu0 %v1233
        %1416 = vmatprep.subr.mxu0 %v1230
        %1417 = vmatpush2.msra.mxu0 %v1229
        %1418 = vmatprep.subr.mxu0 %v1226
        %1419 = vmatpush2.msra.mxu0 %v1225
        %1420 = vmatprep.subr.mxu0 %v1222
        %1421 = vmatpush2.msra.mxu0 %v1221
        %1422 = vmatprep.subr.mxu0 %v1218
        %1423 = vmatpush2.msra.mxu0 %v1217
        %1424 = vmatprep.subr.mxu0 %v1214
        %1425 = vmatpush2.msra.mxu0 %v1213
        %1426 = vmatprep.subr.mxu0 %v1210
        %1427 = vmatpush2.msra.mxu0 %v1209
        %1428 = vmatprep.subr.mxu0 %v1206
        %1429 = vmatpush2.msra.mxu0 %v1205
        %1430 = vmatprep.mubr.f32.mxu0 %v1136
        %1431 = vmatmul.mubr.f32.gmra.mxu0 %v1135
        %v1432 = vpop.f32.mrf.mxu0
        %v1433 = vadd.f32 %v1280, %v1432
        %v1434 = vpop.f32.mrf.mxu0
        %v1435 = vadd.f32 %v1284, %v1434
        %1436 = vmatprep.mubr.f32.mxu0 %v1138
        %1437 = vmatmul.mubr.f32.gmra.mxu0 %v1137
        %v1438 = vpop.f32.mrf.mxu0
        %v1439 = vadd.f32 %v1280, %v1438
        %v1440 = vpop.f32.mrf.mxu0
        %v1441 = vadd.f32 %v1284, %v1440
        %1442 = vdwg.mxu0
        %v1443 = vld [vmem:[#allocation9] sm:$0xff]
        %v1444 = vld [vmem:[#allocation9 + $0x8] sm:$0xff]
        %v1445 = vld [vmem:[#allocation9 + $0x10] sm:$0xff]
        %v1446 = vld [vmem:[#allocation9 + $0x18] sm:$0xff]
        %v1447 = vld [vmem:[#allocation9 + $0x20] sm:$0xff]
        %v1448 = vld [vmem:[#allocation9 + $0x28] sm:$0xff]
        %v1449 = vld [vmem:[#allocation9 + $0x30] sm:$0xff]
        %v1450 = vld [vmem:[#allocation9 + $0x38] sm:$0xff]
        %v1451 = vld [vmem:[#allocation9 + $0x40] sm:$0xff]
        %v1452 = vld [vmem:[#allocation9 + $0x48] sm:$0xff]
        %v1453 = vld [vmem:[#allocation9 + $0x50] sm:$0xff]
        %v1454 = vld [vmem:[#allocation9 + $0x58] sm:$0xff]
        %v1455 = vld [vmem:[#allocation9 + $0x60] sm:$0xff]
        %v1456 = vld [vmem:[#allocation9 + $0x68] sm:$0xff]
        %v1457 = vld [vmem:[#allocation9 + $0x70] sm:$0xff]
        %v1458 = vld [vmem:[#allocation9 + $0x78] sm:$0xff]
        %v1459 = vld [vmem:[#allocation9 + $0x80] sm:$0xff]
        %v1460 = vld [vmem:[#allocation9 + $0x88] sm:$0xff]
        %v1461 = vld [vmem:[#allocation9 + $0x90] sm:$0xff]
        %v1462 = vld [vmem:[#allocation9 + $0x98] sm:$0xff]
        %v1463 = vld [vmem:[#allocation9 + $0xa0] sm:$0xff]
        %v1464 = vld [vmem:[#allocation9 + $0xa8] sm:$0xff]
        %v1465 = vld [vmem:[#allocation9 + $0xb0] sm:$0xff]
        %v1466 = vld [vmem:[#allocation9 + $0xb8] sm:$0xff]
        %v1467 = vld [vmem:[#allocation9 + $0xc0] sm:$0xff]
        %v1468 = vld [vmem:[#allocation9 + $0xc8] sm:$0xff]
        %v1469 = vld [vmem:[#allocation9 + $0xd0] sm:$0xff]
        %v1470 = vld [vmem:[#allocation9 + $0xd8] sm:$0xff]
        %v1471 = vld [vmem:[#allocation9 + $0xe0] sm:$0xff]
        %v1472 = vld [vmem:[#allocation9 + $0xe8] sm:$0xff]
        %v1473 = vld [vmem:[#allocation9 + $0xf0] sm:$0xff]
        %v1474 = vld [vmem:[#allocation9 + $0xf8] sm:$0xff]
        %v1475 = vld [vmem:[#allocation9 + $0x100] sm:$0xff]
        %v1476 = vld [vmem:[#allocation9 + $0x108] sm:$0xff]
        %v1477 = vld [vmem:[#allocation9 + $0x110] sm:$0xff]
        %v1478 = vld [vmem:[#allocation9 + $0x118] sm:$0xff]
        %v1479 = vld [vmem:[#allocation9 + $0x120] sm:$0xff]
        %v1480 = vld [vmem:[#allocation9 + $0x128] sm:$0xff]
        %v1481 = vld [vmem:[#allocation9 + $0x130] sm:$0xff]
        %v1482 = vld [vmem:[#allocation9 + $0x138] sm:$0xff]
        %v1483 = vld [vmem:[#allocation9 + $0x140] sm:$0xff]
        %v1484 = vld [vmem:[#allocation9 + $0x148] sm:$0xff]
        %v1485 = vld [vmem:[#allocation9 + $0x150] sm:$0xff]
        %v1486 = vld [vmem:[#allocation9 + $0x158] sm:$0xff]
        %v1487 = vld [vmem:[#allocation9 + $0x160] sm:$0xff]
        %v1488 = vld [vmem:[#allocation9 + $0x168] sm:$0xff]
        %v1489 = vld [vmem:[#allocation9 + $0x170] sm:$0xff]
        %v1490 = vld [vmem:[#allocation9 + $0x178] sm:$0xff]
        %v1491 = vld [vmem:[#allocation9 + $0x180] sm:$0xff]
        %v1492 = vld [vmem:[#allocation9 + $0x188] sm:$0xff]
        %v1493 = vld [vmem:[#allocation9 + $0x190] sm:$0xff]
        %v1494 = vld [vmem:[#allocation9 + $0x198] sm:$0xff]
        %v1495 = vld [vmem:[#allocation9 + $0x1a0] sm:$0xff]
        %v1496 = vld [vmem:[#allocation9 + $0x1a8] sm:$0xff]
        %v1497 = vld [vmem:[#allocation9 + $0x1b0] sm:$0xff]
        %v1498 = vld [vmem:[#allocation9 + $0x1b8] sm:$0xff]
        %v1499 = vld [vmem:[#allocation9 + $0x1c0] sm:$0xff]
        %v1500 = vld [vmem:[#allocation9 + $0x1c8] sm:$0xff]
        %v1501 = vld [vmem:[#allocation9 + $0x1d0] sm:$0xff]
        %v1502 = vld [vmem:[#allocation9 + $0x1d8] sm:$0xff]
        %v1503 = vld [vmem:[#allocation9 + $0x1e0] sm:$0xff]
        %v1504 = vld [vmem:[#allocation9 + $0x1e8] sm:$0xff]
        %v1505 = vld [vmem:[#allocation9 + $0x1f0] sm:$0xff]
        %v1506 = vld [vmem:[#allocation9 + $0x1f8] sm:$0xff]
        %v1507 = vld [vmem:[#allocation9 + $0x200] sm:$0xff]
        %v1508 = vld [vmem:[#allocation9 + $0x208] sm:$0xff]
        %v1509 = vld [vmem:[#allocation9 + $0x210] sm:$0xff]
        %v1510 = vld [vmem:[#allocation9 + $0x218] sm:$0xff]
        %v1511 = vld [vmem:[#allocation9 + $0x220] sm:$0xff]
        %v1512 = vld [vmem:[#allocation9 + $0x228] sm:$0xff]
        %v1513 = vld [vmem:[#allocation9 + $0x230] sm:$0xff]
        %v1514 = vld [vmem:[#allocation9 + $0x238] sm:$0xff]
        %v1515 = vld [vmem:[#allocation9 + $0x240] sm:$0xff]
        %v1516 = vld [vmem:[#allocation9 + $0x248] sm:$0xff]
        %v1517 = vld [vmem:[#allocation9 + $0x250] sm:$0xff]
        %v1518 = vld [vmem:[#allocation9 + $0x258] sm:$0xff]
        %v1519 = vld [vmem:[#allocation9 + $0x260] sm:$0xff]
        %v1520 = vld [vmem:[#allocation9 + $0x268] sm:$0xff]
        %v1521 = vld [vmem:[#allocation9 + $0x270] sm:$0xff]
        %v1522 = vld [vmem:[#allocation9 + $0x278] sm:$0xff]
        %v1523 = vld [vmem:[#allocation9 + $0x280] sm:$0xff]
        %v1524 = vld [vmem:[#allocation9 + $0x288] sm:$0xff]
        %v1525 = vld [vmem:[#allocation9 + $0x290] sm:$0xff]
        %v1526 = vld [vmem:[#allocation9 + $0x298] sm:$0xff]
        %v1527 = vld [vmem:[#allocation9 + $0x2a0] sm:$0xff]
        %v1528 = vld [vmem:[#allocation9 + $0x2a8] sm:$0xff]
        %v1529 = vld [vmem:[#allocation9 + $0x2b0] sm:$0xff]
        %v1530 = vld [vmem:[#allocation9 + $0x2b8] sm:$0xff]
        %v1531 = vld [vmem:[#allocation9 + $0x2c0] sm:$0xff]
        %v1532 = vld [vmem:[#allocation9 + $0x2c8] sm:$0xff]
        %v1533 = vld [vmem:[#allocation9 + $0x2d0] sm:$0xff]
        %v1534 = vld [vmem:[#allocation9 + $0x2d8] sm:$0xff]
        %v1535 = vld [vmem:[#allocation9 + $0x2e0] sm:$0xff]
        %v1536 = vld [vmem:[#allocation9 + $0x2e8] sm:$0xff]
        %v1537 = vld [vmem:[#allocation9 + $0x2f0] sm:$0xff]
        %v1538 = vld [vmem:[#allocation9 + $0x2f8] sm:$0xff]
        %v1539 = vld [vmem:[#allocation9 + $0x300] sm:$0xff]
        %v1540 = vld [vmem:[#allocation9 + $0x308] sm:$0xff]
        %v1541 = vld [vmem:[#allocation9 + $0x310] sm:$0xff]
        %v1542 = vld [vmem:[#allocation9 + $0x318] sm:$0xff]
        %v1543 = vld [vmem:[#allocation9 + $0x320] sm:$0xff]
        %v1544 = vld [vmem:[#allocation9 + $0x328] sm:$0xff]
        %v1545 = vld [vmem:[#allocation9 + $0x330] sm:$0xff]
        %v1546 = vld [vmem:[#allocation9 + $0x338] sm:$0xff]
        %v1547 = vld [vmem:[#allocation9 + $0x340] sm:$0xff]
        %v1548 = vld [vmem:[#allocation9 + $0x348] sm:$0xff]
        %v1549 = vld [vmem:[#allocation9 + $0x350] sm:$0xff]
        %v1550 = vld [vmem:[#allocation9 + $0x358] sm:$0xff]
        %v1551 = vld [vmem:[#allocation9 + $0x360] sm:$0xff]
        %v1552 = vld [vmem:[#allocation9 + $0x368] sm:$0xff]
        %v1553 = vld [vmem:[#allocation9 + $0x370] sm:$0xff]
        %v1554 = vld [vmem:[#allocation9 + $0x378] sm:$0xff]
        %v1555 = vld [vmem:[#allocation9 + $0x380] sm:$0xff]
        %v1556 = vld [vmem:[#allocation9 + $0x388] sm:$0xff]
        %v1557 = vld [vmem:[#allocation9 + $0x390] sm:$0xff]
        %v1558 = vld [vmem:[#allocation9 + $0x398] sm:$0xff]
        %v1559 = vld [vmem:[#allocation9 + $0x3a0] sm:$0xff]
        %v1560 = vld [vmem:[#allocation9 + $0x3a8] sm:$0xff]
        %v1561 = vld [vmem:[#allocation9 + $0x3b0] sm:$0xff]
        %v1562 = vld [vmem:[#allocation9 + $0x3b8] sm:$0xff]
        %v1563 = vld [vmem:[#allocation9 + $0x3c0] sm:$0xff]
        %v1564 = vld [vmem:[#allocation9 + $0x3c8] sm:$0xff]
        %v1565 = vld [vmem:[#allocation9 + $0x3d0] sm:$0xff]
        %v1566 = vld [vmem:[#allocation9 + $0x3d8] sm:$0xff]
        %v1567 = vld [vmem:[#allocation9 + $0x3e0] sm:$0xff]
        %v1568 = vld [vmem:[#allocation9 + $0x3e8] sm:$0xff]
        %v1569 = vld [vmem:[#allocation9 + $0x3f0] sm:$0xff]
        %v1570 = vld [vmem:[#allocation9 + $0x3f8] sm:$0xff]
        %v1571 = vld [vmem:[%s6] sm:$0xf]
        %v1573 = vlaneseq
        %v1574 = vshrl.u32 %v1573, 7
        %v1575 = vsub.s32 0, %v1574
        %v1576 = vrot.slane %v1571, %v1575
        %v1577 = vlaneseq
        %v1578 = vshrl.u32 %v1577, 7
        %v1579 = vsub.s32 1, %v1578
        %v1580 = vrot.slane %v1571, %v1579
        %v1581 = vlaneseq
        %v1582 = vshrl.u32 %v1581, 7
        %v1583 = vsub.s32 2, %v1582
        %v1584 = vrot.slane %v1571, %v1583
        %v1585 = vlaneseq
        %v1586 = vshrl.u32 %v1585, 7
        %v1587 = vsub.s32 3, %v1586
        %v1588 = vrot.slane %v1571, %v1587
        %1593 = vmatprep.subr.mxu0 %v1504
        %1594 = vmatpush1.msra.mxu0 %v1503
        %1595 = vmatprep.subr.mxu0 %v1500
        %1596 = vmatpush1.msra.mxu0 %v1499
        %1597 = vmatprep.subr.mxu0 %v1496
        %1598 = vmatpush1.msra.mxu0 %v1495
        %1599 = vmatprep.subr.mxu0 %v1492
        %1600 = vmatpush1.msra.mxu0 %v1491
        %1601 = vmatprep.subr.mxu0 %v1488
        %1602 = vmatpush1.msra.mxu0 %v1487
        %1603 = vmatprep.subr.mxu0 %v1484
        %1604 = vmatpush1.msra.mxu0 %v1483
        %1605 = vmatprep.subr.mxu0 %v1480
        %1606 = vmatpush1.msra.mxu0 %v1479
        %1607 = vmatprep.subr.mxu0 %v1476
        %1608 = vmatpush1.msra.mxu0 %v1475
        %1609 = vmatprep.subr.mxu0 %v1472
        %1610 = vmatpush1.msra.mxu0 %v1471
        %1611 = vmatprep.subr.mxu0 %v1468
        %1612 = vmatpush1.msra.mxu0 %v1467
        %1613 = vmatprep.subr.mxu0 %v1464
        %1614 = vmatpush1.msra.mxu0 %v1463
        %1615 = vmatprep.subr.mxu0 %v1460
        %1616 = vmatpush1.msra.mxu0 %v1459
        %1617 = vmatprep.subr.mxu0 %v1456
        %1618 = vmatpush1.msra.mxu0 %v1455
        %1619 = vmatprep.subr.mxu0 %v1452
        %1620 = vmatpush1.msra.mxu0 %v1451
        %1621 = vmatprep.subr.mxu0 %v1448
        %1622 = vmatpush1.msra.mxu0 %v1447
        %1623 = vmatprep.subr.mxu0 %v1444
        %1624 = vmatpush1.msra.mxu0 %v1443
        %1625 = vmatprep.subr.mxu0 %v1568
        %1626 = vmatpush2.msra.mxu0 %v1567
        %1627 = vmatprep.subr.mxu0 %v1564
        %1628 = vmatpush2.msra.mxu0 %v1563
        %1629 = vmatprep.subr.mxu0 %v1560
        %1630 = vmatpush2.msra.mxu0 %v1559
        %1631 = vmatprep.subr.mxu0 %v1556
        %1632 = vmatpush2.msra.mxu0 %v1555
        %1633 = vmatprep.subr.mxu0 %v1552
        %1634 = vmatpush2.msra.mxu0 %v1551
        %1635 = vmatprep.subr.mxu0 %v1548
        %1636 = vmatpush2.msra.mxu0 %v1547
        %1637 = vmatprep.subr.mxu0 %v1544
        %1638 = vmatpush2.msra.mxu0 %v1543
        %1639 = vmatprep.subr.mxu0 %v1540
        %1640 = vmatpush2.msra.mxu0 %v1539
        %1641 = vmatprep.subr.mxu0 %v1536
        %1642 = vmatpush2.msra.mxu0 %v1535
        %1643 = vmatprep.subr.mxu0 %v1532
        %1644 = vmatpush2.msra.mxu0 %v1531
        %1645 = vmatprep.subr.mxu0 %v1528
        %1646 = vmatpush2.msra.mxu0 %v1527
        %1647 = vmatprep.subr.mxu0 %v1524
        %1648 = vmatpush2.msra.mxu0 %v1523
        %1649 = vmatprep.subr.mxu0 %v1520
        %1650 = vmatpush2.msra.mxu0 %v1519
        %1651 = vmatprep.subr.mxu0 %v1516
        %1652 = vmatpush2.msra.mxu0 %v1515
        %1653 = vmatprep.subr.mxu0 %v1512
        %1654 = vmatpush2.msra.mxu0 %v1511
        %1655 = vmatprep.subr.mxu0 %v1508
        %1656 = vmatpush2.msra.mxu0 %v1507
        %1657 = vmatprep.mubr.f32.mxu0 %v1136
        %1658 = vmatmul.mubr.f32.gmra.mxu0 %v1135
        %v1659 = vpop.f32.mrf.mxu0
        %v1660 = vadd.f32 %v1576, %v1659
        %v1661 = vpop.f32.mrf.mxu0
        %v1662 = vadd.f32 %v1580, %v1661
        %1663 = vmatprep.mubr.f32.mxu0 %v1138
        %1664 = vmatmul.mubr.f32.gmra.mxu0 %v1137
        %v1665 = vpop.f32.mrf.mxu0
        %v1666 = vadd.f32 %v1576, %v1665
        %v1667 = vpop.f32.mrf.mxu0
        %v1668 = vadd.f32 %v1580, %v1667
        %1669 = vdwg.mxu0
        %1670 = vmatprep.subr.mxu0 %v1506
        %1671 = vmatpush1.msra.mxu0 %v1505
        %1672 = vmatprep.subr.mxu0 %v1502
        %1673 = vmatpush1.msra.mxu0 %v1501
        %1674 = vmatprep.subr.mxu0 %v1498
        %1675 = vmatpush1.msra.mxu0 %v1497
        %1676 = vmatprep.subr.mxu0 %v1494
        %1677 = vmatpush1.msra.mxu0 %v1493
        %1678 = vmatprep.subr.mxu0 %v1490
        %1679 = vmatpush1.msra.mxu0 %v1489
        %1680 = vmatprep.subr.mxu0 %v1486
        %1681 = vmatpush1.msra.mxu0 %v1485
        %1682 = vmatprep.subr.mxu0 %v1482
        %1683 = vmatpush1.msra.mxu0 %v1481
        %1684 = vmatprep.subr.mxu0 %v1478
        %1685 = vmatpush1.msra.mxu0 %v1477
        %1686 = vmatprep.subr.mxu0 %v1474
        %1687 = vmatpush1.msra.mxu0 %v1473
        %1688 = vmatprep.subr.mxu0 %v1470
        %1689 = vmatpush1.msra.mxu0 %v1469
        %1690 = vmatprep.subr.mxu0 %v1466
        %1691 = vmatpush1.msra.mxu0 %v1465
        %1692 = vmatprep.subr.mxu0 %v1462
        %1693 = vmatpush1.msra.mxu0 %v1461
        %1694 = vmatprep.subr.mxu0 %v1458
        %1695 = vmatpush1.msra.mxu0 %v1457
        %1696 = vmatprep.subr.mxu0 %v1454
        %1697 = vmatpush1.msra.mxu0 %v1453
        %1698 = vmatprep.subr.mxu0 %v1450
        %1699 = vmatpush1.msra.mxu0 %v1449
        %1700 = vmatprep.subr.mxu0 %v1446
        %1701 = vmatpush1.msra.mxu0 %v1445
        %1702 = vmatprep.subr.mxu0 %v1570
        %1703 = vmatpush2.msra.mxu0 %v1569
        %1704 = vmatprep.subr.mxu0 %v1566
        %1705 = vmatpush2.msra.mxu0 %v1565
        %1706 = vmatprep.subr.mxu0 %v1562
        %1707 = vmatpush2.msra.mxu0 %v1561
        %1708 = vmatprep.subr.mxu0 %v1558
        %1709 = vmatpush2.msra.mxu0 %v1557
        %1710 = vmatprep.subr.mxu0 %v1554
        %1711 = vmatpush2.msra.mxu0 %v1553
        %1712 = vmatprep.subr.mxu0 %v1550
        %1713 = vmatpush2.msra.mxu0 %v1549
        %1714 = vmatprep.subr.mxu0 %v1546
        %1715 = vmatpush2.msra.mxu0 %v1545
        %1716 = vmatprep.subr.mxu0 %v1542
        %1717 = vmatpush2.msra.mxu0 %v1541
        %1718 = vmatprep.subr.mxu0 %v1538
        %1719 = vmatpush2.msra.mxu0 %v1537
        %1720 = vmatprep.subr.mxu0 %v1534
        %1721 = vmatpush2.msra.mxu0 %v1533
        %1722 = vmatprep.subr.mxu0 %v1530
        %1723 = vmatpush2.msra.mxu0 %v1529
        %1724 = vmatprep.subr.mxu0 %v1526
        %1725 = vmatpush2.msra.mxu0 %v1525
        %1726 = vmatprep.subr.mxu0 %v1522
        %1727 = vmatpush2.msra.mxu0 %v1521
        %1728 = vmatprep.subr.mxu0 %v1518
        %1729 = vmatpush2.msra.mxu0 %v1517
        %1730 = vmatprep.subr.mxu0 %v1514
        %1731 = vmatpush2.msra.mxu0 %v1513
        %1732 = vmatprep.subr.mxu0 %v1510
        %1733 = vmatpush2.msra.mxu0 %v1509
        %1734 = vmatprep.mubr.f32.mxu0 %v1136
        %1735 = vmatmul.mubr.f32.gmra.mxu0 %v1135
        %v1736 = vpop.f32.mrf.mxu0
        %v1737 = vadd.f32 %v1584, %v1736
        %v1738 = vpop.f32.mrf.mxu0
        %v1739 = vadd.f32 %v1588, %v1738
        %1740 = vmatprep.mubr.f32.mxu0 %v1138
        %1741 = vmatmul.mubr.f32.gmra.mxu0 %v1137
        %v1742 = vpop.f32.mrf.mxu0
        %v1743 = vadd.f32 %v1584, %v1742
        %v1744 = vpop.f32.mrf.mxu0
        %v1745 = vadd.f32 %v1588, %v1744
        %1746 = vdwg.mxu0
        %v1747 = vld [vmem:[%s7] sm:$0xf]
        %v1748 = vld [vmem:[%s8] sm:$0xf]
        %v1749 = vadd.f32 %v1660, %v1662
        %v1750 = vadd.f32 %v1749, %v1737
        %v1751 = vadd.f32 %v1750, %v1739
        %1752 = vadd.xlane.f32.xlu0 %v1751
        %v1753 = vpop.xlane.xlu0 %1752
        %v1754 = vadd.f32 %v1666, %v1668
        %v1755 = vadd.f32 %v1754, %v1743
        %v1756 = vadd.f32 %v1755, %v1745
        %1757 = vadd.xlane.f32.xlu0 %v1756
        %v1758 = vpop.xlane.xlu0 %1757
        %v1759 = vrcp.pop 512.0
        %v1760 = vmul.f32 %v1753, %v1759
        %v1761 = vmul.f32 %v1758, %v1759
        %v1762 = vsub.f32 %v1660, %v1760
        %v1763 = vsub.f32 %v1662, %v1760
        %v1764 = vsub.f32 %v1737, %v1760
        %v1765 = vsub.f32 %v1739, %v1760
        %v1766 = vsub.f32 %v1666, %v1761
        %v1767 = vsub.f32 %v1668, %v1761
        %v1768 = vsub.f32 %v1743, %v1761
        %v1769 = vsub.f32 %v1745, %v1761
        %v1770 = vmul.f32 %v1762, %v1762
        %v1771 = vmul.f32 %v1763, %v1763
        %v1772 = vmul.f32 %v1764, %v1764
        %v1773 = vmul.f32 %v1765, %v1765
        %v1774 = vmul.f32 %v1766, %v1766
        %v1775 = vmul.f32 %v1767, %v1767
        %v1776 = vmul.f32 %v1768, %v1768
        %v1777 = vmul.f32 %v1769, %v1769
        %v1778 = vadd.f32 %v1770, %v1771
        %v1779 = vadd.f32 %v1778, %v1772
        %v1780 = vadd.f32 %v1779, %v1773
        %1781 = vadd.xlane.f32.xlu0 %v1780
        %v1782 = vpop.xlane.xlu0 %1781
        %v1783 = vadd.f32 %v1774, %v1775
        %v1784 = vadd.f32 %v1783, %v1776
        %v1785 = vadd.f32 %v1784, %v1777
        %1786 = vadd.xlane.f32.xlu0 %v1785
        %v1787 = vpop.xlane.xlu0 %1786
        %v1788 = vmul.f32 %v1782, %v1759
        %v1789 = vmul.f32 %v1787, %v1759
        %v1790 = vadd.f32 %v1788, 1e-05
        %v1791 = vadd.f32 %v1789, 1e-05
        %v1792 = vrsqrt.pop %v1790
        %v1793 = vrsqrt.pop %v1791
        %v1794 = vmul.f32 %v1762, %v1792
        %v1795 = vmul.f32 %v1763, %v1792
        %v1796 = vmul.f32 %v1764, %v1792
        %v1797 = vmul.f32 %v1765, %v1792
        %v1798 = vmul.f32 %v1766, %v1793
        %v1799 = vmul.f32 %v1767, %v1793
        %v1800 = vmul.f32 %v1768, %v1793
        %v1801 = vmul.f32 %v1769, %v1793
        %v1803 = vlaneseq
        %v1804 = vshrl.u32 %v1803, 7
        %v1805 = vsub.s32 0, %v1804
        %v1806 = vrot.slane %v1747, %v1805
        %v1807 = vlaneseq
        %v1808 = vshrl.u32 %v1807, 7
        %v1809 = vsub.s32 1, %v1808
        %v1810 = vrot.slane %v1747, %v1809
        %v1811 = vlaneseq
        %v1812 = vshrl.u32 %v1811, 7
        %v1813 = vsub.s32 2, %v1812
        %v1814 = vrot.slane %v1747, %v1813
        %v1815 = vlaneseq
        %v1816 = vshrl.u32 %v1815, 7
        %v1817 = vsub.s32 3, %v1816
        %v1818 = vrot.slane %v1747, %v1817
        %v1823 = vmul.f32 %v1794, %v1806
        %v1824 = vmul.f32 %v1795, %v1810
        %v1825 = vmul.f32 %v1796, %v1814
        %v1826 = vmul.f32 %v1797, %v1818
        %v1827 = vmul.f32 %v1798, %v1806
        %v1828 = vmul.f32 %v1799, %v1810
        %v1829 = vmul.f32 %v1800, %v1814
        %v1830 = vmul.f32 %v1801, %v1818
        %v1832 = vlaneseq
        %v1833 = vshrl.u32 %v1832, 7
        %v1834 = vsub.s32 0, %v1833
        %v1835 = vrot.slane %v1748, %v1834
        %v1836 = vlaneseq
        %v1837 = vshrl.u32 %v1836, 7
        %v1838 = vsub.s32 1, %v1837
        %v1839 = vrot.slane %v1748, %v1838
        %v1840 = vlaneseq
        %v1841 = vshrl.u32 %v1840, 7
        %v1842 = vsub.s32 2, %v1841
        %v1843 = vrot.slane %v1748, %v1842
        %v1844 = vlaneseq
        %v1845 = vshrl.u32 %v1844, 7
        %v1846 = vsub.s32 3, %v1845
        %v1847 = vrot.slane %v1748, %v1846
        %v1852 = vadd.f32 %v1823, %v1835
        %v1853 = vadd.f32 %v1824, %v1839
        %v1854 = vadd.f32 %v1825, %v1843
        %v1855 = vadd.f32 %v1826, %v1847
        %v1856 = vadd.f32 %v1827, %v1835
        %v1857 = vadd.f32 %v1828, %v1839
        %v1858 = vadd.f32 %v1829, %v1843
        %v1859 = vadd.f32 %v1830, %v1847
        %v1860 = vmul.f32 %v1852, 0.5
        %v1861 = vmul.f32 %v1853, 0.5
        %v1862 = vmul.f32 %v1854, 0.5
        %v1863 = vmul.f32 %v1855, 0.5
        %v1864 = vmul.f32 %v1856, 0.5
        %v1865 = vmul.f32 %v1857, 0.5
        %v1866 = vmul.f32 %v1858, 0.5
        %v1867 = vmul.f32 %v1859, 0.5
        %v1868 = vmul.f32 %v1852, 0.70710677
        %v1869 = vmul.f32 %v1853, 0.70710677
        %v1870 = vmul.f32 %v1854, 0.70710677
        %v1871 = vmul.f32 %v1855, 0.70710677
        %v1872 = vmul.f32 %v1856, 0.70710677
        %v1873 = vmul.f32 %v1857, 0.70710677
        %v1874 = vmul.f32 %v1858, 0.70710677
        %v1875 = vmul.f32 %v1859, 0.70710677
        %v1876 = verf.f32.pop %v1868
        %v1877 = verf.f32.pop %v1869
        %v1878 = verf.f32.pop %v1870
        %v1879 = verf.f32.pop %v1871
        %v1880 = verf.f32.pop %v1872
        %v1881 = verf.f32.pop %v1873
        %v1882 = verf.f32.pop %v1874
        %v1883 = verf.f32.pop %v1875
        %v1884 = vadd.f32 %v1876, 1.0
        %v1885 = vadd.f32 %v1877, 1.0
        %v1886 = vadd.f32 %v1878, 1.0
        %v1887 = vadd.f32 %v1879, 1.0
        %v1888 = vadd.f32 %v1880, 1.0
        %v1889 = vadd.f32 %v1881, 1.0
        %v1890 = vadd.f32 %v1882, 1.0
        %v1891 = vadd.f32 %v1883, 1.0
        %v1892 = vmul.f32 %v1860, %v1884
        %v1893 = vmul.f32 %v1861, %v1885
        %v1894 = vmul.f32 %v1862, %v1886
        %v1895 = vmul.f32 %v1863, %v1887
        %v1896 = vmul.f32 %v1864, %v1888
        %v1897 = vmul.f32 %v1865, %v1889
        %v1898 = vmul.f32 %v1866, %v1890
        %v1899 = vmul.f32 %v1867, %v1891
        %v1900 = vadd.f32 %v1892, %v1356
        %v1901 = vadd.f32 %v1893, %v1358
        %v1902 = vadd.f32 %v1894, %v1433
        %v1903 = vadd.f32 %v1895, %v1435
        %v1904 = vadd.f32 %v1896, %v1362
        %v1905 = vadd.f32 %v1897, %v1364
        %v1906 = vadd.f32 %v1898, %v1439
        %v1907 = vadd.f32 %v1899, %v1441
        %v1908 = vld [vmem:[#allocation12] sm:$0xff]
        %v1909 = vld [vmem:[#allocation12 + $0x8] sm:$0xff]
        %v1910 = vld [vmem:[#allocation12 + $0x10] sm:$0xff]
        %v1911 = vld [vmem:[#allocation12 + $0x18] sm:$0xff]
        %v1912 = vld [vmem:[#allocation12 + $0x20] sm:$0xff]
        %v1913 = vld [vmem:[#allocation12 + $0x28] sm:$0xff]
        %v1914 = vld [vmem:[#allocation12 + $0x30] sm:$0xff]
        %v1915 = vld [vmem:[#allocation12 + $0x38] sm:$0xff]
        %v1916 = vld [vmem:[#allocation12 + $0x40] sm:$0xff]
        %v1917 = vld [vmem:[#allocation12 + $0x48] sm:$0xff]
        %v1918 = vld [vmem:[#allocation12 + $0x50] sm:$0xff]
        %v1919 = vld [vmem:[#allocation12 + $0x58] sm:$0xff]
        %v1920 = vld [vmem:[#allocation12 + $0x60] sm:$0xff]
        %v1921 = vld [vmem:[#allocation12 + $0x68] sm:$0xff]
        %v1922 = vld [vmem:[#allocation12 + $0x70] sm:$0xff]
        %v1923 = vld [vmem:[#allocation12 + $0x78] sm:$0xff]
        %v1924 = vld [vmem:[#allocation12 + $0x80] sm:$0xff]
        %v1925 = vld [vmem:[#allocation12 + $0x88] sm:$0xff]
        %v1926 = vld [vmem:[#allocation12 + $0x90] sm:$0xff]
        %v1927 = vld [vmem:[#allocation12 + $0x98] sm:$0xff]
        %v1928 = vld [vmem:[#allocation12 + $0xa0] sm:$0xff]
        %v1929 = vld [vmem:[#allocation12 + $0xa8] sm:$0xff]
        %v1930 = vld [vmem:[#allocation12 + $0xb0] sm:$0xff]
        %v1931 = vld [vmem:[#allocation12 + $0xb8] sm:$0xff]
        %v1932 = vld [vmem:[#allocation12 + $0xc0] sm:$0xff]
        %v1933 = vld [vmem:[#allocation12 + $0xc8] sm:$0xff]
        %v1934 = vld [vmem:[#allocation12 + $0xd0] sm:$0xff]
        %v1935 = vld [vmem:[#allocation12 + $0xd8] sm:$0xff]
        %v1936 = vld [vmem:[#allocation12 + $0xe0] sm:$0xff]
        %v1937 = vld [vmem:[#allocation12 + $0xe8] sm:$0xff]
        %v1938 = vld [vmem:[#allocation12 + $0xf0] sm:$0xff]
        %v1939 = vld [vmem:[#allocation12 + $0xf8] sm:$0xff]
        %v1940 = vld [vmem:[#allocation12 + $0x100] sm:$0xff]
        %v1941 = vld [vmem:[#allocation12 + $0x108] sm:$0xff]
        %v1942 = vld [vmem:[#allocation12 + $0x110] sm:$0xff]
        %v1943 = vld [vmem:[#allocation12 + $0x118] sm:$0xff]
        %v1944 = vld [vmem:[#allocation12 + $0x120] sm:$0xff]
        %v1945 = vld [vmem:[#allocation12 + $0x128] sm:$0xff]
        %v1946 = vld [vmem:[#allocation12 + $0x130] sm:$0xff]
        %v1947 = vld [vmem:[#allocation12 + $0x138] sm:$0xff]
        %v1948 = vld [vmem:[#allocation12 + $0x140] sm:$0xff]
        %v1949 = vld [vmem:[#allocation12 + $0x148] sm:$0xff]
        %v1950 = vld [vmem:[#allocation12 + $0x150] sm:$0xff]
        %v1951 = vld [vmem:[#allocation12 + $0x158] sm:$0xff]
        %v1952 = vld [vmem:[#allocation12 + $0x160] sm:$0xff]
        %v1953 = vld [vmem:[#allocation12 + $0x168] sm:$0xff]
        %v1954 = vld [vmem:[#allocation12 + $0x170] sm:$0xff]
        %v1955 = vld [vmem:[#allocation12 + $0x178] sm:$0xff]
        %v1956 = vld [vmem:[#allocation12 + $0x180] sm:$0xff]
        %v1957 = vld [vmem:[#allocation12 + $0x188] sm:$0xff]
        %v1958 = vld [vmem:[#allocation12 + $0x190] sm:$0xff]
        %v1959 = vld [vmem:[#allocation12 + $0x198] sm:$0xff]
        %v1960 = vld [vmem:[#allocation12 + $0x1a0] sm:$0xff]
        %v1961 = vld [vmem:[#allocation12 + $0x1a8] sm:$0xff]
        %v1962 = vld [vmem:[#allocation12 + $0x1b0] sm:$0xff]
        %v1963 = vld [vmem:[#allocation12 + $0x1b8] sm:$0xff]
        %v1964 = vld [vmem:[#allocation12 + $0x1c0] sm:$0xff]
        %v1965 = vld [vmem:[#allocation12 + $0x1c8] sm:$0xff]
        %v1966 = vld [vmem:[#allocation12 + $0x1d0] sm:$0xff]
        %v1967 = vld [vmem:[#allocation12 + $0x1d8] sm:$0xff]
        %v1968 = vld [vmem:[#allocation12 + $0x1e0] sm:$0xff]
        %v1969 = vld [vmem:[#allocation12 + $0x1e8] sm:$0xff]
        %v1970 = vld [vmem:[#allocation12 + $0x1f0] sm:$0xff]
        %v1971 = vld [vmem:[#allocation12 + $0x1f8] sm:$0xff]
        %v1972 = vld [vmem:[%s12] sm:$0x1]
        %v1974 = vlaneseq
        %v1975 = vshrl.u32 %v1974, 7
        %v1976 = vsub.s32 0, %v1975
        %v1977 = vrot.slane %v1972, %v1976
        %1979 = vmatprep.subr.mxu0 0.0
        %1980 = vmatpush1.msra.mxu0 %v1923
        %1981 = vmatprep.subr.mxu0 0.0
        %1982 = vmatpush1.msra.mxu0 %v1922
        %1983 = vmatprep.subr.mxu0 0.0
        %1984 = vmatpush1.msra.mxu0 %v1921
        %1985 = vmatprep.subr.mxu0 0.0
        %1986 = vmatpush1.msra.mxu0 %v1920
        %1987 = vmatprep.subr.mxu0 0.0
        %1988 = vmatpush1.msra.mxu0 %v1919
        %1989 = vmatprep.subr.mxu0 0.0
        %1990 = vmatpush1.msra.mxu0 %v1918
        %1991 = vmatprep.subr.mxu0 0.0
        %1992 = vmatpush1.msra.mxu0 %v1917
        %1993 = vmatprep.subr.mxu0 0.0
        %1994 = vmatpush1.msra.mxu0 %v1916
        %1995 = vmatprep.subr.mxu0 0.0
        %1996 = vmatpush1.msra.mxu0 %v1915
        %1997 = vmatprep.subr.mxu0 0.0
        %1998 = vmatpush1.msra.mxu0 %v1914
        %1999 = vmatprep.subr.mxu0 0.0
        %2000 = vmatpush1.msra.mxu0 %v1913
        %2001 = vmatprep.subr.mxu0 0.0
        %2002 = vmatpush1.msra.mxu0 %v1912
        %2003 = vmatprep.subr.mxu0 0.0
        %2004 = vmatpush1.msra.mxu0 %v1911
        %2005 = vmatprep.subr.mxu0 0.0
        %2006 = vmatpush1.msra.mxu0 %v1910
        %2007 = vmatprep.subr.mxu0 0.0
        %2008 = vmatpush1.msra.mxu0 %v1909
        %2009 = vmatprep.subr.mxu0 0.0
        %2010 = vmatpush1.msra.mxu0 %v1908
        %2011 = vmatprep.subr.mxu0 0.0
        %2012 = vmatpush2.msra.mxu0 %v1939
        %2013 = vmatprep.subr.mxu0 0.0
        %2014 = vmatpush2.msra.mxu0 %v1938
        %2015 = vmatprep.subr.mxu0 0.0
        %2016 = vmatpush2.msra.mxu0 %v1937
        %2017 = vmatprep.subr.mxu0 0.0
        %2018 = vmatpush2.msra.mxu0 %v1936
        %2019 = vmatprep.subr.mxu0 0.0
        %2020 = vmatpush2.msra.mxu0 %v1935
        %2021 = vmatprep.subr.mxu0 0.0
        %2022 = vmatpush2.msra.mxu0 %v1934
        %2023 = vmatprep.subr.mxu0 0.0
        %2024 = vmatpush2.msra.mxu0 %v1933
        %2025 = vmatprep.subr.mxu0 0.0
        %2026 = vmatpush2.msra.mxu0 %v1932
        %2027 = vmatprep.subr.mxu0 0.0
        %2028 = vmatpush2.msra.mxu0 %v1931
        %2029 = vmatprep.subr.mxu0 0.0
        %2030 = vmatpush2.msra.mxu0 %v1930
        %2031 = vmatprep.subr.mxu0 0.0
        %2032 = vmatpush2.msra.mxu0 %v1929
        %2033 = vmatprep.subr.mxu0 0.0
        %2034 = vmatpush2.msra.mxu0 %v1928
        %2035 = vmatprep.subr.mxu0 0.0
        %2036 = vmatpush2.msra.mxu0 %v1927
        %2037 = vmatprep.subr.mxu0 0.0
        %2038 = vmatpush2.msra.mxu0 %v1926
        %2039 = vmatprep.subr.mxu0 0.0
        %2040 = vmatpush2.msra.mxu0 %v1925
        %2041 = vmatprep.subr.mxu0 0.0
        %2042 = vmatpush2.msra.mxu0 %v1924
        %2043 = vmatprep.mubr.f32.mxu0 %v1901
        %2044 = vmatmul.mubr.f32.gmra.mxu0 %v1900
        %v2045 = vpop.f32.mrf.mxu0
        %v2046 = vadd.f32 %v1977, %v2045
        %v2047 = vpop.f32.mrf.mxu0
        %2048 = vmatprep.mubr.f32.mxu0 %v1905
        %2049 = vmatmul.mubr.f32.gmra.mxu0 %v1904
        %v2050 = vpop.f32.mrf.mxu0
        %v2051 = vadd.f32 %v1977, %v2050
        %v2052 = vpop.f32.mrf.mxu0
        %2053 = vdwg.mxu0
        %2054 = vmatprep.subr.mxu0 0.0
        %2055 = vmatpush1.msra.mxu0 %v1955
        %2056 = vmatprep.subr.mxu0 0.0
        %2057 = vmatpush1.msra.mxu0 %v1954
        %2058 = vmatprep.subr.mxu0 0.0
        %2059 = vmatpush1.msra.mxu0 %v1953
        %2060 = vmatprep.subr.mxu0 0.0
        %2061 = vmatpush1.msra.mxu0 %v1952
        %2062 = vmatprep.subr.mxu0 0.0
        %2063 = vmatpush1.msra.mxu0 %v1951
        %2064 = vmatprep.subr.mxu0 0.0
        %2065 = vmatpush1.msra.mxu0 %v1950
        %2066 = vmatprep.subr.mxu0 0.0
        %2067 = vmatpush1.msra.mxu0 %v1949
        %2068 = vmatprep.subr.mxu0 0.0
        %2069 = vmatpush1.msra.mxu0 %v1948
        %2070 = vmatprep.subr.mxu0 0.0
        %2071 = vmatpush1.msra.mxu0 %v1947
        %2072 = vmatprep.subr.mxu0 0.0
        %2073 = vmatpush1.msra.mxu0 %v1946
        %2074 = vmatprep.subr.mxu0 0.0
        %2075 = vmatpush1.msra.mxu0 %v1945
        %2076 = vmatprep.subr.mxu0 0.0
        %2077 = vmatpush1.msra.mxu0 %v1944
        %2078 = vmatprep.subr.mxu0 0.0
        %2079 = vmatpush1.msra.mxu0 %v1943
        %2080 = vmatprep.subr.mxu0 0.0
        %2081 = vmatpush1.msra.mxu0 %v1942
        %2082 = vmatprep.subr.mxu0 0.0
        %2083 = vmatpush1.msra.mxu0 %v1941
        %2084 = vmatprep.subr.mxu0 0.0
        %2085 = vmatpush1.msra.mxu0 %v1940
        %2086 = vmatprep.subr.mxu0 0.0
        %2087 = vmatpush2.msra.mxu0 %v1971
        %2088 = vmatprep.subr.mxu0 0.0
        %2089 = vmatpush2.msra.mxu0 %v1970
        %2090 = vmatprep.subr.mxu0 0.0
        %2091 = vmatpush2.msra.mxu0 %v1969
        %2092 = vmatprep.subr.mxu0 0.0
        %2093 = vmatpush2.msra.mxu0 %v1968
        %2094 = vmatprep.subr.mxu0 0.0
        %2095 = vmatpush2.msra.mxu0 %v1967
        %2096 = vmatprep.subr.mxu0 0.0
        %2097 = vmatpush2.msra.mxu0 %v1966
        %2098 = vmatprep.subr.mxu0 0.0
        %2099 = vmatpush2.msra.mxu0 %v1965
        %2100 = vmatprep.subr.mxu0 0.0
        %2101 = vmatpush2.msra.mxu0 %v1964
        %2102 = vmatprep.subr.mxu0 0.0
        %2103 = vmatpush2.msra.mxu0 %v1963
        %2104 = vmatprep.subr.mxu0 0.0
        %2105 = vmatpush2.msra.mxu0 %v1962
        %2106 = vmatprep.subr.mxu0 0.0
        %2107 = vmatpush2.msra.mxu0 %v1961
        %2108 = vmatprep.subr.mxu0 0.0
        %2109 = vmatpush2.msra.mxu0 %v1960
        %2110 = vmatprep.subr.mxu0 0.0
        %2111 = vmatpush2.msra.mxu0 %v1959
        %2112 = vmatprep.subr.mxu0 0.0
        %2113 = vmatpush2.msra.mxu0 %v1958
        %2114 = vmatprep.subr.mxu0 0.0
        %2115 = vmatpush2.msra.mxu0 %v1957
        %2116 = vmatprep.subr.mxu0 0.0
        %2117 = vmatpush2.msra.mxu0 %v1956
        %2118 = vmatprep.mubr.f32.mxu0 %v1903
        %2119 = vmatmul.mubr.f32.gmra.mxu0 %v1902
        %v2120 = vpop.f32.mrf.mxu0
        %v2121 = vadd.f32 %v2046, %v2120
        %v2122 = vpop.f32.mrf.mxu0
        %2123 = vmatprep.mubr.f32.mxu0 %v1907
        %2124 = vmatmul.mubr.f32.gmra.mxu0 %v1906
        %v2125 = vpop.f32.mrf.mxu0
        %v2126 = vadd.f32 %v2051, %v2125
        %v2127 = vpop.f32.mrf.mxu0
        %2128 = vdwg.mxu0
        %v2129 = vld [vmem:[%s13] sm:$0x1]
        %v2130 = vld [vmem:[%s14] sm:$0x1]
        %2131 = vadd.xlane.f32.xlu0 %v2121
        %v2132 = vpop.xlane.xlu0 %2131
        %2133 = vadd.xlane.f32.xlu0 %v2126
        %v2134 = vpop.xlane.xlu0 %2133
        %v2135 = vrcp.pop 128.0
        %v2136 = vmul.f32 %v2132, %v2135
        %v2137 = vmul.f32 %v2134, %v2135
        %v2138 = vsub.f32 %v2121, %v2136
        %v2139 = vsub.f32 %v2126, %v2137
        %v2140 = vmul.f32 %v2138, %v2138
        %v2141 = vmul.f32 %v2139, %v2139
        %2142 = vadd.xlane.f32.xlu0 %v2140
        %v2143 = vpop.xlane.xlu0 %2142
        %2144 = vadd.xlane.f32.xlu0 %v2141
        %v2145 = vpop.xlane.xlu0 %2144
        %v2146 = vmul.f32 %v2143, %v2135
        %v2147 = vmul.f32 %v2145, %v2135
        %v2148 = vadd.f32 %v2146, 1e-05
        %v2149 = vadd.f32 %v2147, 1e-05
        %v2150 = vrsqrt.pop %v2148
        %v2151 = vrsqrt.pop %v2149
        %v2152 = vmul.f32 %v2138, %v2150
        %v2153 = vmul.f32 %v2139, %v2151
        %v2155 = vlaneseq
        %v2156 = vshrl.u32 %v2155, 7
        %v2157 = vsub.s32 0, %v2156
        %v2158 = vrot.slane %v2129, %v2157
        %v2160 = vmul.f32 %v2152, %v2158
        %v2161 = vmul.f32 %v2153, %v2158
        %v2163 = vlaneseq
        %v2164 = vshrl.u32 %v2163, 7
        %v2165 = vsub.s32 0, %v2164
        %v2166 = vrot.slane %v2130, %v2165
        %v2168 = vadd.f32 %v2160, %v2166
        %v2169 = vadd.f32 %v2161, %v2166
        %v2170 = vmul.f32 %v2168, 0.5
        %v2171 = vmul.f32 %v2169, 0.5
        %v2172 = vmul.f32 %v2168, 0.70710677
        %v2173 = vmul.f32 %v2169, 0.70710677
        %v2174 = verf.f32.pop %v2172
        %v2175 = verf.f32.pop %v2173
        %v2176 = vadd.f32 %v2174, 1.0
        %v2177 = vadd.f32 %v2175, 1.0
        %v2178 = vmul.f32 %v2170, %v2176
        %v2179 = vmul.f32 %v2171, %v2177
        %v2180 = vld [vmem:[%s15] sm:$0x1]
        %v2182 = vlaneseq
        %v2183 = vshrl.u32 %v2182, 7
        %v2184 = vsub.s32 0, %v2183
        %v2185 = vrot.slane %v2180, %v2184
        %v2187 = vmul.f32 %v2178, %v2185
        %v2188 = vmul.f32 %v2179, %v2185
        %2189 = vadd.xlane.f32.xlu0 %v2187
        %v2190 = vpop.xlane.xlu0 %2189
        %2191 = vadd.xlane.f32.xlu0 %v2188
        %v2192 = vpop.xlane.xlu0 %2191
        %v2193 = vld [vmem:[#allocation2] sm:$0x1]
        %v2195 = vlaneseq
        %v2196 = vshrl.u32 %v2195, 7
        %v2197 = vsub.s32 0, %v2196
        %v2198 = vrot.slane %v2193, %v2197
        %v2200 = vadd.f32 %v2190, %v2198
        %v2201 = vadd.f32 %v2192, %v2198
        %v2202 = vld [vmem:[#allocation14] sm:$0xff]
        %v2203 = vld [vmem:[#allocation14 + $0x8] sm:$0xff]
        %v2204 = vld [vmem:[#allocation14 + $0x10] sm:$0xff]
        %v2205 = vld [vmem:[#allocation14 + $0x18] sm:$0xff]
        %v2206 = vld [vmem:[#allocation14 + $0x20] sm:$0xff]
        %v2207 = vld [vmem:[#allocation14 + $0x28] sm:$0xff]
        %v2208 = vld [vmem:[#allocation14 + $0x30] sm:$0xff]
        %v2209 = vld [vmem:[#allocation14 + $0x38] sm:$0xff]
        %v2210 = vld [vmem:[#allocation14 + $0x40] sm:$0xff]
        %v2211 = vld [vmem:[#allocation14 + $0x48] sm:$0xff]
        %v2212 = vld [vmem:[#allocation14 + $0x50] sm:$0xff]
        %v2213 = vld [vmem:[#allocation14 + $0x58] sm:$0xff]
        %v2214 = vld [vmem:[#allocation14 + $0x60] sm:$0xff]
        %v2215 = vld [vmem:[#allocation14 + $0x68] sm:$0xff]
        %v2216 = vld [vmem:[#allocation14 + $0x70] sm:$0xff]
        %v2217 = vld [vmem:[#allocation14 + $0x78] sm:$0xff]
        %v2218 = vld [vmem:[#allocation14 + $0x80] sm:$0xff]
        %v2219 = vld [vmem:[#allocation14 + $0x88] sm:$0xff]
        %v2220 = vld [vmem:[#allocation14 + $0x90] sm:$0xff]
        %v2221 = vld [vmem:[#allocation14 + $0x98] sm:$0xff]
        %v2222 = vld [vmem:[#allocation14 + $0xa0] sm:$0xff]
        %v2223 = vld [vmem:[#allocation14 + $0xa8] sm:$0xff]
        %v2224 = vld [vmem:[#allocation14 + $0xb0] sm:$0xff]
        %v2225 = vld [vmem:[#allocation14 + $0xb8] sm:$0xff]
        %v2226 = vld [vmem:[#allocation14 + $0xc0] sm:$0xff]
        %v2227 = vld [vmem:[#allocation14 + $0xc8] sm:$0xff]
        %v2228 = vld [vmem:[#allocation14 + $0xd0] sm:$0xff]
        %v2229 = vld [vmem:[#allocation14 + $0xd8] sm:$0xff]
        %v2230 = vld [vmem:[#allocation14 + $0xe0] sm:$0xff]
        %v2231 = vld [vmem:[#allocation14 + $0xe8] sm:$0xff]
        %v2232 = vld [vmem:[#allocation14 + $0xf0] sm:$0xff]
        %v2233 = vld [vmem:[#allocation14 + $0xf8] sm:$0xff]
        %v2234 = vld [vmem:[#allocation14 + $0x100] sm:$0xff]
        %v2235 = vld [vmem:[#allocation14 + $0x108] sm:$0xff]
        %v2236 = vld [vmem:[#allocation14 + $0x110] sm:$0xff]
        %v2237 = vld [vmem:[#allocation14 + $0x118] sm:$0xff]
        %v2238 = vld [vmem:[#allocation14 + $0x120] sm:$0xff]
        %v2239 = vld [vmem:[#allocation14 + $0x128] sm:$0xff]
        %v2240 = vld [vmem:[#allocation14 + $0x130] sm:$0xff]
        %v2241 = vld [vmem:[#allocation14 + $0x138] sm:$0xff]
        %v2242 = vld [vmem:[#allocation14 + $0x140] sm:$0xff]
        %v2243 = vld [vmem:[#allocation14 + $0x148] sm:$0xff]
        %v2244 = vld [vmem:[#allocation14 + $0x150] sm:$0xff]
        %v2245 = vld [vmem:[#allocation14 + $0x158] sm:$0xff]
        %v2246 = vld [vmem:[#allocation14 + $0x160] sm:$0xff]
        %v2247 = vld [vmem:[#allocation14 + $0x168] sm:$0xff]
        %v2248 = vld [vmem:[#allocation14 + $0x170] sm:$0xff]
        %v2249 = vld [vmem:[#allocation14 + $0x178] sm:$0xff]
        %v2250 = vld [vmem:[#allocation14 + $0x180] sm:$0xff]
        %v2251 = vld [vmem:[#allocation14 + $0x188] sm:$0xff]
        %v2252 = vld [vmem:[#allocation14 + $0x190] sm:$0xff]
        %v2253 = vld [vmem:[#allocation14 + $0x198] sm:$0xff]
        %v2254 = vld [vmem:[#allocation14 + $0x1a0] sm:$0xff]
        %v2255 = vld [vmem:[#allocation14 + $0x1a8] sm:$0xff]
        %v2256 = vld [vmem:[#allocation14 + $0x1b0] sm:$0xff]
        %v2257 = vld [vmem:[#allocation14 + $0x1b8] sm:$0xff]
        %v2258 = vld [vmem:[#allocation14 + $0x1c0] sm:$0xff]
        %v2259 = vld [vmem:[#allocation14 + $0x1c8] sm:$0xff]
        %v2260 = vld [vmem:[#allocation14 + $0x1d0] sm:$0xff]
        %v2261 = vld [vmem:[#allocation14 + $0x1d8] sm:$0xff]
        %v2262 = vld [vmem:[#allocation14 + $0x1e0] sm:$0xff]
        %v2263 = vld [vmem:[#allocation14 + $0x1e8] sm:$0xff]
        %v2264 = vld [vmem:[#allocation14 + $0x1f0] sm:$0xff]
        %v2265 = vld [vmem:[#allocation14 + $0x1f8] sm:$0xff]
        %v2266 = vld [vmem:[#allocation14 + $0x200] sm:$0xff]
        %v2267 = vld [vmem:[#allocation14 + $0x208] sm:$0xff]
        %v2268 = vld [vmem:[#allocation14 + $0x210] sm:$0xff]
        %v2269 = vld [vmem:[#allocation14 + $0x218] sm:$0xff]
        %v2270 = vld [vmem:[#allocation14 + $0x220] sm:$0xff]
        %v2271 = vld [vmem:[#allocation14 + $0x228] sm:$0xff]
        %v2272 = vld [vmem:[#allocation14 + $0x230] sm:$0xff]
        %v2273 = vld [vmem:[#allocation14 + $0x238] sm:$0xff]
        %v2274 = vld [vmem:[#allocation14 + $0x240] sm:$0xff]
        %v2275 = vld [vmem:[#allocation14 + $0x248] sm:$0xff]
        %v2276 = vld [vmem:[#allocation14 + $0x250] sm:$0xff]
        %v2277 = vld [vmem:[#allocation14 + $0x258] sm:$0xff]
        %v2278 = vld [vmem:[#allocation14 + $0x260] sm:$0xff]
        %v2279 = vld [vmem:[#allocation14 + $0x268] sm:$0xff]
        %v2280 = vld [vmem:[#allocation14 + $0x270] sm:$0xff]
        %v2281 = vld [vmem:[#allocation14 + $0x278] sm:$0xff]
        %v2282 = vld [vmem:[#allocation14 + $0x280] sm:$0xff]
        %v2283 = vld [vmem:[#allocation14 + $0x288] sm:$0xff]
        %v2284 = vld [vmem:[#allocation14 + $0x290] sm:$0xff]
        %v2285 = vld [vmem:[#allocation14 + $0x298] sm:$0xff]
        %v2286 = vld [vmem:[#allocation14 + $0x2a0] sm:$0xff]
        %v2287 = vld [vmem:[#allocation14 + $0x2a8] sm:$0xff]
        %v2288 = vld [vmem:[#allocation14 + $0x2b0] sm:$0xff]
        %v2289 = vld [vmem:[#allocation14 + $0x2b8] sm:$0xff]
        %v2290 = vld [vmem:[#allocation14 + $0x2c0] sm:$0xff]
        %v2291 = vld [vmem:[#allocation14 + $0x2c8] sm:$0xff]
        %v2292 = vld [vmem:[#allocation14 + $0x2d0] sm:$0xff]
        %v2293 = vld [vmem:[#allocation14 + $0x2d8] sm:$0xff]
        %v2294 = vld [vmem:[#allocation14 + $0x2e0] sm:$0xff]
        %v2295 = vld [vmem:[#allocation14 + $0x2e8] sm:$0xff]
        %v2296 = vld [vmem:[#allocation14 + $0x2f0] sm:$0xff]
        %v2297 = vld [vmem:[#allocation14 + $0x2f8] sm:$0xff]
        %v2298 = vld [vmem:[#allocation14 + $0x300] sm:$0xff]
        %v2299 = vld [vmem:[#allocation14 + $0x308] sm:$0xff]
        %v2300 = vld [vmem:[#allocation14 + $0x310] sm:$0xff]
        %v2301 = vld [vmem:[#allocation14 + $0x318] sm:$0xff]
        %v2302 = vld [vmem:[#allocation14 + $0x320] sm:$0xff]
        %v2303 = vld [vmem:[#allocation14 + $0x328] sm:$0xff]
        %v2304 = vld [vmem:[#allocation14 + $0x330] sm:$0xff]
        %v2305 = vld [vmem:[#allocation14 + $0x338] sm:$0xff]
        %v2306 = vld [vmem:[#allocation14 + $0x340] sm:$0xff]
        %v2307 = vld [vmem:[#allocation14 + $0x348] sm:$0xff]
        %v2308 = vld [vmem:[#allocation14 + $0x350] sm:$0xff]
        %v2309 = vld [vmem:[#allocation14 + $0x358] sm:$0xff]
        %v2310 = vld [vmem:[#allocation14 + $0x360] sm:$0xff]
        %v2311 = vld [vmem:[#allocation14 + $0x368] sm:$0xff]
        %v2312 = vld [vmem:[#allocation14 + $0x370] sm:$0xff]
        %v2313 = vld [vmem:[#allocation14 + $0x378] sm:$0xff]
        %v2314 = vld [vmem:[#allocation14 + $0x380] sm:$0xff]
        %v2315 = vld [vmem:[#allocation14 + $0x388] sm:$0xff]
        %v2316 = vld [vmem:[#allocation14 + $0x390] sm:$0xff]
        %v2317 = vld [vmem:[#allocation14 + $0x398] sm:$0xff]
        %v2318 = vld [vmem:[#allocation14 + $0x3a0] sm:$0xff]
        %v2319 = vld [vmem:[#allocation14 + $0x3a8] sm:$0xff]
        %v2320 = vld [vmem:[#allocation14 + $0x3b0] sm:$0xff]
        %v2321 = vld [vmem:[#allocation14 + $0x3b8] sm:$0xff]
        %v2322 = vld [vmem:[#allocation14 + $0x3c0] sm:$0xff]
        %v2323 = vld [vmem:[#allocation14 + $0x3c8] sm:$0xff]
        %v2324 = vld [vmem:[#allocation14 + $0x3d0] sm:$0xff]
        %v2325 = vld [vmem:[#allocation14 + $0x3d8] sm:$0xff]
        %v2326 = vld [vmem:[#allocation14 + $0x3e0] sm:$0xff]
        %v2327 = vld [vmem:[#allocation14 + $0x3e8] sm:$0xff]
        %v2328 = vld [vmem:[#allocation14 + $0x3f0] sm:$0xff]
        %v2329 = vld [vmem:[#allocation14 + $0x3f8] sm:$0xff]
        %v2330 = vld [vmem:[#allocation14 + $0x400] sm:$0xff]
        %v2331 = vld [vmem:[#allocation14 + $0x408] sm:$0xff]
        %v2332 = vld [vmem:[#allocation14 + $0x410] sm:$0xff]
        %v2333 = vld [vmem:[#allocation14 + $0x418] sm:$0xff]
        %v2334 = vld [vmem:[#allocation14 + $0x420] sm:$0xff]
        %v2335 = vld [vmem:[#allocation14 + $0x428] sm:$0xff]
        %v2336 = vld [vmem:[#allocation14 + $0x430] sm:$0xff]
        %v2337 = vld [vmem:[#allocation14 + $0x438] sm:$0xff]
        %v2338 = vld [vmem:[#allocation14 + $0x440] sm:$0xff]
        %v2339 = vld [vmem:[#allocation14 + $0x448] sm:$0xff]
        %v2340 = vld [vmem:[#allocation14 + $0x450] sm:$0xff]
        %v2341 = vld [vmem:[#allocation14 + $0x458] sm:$0xff]
        %v2342 = vld [vmem:[#allocation14 + $0x460] sm:$0xff]
        %v2343 = vld [vmem:[#allocation14 + $0x468] sm:$0xff]
        %v2344 = vld [vmem:[#allocation14 + $0x470] sm:$0xff]
        %v2345 = vld [vmem:[#allocation14 + $0x478] sm:$0xff]
        %v2346 = vld [vmem:[#allocation14 + $0x480] sm:$0xff]
        %v2347 = vld [vmem:[#allocation14 + $0x488] sm:$0xff]
        %v2348 = vld [vmem:[#allocation14 + $0x490] sm:$0xff]
        %v2349 = vld [vmem:[#allocation14 + $0x498] sm:$0xff]
        %v2350 = vld [vmem:[#allocation14 + $0x4a0] sm:$0xff]
        %v2351 = vld [vmem:[#allocation14 + $0x4a8] sm:$0xff]
        %v2352 = vld [vmem:[#allocation14 + $0x4b0] sm:$0xff]
        %v2353 = vld [vmem:[#allocation14 + $0x4b8] sm:$0xff]
        %v2354 = vld [vmem:[#allocation14 + $0x4c0] sm:$0xff]
        %v2355 = vld [vmem:[#allocation14 + $0x4c8] sm:$0xff]
        %v2356 = vld [vmem:[#allocation14 + $0x4d0] sm:$0xff]
        %v2357 = vld [vmem:[#allocation14 + $0x4d8] sm:$0xff]
        %v2358 = vld [vmem:[#allocation14 + $0x4e0] sm:$0xff]
        %v2359 = vld [vmem:[#allocation14 + $0x4e8] sm:$0xff]
        %v2360 = vld [vmem:[#allocation14 + $0x4f0] sm:$0xff]
        %v2361 = vld [vmem:[#allocation14 + $0x4f8] sm:$0xff]
        %v2362 = vld [vmem:[#allocation14 + $0x500] sm:$0xff]
        %v2363 = vld [vmem:[#allocation14 + $0x508] sm:$0xff]
        %v2364 = vld [vmem:[#allocation14 + $0x510] sm:$0xff]
        %v2365 = vld [vmem:[#allocation14 + $0x518] sm:$0xff]
        %v2366 = vld [vmem:[#allocation14 + $0x520] sm:$0xff]
        %v2367 = vld [vmem:[#allocation14 + $0x528] sm:$0xff]
        %v2368 = vld [vmem:[#allocation14 + $0x530] sm:$0xff]
        %v2369 = vld [vmem:[#allocation14 + $0x538] sm:$0xff]
        %v2370 = vld [vmem:[#allocation14 + $0x540] sm:$0xff]
        %v2371 = vld [vmem:[#allocation14 + $0x548] sm:$0xff]
        %v2372 = vld [vmem:[#allocation14 + $0x550] sm:$0xff]
        %v2373 = vld [vmem:[#allocation14 + $0x558] sm:$0xff]
        %v2374 = vld [vmem:[#allocation14 + $0x560] sm:$0xff]
        %v2375 = vld [vmem:[#allocation14 + $0x568] sm:$0xff]
        %v2376 = vld [vmem:[#allocation14 + $0x570] sm:$0xff]
        %v2377 = vld [vmem:[#allocation14 + $0x578] sm:$0xff]
        %v2378 = vld [vmem:[#allocation14 + $0x580] sm:$0xff]
        %v2379 = vld [vmem:[#allocation14 + $0x588] sm:$0xff]
        %v2380 = vld [vmem:[#allocation14 + $0x590] sm:$0xff]
        %v2381 = vld [vmem:[#allocation14 + $0x598] sm:$0xff]
        %v2382 = vld [vmem:[#allocation14 + $0x5a0] sm:$0xff]
        %v2383 = vld [vmem:[#allocation14 + $0x5a8] sm:$0xff]
        %v2384 = vld [vmem:[#allocation14 + $0x5b0] sm:$0xff]
        %v2385 = vld [vmem:[#allocation14 + $0x5b8] sm:$0xff]
        %v2386 = vld [vmem:[#allocation14 + $0x5c0] sm:$0xff]
        %v2387 = vld [vmem:[#allocation14 + $0x5c8] sm:$0xff]
        %v2388 = vld [vmem:[#allocation14 + $0x5d0] sm:$0xff]
        %v2389 = vld [vmem:[#allocation14 + $0x5d8] sm:$0xff]
        %v2390 = vld [vmem:[#allocation14 + $0x5e0] sm:$0xff]
        %v2391 = vld [vmem:[#allocation14 + $0x5e8] sm:$0xff]
        %v2392 = vld [vmem:[#allocation14 + $0x5f0] sm:$0xff]
        %v2393 = vld [vmem:[#allocation14 + $0x5f8] sm:$0xff]
        %v2394 = vld [vmem:[#allocation14 + $0x600] sm:$0xff]
        %v2395 = vld [vmem:[#allocation14 + $0x608] sm:$0xff]
        %v2396 = vld [vmem:[#allocation14 + $0x610] sm:$0xff]
        %v2397 = vld [vmem:[#allocation14 + $0x618] sm:$0xff]
        %v2398 = vld [vmem:[#allocation14 + $0x620] sm:$0xff]
        %v2399 = vld [vmem:[#allocation14 + $0x628] sm:$0xff]
        %v2400 = vld [vmem:[#allocation14 + $0x630] sm:$0xff]
        %v2401 = vld [vmem:[#allocation14 + $0x638] sm:$0xff]
        %v2402 = vld [vmem:[#allocation14 + $0x640] sm:$0xff]
        %v2403 = vld [vmem:[#allocation14 + $0x648] sm:$0xff]
        %v2404 = vld [vmem:[#allocation14 + $0x650] sm:$0xff]
        %v2405 = vld [vmem:[#allocation14 + $0x658] sm:$0xff]
        %v2406 = vld [vmem:[#allocation14 + $0x660] sm:$0xff]
        %v2407 = vld [vmem:[#allocation14 + $0x668] sm:$0xff]
        %v2408 = vld [vmem:[#allocation14 + $0x670] sm:$0xff]
        %v2409 = vld [vmem:[#allocation14 + $0x678] sm:$0xff]
        %v2410 = vld [vmem:[#allocation14 + $0x680] sm:$0xff]
        %v2411 = vld [vmem:[#allocation14 + $0x688] sm:$0xff]
        %v2412 = vld [vmem:[#allocation14 + $0x690] sm:$0xff]
        %v2413 = vld [vmem:[#allocation14 + $0x698] sm:$0xff]
        %v2414 = vld [vmem:[#allocation14 + $0x6a0] sm:$0xff]
        %v2415 = vld [vmem:[#allocation14 + $0x6a8] sm:$0xff]
        %v2416 = vld [vmem:[#allocation14 + $0x6b0] sm:$0xff]
        %v2417 = vld [vmem:[#allocation14 + $0x6b8] sm:$0xff]
        %v2418 = vld [vmem:[#allocation14 + $0x6c0] sm:$0xff]
        %v2419 = vld [vmem:[#allocation14 + $0x6c8] sm:$0xff]
        %v2420 = vld [vmem:[#allocation14 + $0x6d0] sm:$0xff]
        %v2421 = vld [vmem:[#allocation14 + $0x6d8] sm:$0xff]
        %v2422 = vld [vmem:[#allocation14 + $0x6e0] sm:$0xff]
        %v2423 = vld [vmem:[#allocation14 + $0x6e8] sm:$0xff]
        %v2424 = vld [vmem:[#allocation14 + $0x6f0] sm:$0xff]
        %v2425 = vld [vmem:[#allocation14 + $0x6f8] sm:$0xff]
        %v2426 = vld [vmem:[#allocation14 + $0x700] sm:$0xff]
        %v2427 = vld [vmem:[#allocation14 + $0x708] sm:$0xff]
        %v2428 = vld [vmem:[#allocation14 + $0x710] sm:$0xff]
        %v2429 = vld [vmem:[#allocation14 + $0x718] sm:$0xff]
        %v2430 = vld [vmem:[#allocation14 + $0x720] sm:$0xff]
        %v2431 = vld [vmem:[#allocation14 + $0x728] sm:$0xff]
        %v2432 = vld [vmem:[#allocation14 + $0x730] sm:$0xff]
        %v2433 = vld [vmem:[#allocation14 + $0x738] sm:$0xff]
        %v2434 = vld [vmem:[#allocation14 + $0x740] sm:$0xff]
        %v2435 = vld [vmem:[#allocation14 + $0x748] sm:$0xff]
        %v2436 = vld [vmem:[#allocation14 + $0x750] sm:$0xff]
        %v2437 = vld [vmem:[#allocation14 + $0x758] sm:$0xff]
        %v2438 = vld [vmem:[#allocation14 + $0x760] sm:$0xff]
        %v2439 = vld [vmem:[#allocation14 + $0x768] sm:$0xff]
        %v2440 = vld [vmem:[#allocation14 + $0x770] sm:$0xff]
        %v2441 = vld [vmem:[#allocation14 + $0x778] sm:$0xff]
        %v2442 = vld [vmem:[#allocation14 + $0x780] sm:$0xff]
        %v2443 = vld [vmem:[#allocation14 + $0x788] sm:$0xff]
        %v2444 = vld [vmem:[#allocation14 + $0x790] sm:$0xff]
        %v2445 = vld [vmem:[#allocation14 + $0x798] sm:$0xff]
        %v2446 = vld [vmem:[#allocation14 + $0x7a0] sm:$0xff]
        %v2447 = vld [vmem:[#allocation14 + $0x7a8] sm:$0xff]
        %v2448 = vld [vmem:[#allocation14 + $0x7b0] sm:$0xff]
        %v2449 = vld [vmem:[#allocation14 + $0x7b8] sm:$0xff]
        %v2450 = vld [vmem:[#allocation14 + $0x7c0] sm:$0xff]
        %v2451 = vld [vmem:[#allocation14 + $0x7c8] sm:$0xff]
        %v2452 = vld [vmem:[#allocation14 + $0x7d0] sm:$0xff]
        %v2453 = vld [vmem:[#allocation14 + $0x7d8] sm:$0xff]
        %v2454 = vld [vmem:[#allocation14 + $0x7e0] sm:$0xff]
        %v2455 = vld [vmem:[#allocation14 + $0x7e8] sm:$0xff]
        %v2456 = vld [vmem:[#allocation14 + $0x7f0] sm:$0xff]
        %v2457 = vld [vmem:[#allocation14 + $0x7f8] sm:$0xff]
        %v2458 = vld [vmem:[%s18] sm:$0xf]
        %v2460 = vlaneseq
        %v2461 = vshrl.u32 %v2460, 7
        %v2462 = vsub.s32 0, %v2461
        %v2463 = vrot.slane %v2458, %v2462
        %v2464 = vlaneseq
        %v2465 = vshrl.u32 %v2464, 7
        %v2466 = vsub.s32 1, %v2465
        %v2467 = vrot.slane %v2458, %v2466
        %v2468 = vlaneseq
        %v2469 = vshrl.u32 %v2468, 7
        %v2470 = vsub.s32 2, %v2469
        %v2471 = vrot.slane %v2458, %v2470
        %v2472 = vlaneseq
        %v2473 = vshrl.u32 %v2472, 7
        %v2474 = vsub.s32 3, %v2473
        %v2475 = vrot.slane %v2458, %v2474
        %2480 = vmatprep.subr.mxu0 %v2263
        %2481 = vmatpush1.msra.mxu0 %v2262
        %2482 = vmatprep.subr.mxu0 %v2259
        %2483 = vmatpush1.msra.mxu0 %v2258
        %2484 = vmatprep.subr.mxu0 %v2255
        %2485 = vmatpush1.msra.mxu0 %v2254
        %2486 = vmatprep.subr.mxu0 %v2251
        %2487 = vmatpush1.msra.mxu0 %v2250
        %2488 = vmatprep.subr.mxu0 %v2247
        %2489 = vmatpush1.msra.mxu0 %v2246
        %2490 = vmatprep.subr.mxu0 %v2243
        %2491 = vmatpush1.msra.mxu0 %v2242
        %2492 = vmatprep.subr.mxu0 %v2239
        %2493 = vmatpush1.msra.mxu0 %v2238
        %2494 = vmatprep.subr.mxu0 %v2235
        %2495 = vmatpush1.msra.mxu0 %v2234
        %2496 = vmatprep.subr.mxu0 %v2231
        %2497 = vmatpush1.msra.mxu0 %v2230
        %2498 = vmatprep.subr.mxu0 %v2227
        %2499 = vmatpush1.msra.mxu0 %v2226
        %2500 = vmatprep.subr.mxu0 %v2223
        %2501 = vmatpush1.msra.mxu0 %v2222
        %2502 = vmatprep.subr.mxu0 %v2219
        %2503 = vmatpush1.msra.mxu0 %v2218
        %2504 = vmatprep.subr.mxu0 %v2215
        %2505 = vmatpush1.msra.mxu0 %v2214
        %2506 = vmatprep.subr.mxu0 %v2211
        %2507 = vmatpush1.msra.mxu0 %v2210
        %2508 = vmatprep.subr.mxu0 %v2207
        %2509 = vmatpush1.msra.mxu0 %v2206
        %2510 = vmatprep.subr.mxu0 %v2203
        %2511 = vmatpush1.msra.mxu0 %v2202
        %2512 = vmatprep.subr.mxu0 %v2327
        %2513 = vmatpush2.msra.mxu0 %v2326
        %2514 = vmatprep.subr.mxu0 %v2323
        %2515 = vmatpush2.msra.mxu0 %v2322
        %2516 = vmatprep.subr.mxu0 %v2319
        %2517 = vmatpush2.msra.mxu0 %v2318
        %2518 = vmatprep.subr.mxu0 %v2315
        %2519 = vmatpush2.msra.mxu0 %v2314
        %2520 = vmatprep.subr.mxu0 %v2311
        %2521 = vmatpush2.msra.mxu0 %v2310
        %2522 = vmatprep.subr.mxu0 %v2307
        %2523 = vmatpush2.msra.mxu0 %v2306
        %2524 = vmatprep.subr.mxu0 %v2303
        %2525 = vmatpush2.msra.mxu0 %v2302
        %2526 = vmatprep.subr.mxu0 %v2299
        %2527 = vmatpush2.msra.mxu0 %v2298
        %2528 = vmatprep.subr.mxu0 %v2295
        %2529 = vmatpush2.msra.mxu0 %v2294
        %2530 = vmatprep.subr.mxu0 %v2291
        %2531 = vmatpush2.msra.mxu0 %v2290
        %2532 = vmatprep.subr.mxu0 %v2287
        %2533 = vmatpush2.msra.mxu0 %v2286
        %2534 = vmatprep.subr.mxu0 %v2283
        %2535 = vmatpush2.msra.mxu0 %v2282
        %2536 = vmatprep.subr.mxu0 %v2279
        %2537 = vmatpush2.msra.mxu0 %v2278
        %2538 = vmatprep.subr.mxu0 %v2275
        %2539 = vmatpush2.msra.mxu0 %v2274
        %2540 = vmatprep.subr.mxu0 %v2271
        %2541 = vmatpush2.msra.mxu0 %v2270
        %2542 = vmatprep.subr.mxu0 %v2267
        %2543 = vmatpush2.msra.mxu0 %v2266
        %2544 = vmatprep.mubr.f32.mxu0 %v1901
        %2545 = vmatmul.mubr.f32.gmra.mxu0 %v1900
        %v2546 = vpop.f32.mrf.mxu0
        %v2547 = vadd.f32 %v2463, %v2546
        %v2548 = vpop.f32.mrf.mxu0
        %v2549 = vadd.f32 %v2467, %v2548
        %2550 = vmatprep.mubr.f32.mxu0 %v1905
        %2551 = vmatmul.mubr.f32.gmra.mxu0 %v1904
        %v2552 = vpop.f32.mrf.mxu0
        %v2553 = vadd.f32 %v2463, %v2552
        %v2554 = vpop.f32.mrf.mxu0
        %v2555 = vadd.f32 %v2467, %v2554
        %2556 = vdwg.mxu0
        %2557 = vmatprep.subr.mxu0 %v2391
        %2558 = vmatpush1.msra.mxu0 %v2390
        %2559 = vmatprep.subr.mxu0 %v2387
        %2560 = vmatpush1.msra.mxu0 %v2386
        %2561 = vmatprep.subr.mxu0 %v2383
        %2562 = vmatpush1.msra.mxu0 %v2382
        %2563 = vmatprep.subr.mxu0 %v2379
        %2564 = vmatpush1.msra.mxu0 %v2378
        %2565 = vmatprep.subr.mxu0 %v2375
        %2566 = vmatpush1.msra.mxu0 %v2374
        %2567 = vmatprep.subr.mxu0 %v2371
        %2568 = vmatpush1.msra.mxu0 %v2370
        %2569 = vmatprep.subr.mxu0 %v2367
        %2570 = vmatpush1.msra.mxu0 %v2366
        %2571 = vmatprep.subr.mxu0 %v2363
        %2572 = vmatpush1.msra.mxu0 %v2362
        %2573 = vmatprep.subr.mxu0 %v2359
        %2574 = vmatpush1.msra.mxu0 %v2358
        %2575 = vmatprep.subr.mxu0 %v2355
        %2576 = vmatpush1.msra.mxu0 %v2354
        %2577 = vmatprep.subr.mxu0 %v2351
        %2578 = vmatpush1.msra.mxu0 %v2350
        %2579 = vmatprep.subr.mxu0 %v2347
        %2580 = vmatpush1.msra.mxu0 %v2346
        %2581 = vmatprep.subr.mxu0 %v2343
        %2582 = vmatpush1.msra.mxu0 %v2342
        %2583 = vmatprep.subr.mxu0 %v2339
        %2584 = vmatpush1.msra.mxu0 %v2338
        %2585 = vmatprep.subr.mxu0 %v2335
        %2586 = vmatpush1.msra.mxu0 %v2334
        %2587 = vmatprep.subr.mxu0 %v2331
        %2588 = vmatpush1.msra.mxu0 %v2330
        %2589 = vmatprep.subr.mxu0 %v2455
        %2590 = vmatpush2.msra.mxu0 %v2454
        %2591 = vmatprep.subr.mxu0 %v2451
        %2592 = vmatpush2.msra.mxu0 %v2450
        %2593 = vmatprep.subr.mxu0 %v2447
        %2594 = vmatpush2.msra.mxu0 %v2446
        %2595 = vmatprep.subr.mxu0 %v2443
        %2596 = vmatpush2.msra.mxu0 %v2442
        %2597 = vmatprep.subr.mxu0 %v2439
        %2598 = vmatpush2.msra.mxu0 %v2438
        %2599 = vmatprep.subr.mxu0 %v2435
        %2600 = vmatpush2.msra.mxu0 %v2434
        %2601 = vmatprep.subr.mxu0 %v2431
        %2602 = vmatpush2.msra.mxu0 %v2430
        %2603 = vmatprep.subr.mxu0 %v2427
        %2604 = vmatpush2.msra.mxu0 %v2426
        %2605 = vmatprep.subr.mxu0 %v2423
        %2606 = vmatpush2.msra.mxu0 %v2422
        %2607 = vmatprep.subr.mxu0 %v2419
        %2608 = vmatpush2.msra.mxu0 %v2418
        %2609 = vmatprep.subr.mxu0 %v2415
        %2610 = vmatpush2.msra.mxu0 %v2414
        %2611 = vmatprep.subr.mxu0 %v2411
        %2612 = vmatpush2.msra.mxu0 %v2410
        %2613 = vmatprep.subr.mxu0 %v2407
        %2614 = vmatpush2.msra.mxu0 %v2406
        %2615 = vmatprep.subr.mxu0 %v2403
        %2616 = vmatpush2.msra.mxu0 %v2402
        %2617 = vmatprep.subr.mxu0 %v2399
        %2618 = vmatpush2.msra.mxu0 %v2398
        %2619 = vmatprep.subr.mxu0 %v2395
        %2620 = vmatpush2.msra.mxu0 %v2394
        %2621 = vmatprep.mubr.f32.mxu0 %v1903
        %2622 = vmatmul.mubr.f32.gmra.mxu0 %v1902
        %v2623 = vpop.f32.mrf.mxu0
        %v2624 = vadd.f32 %v2547, %v2623
        %v2625 = vpop.f32.mrf.mxu0
        %v2626 = vadd.f32 %v2549, %v2625
        %2627 = vmatprep.mubr.f32.mxu0 %v1907
        %2628 = vmatmul.mubr.f32.gmra.mxu0 %v1906
        %v2629 = vpop.f32.mrf.mxu0
        %v2630 = vadd.f32 %v2553, %v2629
        %v2631 = vpop.f32.mrf.mxu0
        %v2632 = vadd.f32 %v2555, %v2631
        %2633 = vdwg.mxu0
        %2634 = vmatprep.subr.mxu0 %v2265
        %2635 = vmatpush1.msra.mxu0 %v2264
        %2636 = vmatprep.subr.mxu0 %v2261
        %2637 = vmatpush1.msra.mxu0 %v2260
        %2638 = vmatprep.subr.mxu0 %v2257
        %2639 = vmatpush1.msra.mxu0 %v2256
        %2640 = vmatprep.subr.mxu0 %v2253
        %2641 = vmatpush1.msra.mxu0 %v2252
        %2642 = vmatprep.subr.mxu0 %v2249
        %2643 = vmatpush1.msra.mxu0 %v2248
        %2644 = vmatprep.subr.mxu0 %v2245
        %2645 = vmatpush1.msra.mxu0 %v2244
        %2646 = vmatprep.subr.mxu0 %v2241
        %2647 = vmatpush1.msra.mxu0 %v2240
        %2648 = vmatprep.subr.mxu0 %v2237
        %2649 = vmatpush1.msra.mxu0 %v2236
        %2650 = vmatprep.subr.mxu0 %v2233
        %2651 = vmatpush1.msra.mxu0 %v2232
        %2652 = vmatprep.subr.mxu0 %v2229
        %2653 = vmatpush1.msra.mxu0 %v2228
        %2654 = vmatprep.subr.mxu0 %v2225
        %2655 = vmatpush1.msra.mxu0 %v2224
        %2656 = vmatprep.subr.mxu0 %v2221
        %2657 = vmatpush1.msra.mxu0 %v2220
        %2658 = vmatprep.subr.mxu0 %v2217
        %2659 = vmatpush1.msra.mxu0 %v2216
        %2660 = vmatprep.subr.mxu0 %v2213
        %2661 = vmatpush1.msra.mxu0 %v2212
        %2662 = vmatprep.subr.mxu0 %v2209
        %2663 = vmatpush1.msra.mxu0 %v2208
        %2664 = vmatprep.subr.mxu0 %v2205
        %2665 = vmatpush1.msra.mxu0 %v2204
        %2666 = vmatprep.subr.mxu0 %v2329
        %2667 = vmatpush2.msra.mxu0 %v2328
        %2668 = vmatprep.subr.mxu0 %v2325
        %2669 = vmatpush2.msra.mxu0 %v2324
        %2670 = vmatprep.subr.mxu0 %v2321
        %2671 = vmatpush2.msra.mxu0 %v2320
        %2672 = vmatprep.subr.mxu0 %v2317
        %2673 = vmatpush2.msra.mxu0 %v2316
        %2674 = vmatprep.subr.mxu0 %v2313
        %2675 = vmatpush2.msra.mxu0 %v2312
        %2676 = vmatprep.subr.mxu0 %v2309
        %2677 = vmatpush2.msra.mxu0 %v2308
        %2678 = vmatprep.subr.mxu0 %v2305
        %2679 = vmatpush2.msra.mxu0 %v2304
        %2680 = vmatprep.subr.mxu0 %v2301
        %2681 = vmatpush2.msra.mxu0 %v2300
        %2682 = vmatprep.subr.mxu0 %v2297
        %2683 = vmatpush2.msra.mxu0 %v2296
        %2684 = vmatprep.subr.mxu0 %v2293
        %2685 = vmatpush2.msra.mxu0 %v2292
        %2686 = vmatprep.subr.mxu0 %v2289
        %2687 = vmatpush2.msra.mxu0 %v2288
        %2688 = vmatprep.subr.mxu0 %v2285
        %2689 = vmatpush2.msra.mxu0 %v2284
        %2690 = vmatprep.subr.mxu0 %v2281
        %2691 = vmatpush2.msra.mxu0 %v2280
        %2692 = vmatprep.subr.mxu0 %v2277
        %2693 = vmatpush2.msra.mxu0 %v2276
        %2694 = vmatprep.subr.mxu0 %v2273
        %2695 = vmatpush2.msra.mxu0 %v2272
        %2696 = vmatprep.subr.mxu0 %v2269
        %2697 = vmatpush2.msra.mxu0 %v2268
        %2698 = vmatprep.mubr.f32.mxu0 %v1901
        %2699 = vmatmul.mubr.f32.gmra.mxu0 %v1900
        %v2700 = vpop.f32.mrf.mxu0
        %v2701 = vadd.f32 %v2471, %v2700
        %v2702 = vpop.f32.mrf.mxu0
        %v2703 = vadd.f32 %v2475, %v2702
        %2704 = vmatprep.mubr.f32.mxu0 %v1905
        %2705 = vmatmul.mubr.f32.gmra.mxu0 %v1904
        %v2706 = vpop.f32.mrf.mxu0
        %v2707 = vadd.f32 %v2471, %v2706
        %v2708 = vpop.f32.mrf.mxu0
        %v2709 = vadd.f32 %v2475, %v2708
        %2710 = vdwg.mxu0
        %2711 = vmatprep.subr.mxu0 %v2393
        %2712 = vmatpush1.msra.mxu0 %v2392
        %2713 = vmatprep.subr.mxu0 %v2389
        %2714 = vmatpush1.msra.mxu0 %v2388
        %2715 = vmatprep.subr.mxu0 %v2385
        %2716 = vmatpush1.msra.mxu0 %v2384
        %2717 = vmatprep.subr.mxu0 %v2381
        %2718 = vmatpush1.msra.mxu0 %v2380
        %2719 = vmatprep.subr.mxu0 %v2377
        %2720 = vmatpush1.msra.mxu0 %v2376
        %2721 = vmatprep.subr.mxu0 %v2373
        %2722 = vmatpush1.msra.mxu0 %v2372
        %2723 = vmatprep.subr.mxu0 %v2369
        %2724 = vmatpush1.msra.mxu0 %v2368
        %2725 = vmatprep.subr.mxu0 %v2365
        %2726 = vmatpush1.msra.mxu0 %v2364
        %2727 = vmatprep.subr.mxu0 %v2361
        %2728 = vmatpush1.msra.mxu0 %v2360
        %2729 = vmatprep.subr.mxu0 %v2357
        %2730 = vmatpush1.msra.mxu0 %v2356
        %2731 = vmatprep.subr.mxu0 %v2353
        %2732 = vmatpush1.msra.mxu0 %v2352
        %2733 = vmatprep.subr.mxu0 %v2349
        %2734 = vmatpush1.msra.mxu0 %v2348
        %2735 = vmatprep.subr.mxu0 %v2345
        %2736 = vmatpush1.msra.mxu0 %v2344
        %2737 = vmatprep.subr.mxu0 %v2341
        %2738 = vmatpush1.msra.mxu0 %v2340
        %2739 = vmatprep.subr.mxu0 %v2337
        %2740 = vmatpush1.msra.mxu0 %v2336
        %2741 = vmatprep.subr.mxu0 %v2333
        %2742 = vmatpush1.msra.mxu0 %v2332
        %2743 = vmatprep.subr.mxu0 %v2457
        %2744 = vmatpush2.msra.mxu0 %v2456
        %2745 = vmatprep.subr.mxu0 %v2453
        %2746 = vmatpush2.msra.mxu0 %v2452
        %2747 = vmatprep.subr.mxu0 %v2449
        %2748 = vmatpush2.msra.mxu0 %v2448
        %2749 = vmatprep.subr.mxu0 %v2445
        %2750 = vmatpush2.msra.mxu0 %v2444
        %2751 = vmatprep.subr.mxu0 %v2441
        %2752 = vmatpush2.msra.mxu0 %v2440
        %2753 = vmatprep.subr.mxu0 %v2437
        %2754 = vmatpush2.msra.mxu0 %v2436
        %2755 = vmatprep.subr.mxu0 %v2433
        %2756 = vmatpush2.msra.mxu0 %v2432
        %2757 = vmatprep.subr.mxu0 %v2429
        %2758 = vmatpush2.msra.mxu0 %v2428
        %2759 = vmatprep.subr.mxu0 %v2425
        %2760 = vmatpush2.msra.mxu0 %v2424
        %2761 = vmatprep.subr.mxu0 %v2421
        %2762 = vmatpush2.msra.mxu0 %v2420
        %2763 = vmatprep.subr.mxu0 %v2417
        %2764 = vmatpush2.msra.mxu0 %v2416
        %2765 = vmatprep.subr.mxu0 %v2413
        %2766 = vmatpush2.msra.mxu0 %v2412
        %2767 = vmatprep.subr.mxu0 %v2409
        %2768 = vmatpush2.msra.mxu0 %v2408
        %2769 = vmatprep.subr.mxu0 %v2405
        %2770 = vmatpush2.msra.mxu0 %v2404
        %2771 = vmatprep.subr.mxu0 %v2401
        %2772 = vmatpush2.msra.mxu0 %v2400
        %2773 = vmatprep.subr.mxu0 %v2397
        %2774 = vmatpush2.msra.mxu0 %v2396
        %2775 = vmatprep.mubr.f32.mxu0 %v1903
        %2776 = vmatmul.mubr.f32.gmra.mxu0 %v1902
        %v2777 = vpop.f32.mrf.mxu0
        %v2778 = vadd.f32 %v2701, %v2777
        %v2779 = vpop.f32.mrf.mxu0
        %v2780 = vadd.f32 %v2703, %v2779
        %2781 = vmatprep.mubr.f32.mxu0 %v1907
        %2782 = vmatmul.mubr.f32.gmra.mxu0 %v1906
        %v2783 = vpop.f32.mrf.mxu0
        %v2784 = vadd.f32 %v2707, %v2783
        %v2785 = vpop.f32.mrf.mxu0
        %v2786 = vadd.f32 %v2709, %v2785
        %2787 = vdwg.mxu0
        %v2788 = vld [vmem:[%s19] sm:$0xf]
        %v2789 = vld [vmem:[%s20] sm:$0xf]
        %v2790 = vadd.f32 %v2624, %v2626
        %v2791 = vadd.f32 %v2790, %v2778
        %v2792 = vadd.f32 %v2791, %v2780
        %2793 = vadd.xlane.f32.xlu0 %v2792
        %v2794 = vpop.xlane.xlu0 %2793
        %v2795 = vadd.f32 %v2630, %v2632
        %v2796 = vadd.f32 %v2795, %v2784
        %v2797 = vadd.f32 %v2796, %v2786
        %2798 = vadd.xlane.f32.xlu0 %v2797
        %v2799 = vpop.xlane.xlu0 %2798
        %v2800 = vmul.f32 %v2794, %v1759
        %v2801 = vmul.f32 %v2799, %v1759
        %v2802 = vsub.f32 %v2624, %v2800
        %v2803 = vsub.f32 %v2626, %v2800
        %v2804 = vsub.f32 %v2778, %v2800
        %v2805 = vsub.f32 %v2780, %v2800
        %v2806 = vsub.f32 %v2630, %v2801
        %v2807 = vsub.f32 %v2632, %v2801
        %v2808 = vsub.f32 %v2784, %v2801
        %v2809 = vsub.f32 %v2786, %v2801
        %v2810 = vmul.f32 %v2802, %v2802
        %v2811 = vmul.f32 %v2803, %v2803
        %v2812 = vmul.f32 %v2804, %v2804
        %v2813 = vmul.f32 %v2805, %v2805
        %v2814 = vmul.f32 %v2806, %v2806
        %v2815 = vmul.f32 %v2807, %v2807
        %v2816 = vmul.f32 %v2808, %v2808
        %v2817 = vmul.f32 %v2809, %v2809
        %v2818 = vadd.f32 %v2810, %v2811
        %v2819 = vadd.f32 %v2818, %v2812
        %v2820 = vadd.f32 %v2819, %v2813
        %2821 = vadd.xlane.f32.xlu0 %v2820
        %v2822 = vpop.xlane.xlu0 %2821
        %v2823 = vadd.f32 %v2814, %v2815
        %v2824 = vadd.f32 %v2823, %v2816
        %v2825 = vadd.f32 %v2824, %v2817
        %2826 = vadd.xlane.f32.xlu0 %v2825
        %v2827 = vpop.xlane.xlu0 %2826
        %v2828 = vmul.f32 %v2822, %v1759
        %v2829 = vmul.f32 %v2827, %v1759
        %v2830 = vadd.f32 %v2828, 1e-05
        %v2831 = vadd.f32 %v2829, 1e-05
        %v2832 = vrsqrt.pop %v2830
        %v2833 = vrsqrt.pop %v2831
        %v2834 = vmul.f32 %v2802, %v2832
        %v2835 = vmul.f32 %v2803, %v2832
        %v2836 = vmul.f32 %v2804, %v2832
        %v2837 = vmul.f32 %v2805, %v2832
        %v2838 = vmul.f32 %v2806, %v2833
        %v2839 = vmul.f32 %v2807, %v2833
        %v2840 = vmul.f32 %v2808, %v2833
        %v2841 = vmul.f32 %v2809, %v2833
        %v2843 = vlaneseq
        %v2844 = vshrl.u32 %v2843, 7
        %v2845 = vsub.s32 0, %v2844
        %v2846 = vrot.slane %v2788, %v2845
        %v2847 = vlaneseq
        %v2848 = vshrl.u32 %v2847, 7
        %v2849 = vsub.s32 1, %v2848
        %v2850 = vrot.slane %v2788, %v2849
        %v2851 = vlaneseq
        %v2852 = vshrl.u32 %v2851, 7
        %v2853 = vsub.s32 2, %v2852
        %v2854 = vrot.slane %v2788, %v2853
        %v2855 = vlaneseq
        %v2856 = vshrl.u32 %v2855, 7
        %v2857 = vsub.s32 3, %v2856
        %v2858 = vrot.slane %v2788, %v2857
        %v2863 = vmul.f32 %v2834, %v2846
        %v2864 = vmul.f32 %v2835, %v2850
        %v2865 = vmul.f32 %v2836, %v2854
        %v2866 = vmul.f32 %v2837, %v2858
        %v2867 = vmul.f32 %v2838, %v2846
        %v2868 = vmul.f32 %v2839, %v2850
        %v2869 = vmul.f32 %v2840, %v2854
        %v2870 = vmul.f32 %v2841, %v2858
        %v2872 = vlaneseq
        %v2873 = vshrl.u32 %v2872, 7
        %v2874 = vsub.s32 0, %v2873
        %v2875 = vrot.slane %v2789, %v2874
        %v2876 = vlaneseq
        %v2877 = vshrl.u32 %v2876, 7
        %v2878 = vsub.s32 1, %v2877
        %v2879 = vrot.slane %v2789, %v2878
        %v2880 = vlaneseq
        %v2881 = vshrl.u32 %v2880, 7
        %v2882 = vsub.s32 2, %v2881
        %v2883 = vrot.slane %v2789, %v2882
        %v2884 = vlaneseq
        %v2885 = vshrl.u32 %v2884, 7
        %v2886 = vsub.s32 3, %v2885
        %v2887 = vrot.slane %v2789, %v2886
        %v2892 = vadd.f32 %v2863, %v2875
        %v2893 = vadd.f32 %v2864, %v2879
        %v2894 = vadd.f32 %v2865, %v2883
        %v2895 = vadd.f32 %v2866, %v2887
        %v2896 = vadd.f32 %v2867, %v2875
        %v2897 = vadd.f32 %v2868, %v2879
        %v2898 = vadd.f32 %v2869, %v2883
        %v2899 = vadd.f32 %v2870, %v2887
        %v2900 = vmul.f32 %v2892, 0.5
        %v2901 = vmul.f32 %v2893, 0.5
        %v2902 = vmul.f32 %v2894, 0.5
        %v2903 = vmul.f32 %v2895, 0.5
        %v2904 = vmul.f32 %v2896, 0.5
        %v2905 = vmul.f32 %v2897, 0.5
        %v2906 = vmul.f32 %v2898, 0.5
        %v2907 = vmul.f32 %v2899, 0.5
        %v2908 = vmul.f32 %v2892, 0.70710677
        %v2909 = vmul.f32 %v2893, 0.70710677
        %v2910 = vmul.f32 %v2894, 0.70710677
        %v2911 = vmul.f32 %v2895, 0.70710677
        %v2912 = vmul.f32 %v2896, 0.70710677
        %v2913 = vmul.f32 %v2897, 0.70710677
        %v2914 = vmul.f32 %v2898, 0.70710677
        %v2915 = vmul.f32 %v2899, 0.70710677
        %v2916 = verf.f32.pop %v2908
        %v2917 = verf.f32.pop %v2909
        %v2918 = verf.f32.pop %v2910
        %v2919 = verf.f32.pop %v2911
        %v2920 = verf.f32.pop %v2912
        %v2921 = verf.f32.pop %v2913
        %v2922 = verf.f32.pop %v2914
        %v2923 = verf.f32.pop %v2915
        %v2924 = vadd.f32 %v2916, 1.0
        %v2925 = vadd.f32 %v2917, 1.0
        %v2926 = vadd.f32 %v2918, 1.0
        %v2927 = vadd.f32 %v2919, 1.0
        %v2928 = vadd.f32 %v2920, 1.0
        %v2929 = vadd.f32 %v2921, 1.0
        %v2930 = vadd.f32 %v2922, 1.0
        %v2931 = vadd.f32 %v2923, 1.0
        %v2932 = vmul.f32 %v2900, %v2924
        %v2933 = vmul.f32 %v2901, %v2925
        %v2934 = vmul.f32 %v2902, %v2926
        %v2935 = vmul.f32 %v2903, %v2927
        %v2936 = vmul.f32 %v2904, %v2928
        %v2937 = vmul.f32 %v2905, %v2929
        %v2938 = vmul.f32 %v2906, %v2930
        %v2939 = vmul.f32 %v2907, %v2931
        %v2940 = vld [vmem:[#allocation15] sm:$0xff]
        %v2941 = vld [vmem:[#allocation15 + $0x8] sm:$0xff]
        %v2942 = vld [vmem:[#allocation15 + $0x10] sm:$0xff]
        %v2943 = vld [vmem:[#allocation15 + $0x18] sm:$0xff]
        %v2944 = vld [vmem:[#allocation15 + $0x20] sm:$0xff]
        %v2945 = vld [vmem:[#allocation15 + $0x28] sm:$0xff]
        %v2946 = vld [vmem:[#allocation15 + $0x30] sm:$0xff]
        %v2947 = vld [vmem:[#allocation15 + $0x38] sm:$0xff]
        %v2948 = vld [vmem:[#allocation15 + $0x40] sm:$0xff]
        %v2949 = vld [vmem:[#allocation15 + $0x48] sm:$0xff]
        %v2950 = vld [vmem:[#allocation15 + $0x50] sm:$0xff]
        %v2951 = vld [vmem:[#allocation15 + $0x58] sm:$0xff]
        %v2952 = vld [vmem:[#allocation15 + $0x60] sm:$0xff]
        %v2953 = vld [vmem:[#allocation15 + $0x68] sm:$0xff]
        %v2954 = vld [vmem:[#allocation15 + $0x70] sm:$0xff]
        %v2955 = vld [vmem:[#allocation15 + $0x78] sm:$0xff]
        %v2956 = vld [vmem:[#allocation15 + $0x80] sm:$0xff]
        %v2957 = vld [vmem:[#allocation15 + $0x88] sm:$0xff]
        %v2958 = vld [vmem:[#allocation15 + $0x90] sm:$0xff]
        %v2959 = vld [vmem:[#allocation15 + $0x98] sm:$0xff]
        %v2960 = vld [vmem:[#allocation15 + $0xa0] sm:$0xff]
        %v2961 = vld [vmem:[#allocation15 + $0xa8] sm:$0xff]
        %v2962 = vld [vmem:[#allocation15 + $0xb0] sm:$0xff]
        %v2963 = vld [vmem:[#allocation15 + $0xb8] sm:$0xff]
        %v2964 = vld [vmem:[#allocation15 + $0xc0] sm:$0xff]
        %v2965 = vld [vmem:[#allocation15 + $0xc8] sm:$0xff]
        %v2966 = vld [vmem:[#allocation15 + $0xd0] sm:$0xff]
        %v2967 = vld [vmem:[#allocation15 + $0xd8] sm:$0xff]
        %v2968 = vld [vmem:[#allocation15 + $0xe0] sm:$0xff]
        %v2969 = vld [vmem:[#allocation15 + $0xe8] sm:$0xff]
        %v2970 = vld [vmem:[#allocation15 + $0xf0] sm:$0xff]
        %v2971 = vld [vmem:[#allocation15 + $0xf8] sm:$0xff]
        %v2972 = vld [vmem:[#allocation15 + $0x100] sm:$0xff]
        %v2973 = vld [vmem:[#allocation15 + $0x108] sm:$0xff]
        %v2974 = vld [vmem:[#allocation15 + $0x110] sm:$0xff]
        %v2975 = vld [vmem:[#allocation15 + $0x118] sm:$0xff]
        %v2976 = vld [vmem:[#allocation15 + $0x120] sm:$0xff]
        %v2977 = vld [vmem:[#allocation15 + $0x128] sm:$0xff]
        %v2978 = vld [vmem:[#allocation15 + $0x130] sm:$0xff]
        %v2979 = vld [vmem:[#allocation15 + $0x138] sm:$0xff]
        %v2980 = vld [vmem:[#allocation15 + $0x140] sm:$0xff]
        %v2981 = vld [vmem:[#allocation15 + $0x148] sm:$0xff]
        %v2982 = vld [vmem:[#allocation15 + $0x150] sm:$0xff]
        %v2983 = vld [vmem:[#allocation15 + $0x158] sm:$0xff]
        %v2984 = vld [vmem:[#allocation15 + $0x160] sm:$0xff]
        %v2985 = vld [vmem:[#allocation15 + $0x168] sm:$0xff]
        %v2986 = vld [vmem:[#allocation15 + $0x170] sm:$0xff]
        %v2987 = vld [vmem:[#allocation15 + $0x178] sm:$0xff]
        %v2988 = vld [vmem:[#allocation15 + $0x180] sm:$0xff]
        %v2989 = vld [vmem:[#allocation15 + $0x188] sm:$0xff]
        %v2990 = vld [vmem:[#allocation15 + $0x190] sm:$0xff]
        %v2991 = vld [vmem:[#allocation15 + $0x198] sm:$0xff]
        %v2992 = vld [vmem:[#allocation15 + $0x1a0] sm:$0xff]
        %v2993 = vld [vmem:[#allocation15 + $0x1a8] sm:$0xff]
        %v2994 = vld [vmem:[#allocation15 + $0x1b0] sm:$0xff]
        %v2995 = vld [vmem:[#allocation15 + $0x1b8] sm:$0xff]
        %v2996 = vld [vmem:[#allocation15 + $0x1c0] sm:$0xff]
        %v2997 = vld [vmem:[#allocation15 + $0x1c8] sm:$0xff]
        %v2998 = vld [vmem:[#allocation15 + $0x1d0] sm:$0xff]
        %v2999 = vld [vmem:[#allocation15 + $0x1d8] sm:$0xff]
        %v3000 = vld [vmem:[#allocation15 + $0x1e0] sm:$0xff]
        %v3001 = vld [vmem:[#allocation15 + $0x1e8] sm:$0xff]
        %v3002 = vld [vmem:[#allocation15 + $0x1f0] sm:$0xff]
        %v3003 = vld [vmem:[#allocation15 + $0x1f8] sm:$0xff]
        %v3004 = vld [vmem:[#allocation15 + $0x200] sm:$0xff]
        %v3005 = vld [vmem:[#allocation15 + $0x208] sm:$0xff]
        %v3006 = vld [vmem:[#allocation15 + $0x210] sm:$0xff]
        %v3007 = vld [vmem:[#allocation15 + $0x218] sm:$0xff]
        %v3008 = vld [vmem:[#allocation15 + $0x220] sm:$0xff]
        %v3009 = vld [vmem:[#allocation15 + $0x228] sm:$0xff]
        %v3010 = vld [vmem:[#allocation15 + $0x230] sm:$0xff]
        %v3011 = vld [vmem:[#allocation15 + $0x238] sm:$0xff]
        %v3012 = vld [vmem:[#allocation15 + $0x240] sm:$0xff]
        %v3013 = vld [vmem:[#allocation15 + $0x248] sm:$0xff]
        %v3014 = vld [vmem:[#allocation15 + $0x250] sm:$0xff]
        %v3015 = vld [vmem:[#allocation15 + $0x258] sm:$0xff]
        %v3016 = vld [vmem:[#allocation15 + $0x260] sm:$0xff]
        %v3017 = vld [vmem:[#allocation15 + $0x268] sm:$0xff]
        %v3018 = vld [vmem:[#allocation15 + $0x270] sm:$0xff]
        %v3019 = vld [vmem:[#allocation15 + $0x278] sm:$0xff]
        %v3020 = vld [vmem:[#allocation15 + $0x280] sm:$0xff]
        %v3021 = vld [vmem:[#allocation15 + $0x288] sm:$0xff]
        %v3022 = vld [vmem:[#allocation15 + $0x290] sm:$0xff]
        %v3023 = vld [vmem:[#allocation15 + $0x298] sm:$0xff]
        %v3024 = vld [vmem:[#allocation15 + $0x2a0] sm:$0xff]
        %v3025 = vld [vmem:[#allocation15 + $0x2a8] sm:$0xff]
        %v3026 = vld [vmem:[#allocation15 + $0x2b0] sm:$0xff]
        %v3027 = vld [vmem:[#allocation15 + $0x2b8] sm:$0xff]
        %v3028 = vld [vmem:[#allocation15 + $0x2c0] sm:$0xff]
        %v3029 = vld [vmem:[#allocation15 + $0x2c8] sm:$0xff]
        %v3030 = vld [vmem:[#allocation15 + $0x2d0] sm:$0xff]
        %v3031 = vld [vmem:[#allocation15 + $0x2d8] sm:$0xff]
        %v3032 = vld [vmem:[#allocation15 + $0x2e0] sm:$0xff]
        %v3033 = vld [vmem:[#allocation15 + $0x2e8] sm:$0xff]
        %v3034 = vld [vmem:[#allocation15 + $0x2f0] sm:$0xff]
        %v3035 = vld [vmem:[#allocation15 + $0x2f8] sm:$0xff]
        %v3036 = vld [vmem:[#allocation15 + $0x300] sm:$0xff]
        %v3037 = vld [vmem:[#allocation15 + $0x308] sm:$0xff]
        %v3038 = vld [vmem:[#allocation15 + $0x310] sm:$0xff]
        %v3039 = vld [vmem:[#allocation15 + $0x318] sm:$0xff]
        %v3040 = vld [vmem:[#allocation15 + $0x320] sm:$0xff]
        %v3041 = vld [vmem:[#allocation15 + $0x328] sm:$0xff]
        %v3042 = vld [vmem:[#allocation15 + $0x330] sm:$0xff]
        %v3043 = vld [vmem:[#allocation15 + $0x338] sm:$0xff]
        %v3044 = vld [vmem:[#allocation15 + $0x340] sm:$0xff]
        %v3045 = vld [vmem:[#allocation15 + $0x348] sm:$0xff]
        %v3046 = vld [vmem:[#allocation15 + $0x350] sm:$0xff]
        %v3047 = vld [vmem:[#allocation15 + $0x358] sm:$0xff]
        %v3048 = vld [vmem:[#allocation15 + $0x360] sm:$0xff]
        %v3049 = vld [vmem:[#allocation15 + $0x368] sm:$0xff]
        %v3050 = vld [vmem:[#allocation15 + $0x370] sm:$0xff]
        %v3051 = vld [vmem:[#allocation15 + $0x378] sm:$0xff]
        %v3052 = vld [vmem:[#allocation15 + $0x380] sm:$0xff]
        %v3053 = vld [vmem:[#allocation15 + $0x388] sm:$0xff]
        %v3054 = vld [vmem:[#allocation15 + $0x390] sm:$0xff]
        %v3055 = vld [vmem:[#allocation15 + $0x398] sm:$0xff]
        %v3056 = vld [vmem:[#allocation15 + $0x3a0] sm:$0xff]
        %v3057 = vld [vmem:[#allocation15 + $0x3a8] sm:$0xff]
        %v3058 = vld [vmem:[#allocation15 + $0x3b0] sm:$0xff]
        %v3059 = vld [vmem:[#allocation15 + $0x3b8] sm:$0xff]
        %v3060 = vld [vmem:[#allocation15 + $0x3c0] sm:$0xff]
        %v3061 = vld [vmem:[#allocation15 + $0x3c8] sm:$0xff]
        %v3062 = vld [vmem:[#allocation15 + $0x3d0] sm:$0xff]
        %v3063 = vld [vmem:[#allocation15 + $0x3d8] sm:$0xff]
        %v3064 = vld [vmem:[#allocation15 + $0x3e0] sm:$0xff]
        %v3065 = vld [vmem:[#allocation15 + $0x3e8] sm:$0xff]
        %v3066 = vld [vmem:[#allocation15 + $0x3f0] sm:$0xff]
        %v3067 = vld [vmem:[#allocation15 + $0x3f8] sm:$0xff]
        %v3068 = vld [vmem:[#allocation15 + $0x400] sm:$0xff]
        %v3069 = vld [vmem:[#allocation15 + $0x408] sm:$0xff]
        %v3070 = vld [vmem:[#allocation15 + $0x410] sm:$0xff]
        %v3071 = vld [vmem:[#allocation15 + $0x418] sm:$0xff]
        %v3072 = vld [vmem:[#allocation15 + $0x420] sm:$0xff]
        %v3073 = vld [vmem:[#allocation15 + $0x428] sm:$0xff]
        %v3074 = vld [vmem:[#allocation15 + $0x430] sm:$0xff]
        %v3075 = vld [vmem:[#allocation15 + $0x438] sm:$0xff]
        %v3076 = vld [vmem:[#allocation15 + $0x440] sm:$0xff]
        %v3077 = vld [vmem:[#allocation15 + $0x448] sm:$0xff]
        %v3078 = vld [vmem:[#allocation15 + $0x450] sm:$0xff]
        %v3079 = vld [vmem:[#allocation15 + $0x458] sm:$0xff]
        %v3080 = vld [vmem:[#allocation15 + $0x460] sm:$0xff]
        %v3081 = vld [vmem:[#allocation15 + $0x468] sm:$0xff]
        %v3082 = vld [vmem:[#allocation15 + $0x470] sm:$0xff]
        %v3083 = vld [vmem:[#allocation15 + $0x478] sm:$0xff]
        %v3084 = vld [vmem:[#allocation15 + $0x480] sm:$0xff]
        %v3085 = vld [vmem:[#allocation15 + $0x488] sm:$0xff]
        %v3086 = vld [vmem:[#allocation15 + $0x490] sm:$0xff]
        %v3087 = vld [vmem:[#allocation15 + $0x498] sm:$0xff]
        %v3088 = vld [vmem:[#allocation15 + $0x4a0] sm:$0xff]
        %v3089 = vld [vmem:[#allocation15 + $0x4a8] sm:$0xff]
        %v3090 = vld [vmem:[#allocation15 + $0x4b0] sm:$0xff]
        %v3091 = vld [vmem:[#allocation15 + $0x4b8] sm:$0xff]
        %v3092 = vld [vmem:[#allocation15 + $0x4c0] sm:$0xff]
        %v3093 = vld [vmem:[#allocation15 + $0x4c8] sm:$0xff]
        %v3094 = vld [vmem:[#allocation15 + $0x4d0] sm:$0xff]
        %v3095 = vld [vmem:[#allocation15 + $0x4d8] sm:$0xff]
        %v3096 = vld [vmem:[#allocation15 + $0x4e0] sm:$0xff]
        %v3097 = vld [vmem:[#allocation15 + $0x4e8] sm:$0xff]
        %v3098 = vld [vmem:[#allocation15 + $0x4f0] sm:$0xff]
        %v3099 = vld [vmem:[#allocation15 + $0x4f8] sm:$0xff]
        %v3100 = vld [vmem:[#allocation15 + $0x500] sm:$0xff]
        %v3101 = vld [vmem:[#allocation15 + $0x508] sm:$0xff]
        %v3102 = vld [vmem:[#allocation15 + $0x510] sm:$0xff]
        %v3103 = vld [vmem:[#allocation15 + $0x518] sm:$0xff]
        %v3104 = vld [vmem:[#allocation15 + $0x520] sm:$0xff]
        %v3105 = vld [vmem:[#allocation15 + $0x528] sm:$0xff]
        %v3106 = vld [vmem:[#allocation15 + $0x530] sm:$0xff]
        %v3107 = vld [vmem:[#allocation15 + $0x538] sm:$0xff]
        %v3108 = vld [vmem:[#allocation15 + $0x540] sm:$0xff]
        %v3109 = vld [vmem:[#allocation15 + $0x548] sm:$0xff]
        %v3110 = vld [vmem:[#allocation15 + $0x550] sm:$0xff]
        %v3111 = vld [vmem:[#allocation15 + $0x558] sm:$0xff]
        %v3112 = vld [vmem:[#allocation15 + $0x560] sm:$0xff]
        %v3113 = vld [vmem:[#allocation15 + $0x568] sm:$0xff]
        %v3114 = vld [vmem:[#allocation15 + $0x570] sm:$0xff]
        %v3115 = vld [vmem:[#allocation15 + $0x578] sm:$0xff]
        %v3116 = vld [vmem:[#allocation15 + $0x580] sm:$0xff]
        %v3117 = vld [vmem:[#allocation15 + $0x588] sm:$0xff]
        %v3118 = vld [vmem:[#allocation15 + $0x590] sm:$0xff]
        %v3119 = vld [vmem:[#allocation15 + $0x598] sm:$0xff]
        %v3120 = vld [vmem:[#allocation15 + $0x5a0] sm:$0xff]
        %v3121 = vld [vmem:[#allocation15 + $0x5a8] sm:$0xff]
        %v3122 = vld [vmem:[#allocation15 + $0x5b0] sm:$0xff]
        %v3123 = vld [vmem:[#allocation15 + $0x5b8] sm:$0xff]
        %v3124 = vld [vmem:[#allocation15 + $0x5c0] sm:$0xff]
        %v3125 = vld [vmem:[#allocation15 + $0x5c8] sm:$0xff]
        %v3126 = vld [vmem:[#allocation15 + $0x5d0] sm:$0xff]
        %v3127 = vld [vmem:[#allocation15 + $0x5d8] sm:$0xff]
        %v3128 = vld [vmem:[#allocation15 + $0x5e0] sm:$0xff]
        %v3129 = vld [vmem:[#allocation15 + $0x5e8] sm:$0xff]
        %v3130 = vld [vmem:[#allocation15 + $0x5f0] sm:$0xff]
        %v3131 = vld [vmem:[#allocation15 + $0x5f8] sm:$0xff]
        %v3132 = vld [vmem:[#allocation15 + $0x600] sm:$0xff]
        %v3133 = vld [vmem:[#allocation15 + $0x608] sm:$0xff]
        %v3134 = vld [vmem:[#allocation15 + $0x610] sm:$0xff]
        %v3135 = vld [vmem:[#allocation15 + $0x618] sm:$0xff]
        %v3136 = vld [vmem:[#allocation15 + $0x620] sm:$0xff]
        %v3137 = vld [vmem:[#allocation15 + $0x628] sm:$0xff]
        %v3138 = vld [vmem:[#allocation15 + $0x630] sm:$0xff]
        %v3139 = vld [vmem:[#allocation15 + $0x638] sm:$0xff]
        %v3140 = vld [vmem:[#allocation15 + $0x640] sm:$0xff]
        %v3141 = vld [vmem:[#allocation15 + $0x648] sm:$0xff]
        %v3142 = vld [vmem:[#allocation15 + $0x650] sm:$0xff]
        %v3143 = vld [vmem:[#allocation15 + $0x658] sm:$0xff]
        %v3144 = vld [vmem:[#allocation15 + $0x660] sm:$0xff]
        %v3145 = vld [vmem:[#allocation15 + $0x668] sm:$0xff]
        %v3146 = vld [vmem:[#allocation15 + $0x670] sm:$0xff]
        %v3147 = vld [vmem:[#allocation15 + $0x678] sm:$0xff]
        %v3148 = vld [vmem:[#allocation15 + $0x680] sm:$0xff]
        %v3149 = vld [vmem:[#allocation15 + $0x688] sm:$0xff]
        %v3150 = vld [vmem:[#allocation15 + $0x690] sm:$0xff]
        %v3151 = vld [vmem:[#allocation15 + $0x698] sm:$0xff]
        %v3152 = vld [vmem:[#allocation15 + $0x6a0] sm:$0xff]
        %v3153 = vld [vmem:[#allocation15 + $0x6a8] sm:$0xff]
        %v3154 = vld [vmem:[#allocation15 + $0x6b0] sm:$0xff]
        %v3155 = vld [vmem:[#allocation15 + $0x6b8] sm:$0xff]
        %v3156 = vld [vmem:[#allocation15 + $0x6c0] sm:$0xff]
        %v3157 = vld [vmem:[#allocation15 + $0x6c8] sm:$0xff]
        %v3158 = vld [vmem:[#allocation15 + $0x6d0] sm:$0xff]
        %v3159 = vld [vmem:[#allocation15 + $0x6d8] sm:$0xff]
        %v3160 = vld [vmem:[#allocation15 + $0x6e0] sm:$0xff]
        %v3161 = vld [vmem:[#allocation15 + $0x6e8] sm:$0xff]
        %v3162 = vld [vmem:[#allocation15 + $0x6f0] sm:$0xff]
        %v3163 = vld [vmem:[#allocation15 + $0x6f8] sm:$0xff]
        %v3164 = vld [vmem:[#allocation15 + $0x700] sm:$0xff]
        %v3165 = vld [vmem:[#allocation15 + $0x708] sm:$0xff]
        %v3166 = vld [vmem:[#allocation15 + $0x710] sm:$0xff]
        %v3167 = vld [vmem:[#allocation15 + $0x718] sm:$0xff]
        %v3168 = vld [vmem:[#allocation15 + $0x720] sm:$0xff]
        %v3169 = vld [vmem:[#allocation15 + $0x728] sm:$0xff]
        %v3170 = vld [vmem:[#allocation15 + $0x730] sm:$0xff]
        %v3171 = vld [vmem:[#allocation15 + $0x738] sm:$0xff]
        %v3172 = vld [vmem:[#allocation15 + $0x740] sm:$0xff]
        %v3173 = vld [vmem:[#allocation15 + $0x748] sm:$0xff]
        %v3174 = vld [vmem:[#allocation15 + $0x750] sm:$0xff]
        %v3175 = vld [vmem:[#allocation15 + $0x758] sm:$0xff]
        %v3176 = vld [vmem:[#allocation15 + $0x760] sm:$0xff]
        %v3177 = vld [vmem:[#allocation15 + $0x768] sm:$0xff]
        %v3178 = vld [vmem:[#allocation15 + $0x770] sm:$0xff]
        %v3179 = vld [vmem:[#allocation15 + $0x778] sm:$0xff]
        %v3180 = vld [vmem:[#allocation15 + $0x780] sm:$0xff]
        %v3181 = vld [vmem:[#allocation15 + $0x788] sm:$0xff]
        %v3182 = vld [vmem:[#allocation15 + $0x790] sm:$0xff]
        %v3183 = vld [vmem:[#allocation15 + $0x798] sm:$0xff]
        %v3184 = vld [vmem:[#allocation15 + $0x7a0] sm:$0xff]
        %v3185 = vld [vmem:[#allocation15 + $0x7a8] sm:$0xff]
        %v3186 = vld [vmem:[#allocation15 + $0x7b0] sm:$0xff]
        %v3187 = vld [vmem:[#allocation15 + $0x7b8] sm:$0xff]
        %v3188 = vld [vmem:[#allocation15 + $0x7c0] sm:$0xff]
        %v3189 = vld [vmem:[#allocation15 + $0x7c8] sm:$0xff]
        %v3190 = vld [vmem:[#allocation15 + $0x7d0] sm:$0xff]
        %v3191 = vld [vmem:[#allocation15 + $0x7d8] sm:$0xff]
        %v3192 = vld [vmem:[#allocation15 + $0x7e0] sm:$0xff]
        %v3193 = vld [vmem:[#allocation15 + $0x7e8] sm:$0xff]
        %v3194 = vld [vmem:[#allocation15 + $0x7f0] sm:$0xff]
        %v3195 = vld [vmem:[#allocation15 + $0x7f8] sm:$0xff]
        %v3196 = vld [vmem:[%s22] sm:$0xf]
        %v3198 = vlaneseq
        %v3199 = vshrl.u32 %v3198, 7
        %v3200 = vsub.s32 0, %v3199
        %v3201 = vrot.slane %v3196, %v3200
        %v3202 = vlaneseq
        %v3203 = vshrl.u32 %v3202, 7
        %v3204 = vsub.s32 1, %v3203
        %v3205 = vrot.slane %v3196, %v3204
        %v3206 = vlaneseq
        %v3207 = vshrl.u32 %v3206, 7
        %v3208 = vsub.s32 2, %v3207
        %v3209 = vrot.slane %v3196, %v3208
        %v3210 = vlaneseq
        %v3211 = vshrl.u32 %v3210, 7
        %v3212 = vsub.s32 3, %v3211
        %v3213 = vrot.slane %v3196, %v3212
        %3218 = vmatprep.subr.mxu0 %v3001
        %3219 = vmatpush1.msra.mxu0 %v3000
        %3220 = vmatprep.subr.mxu0 %v2997
        %3221 = vmatpush1.msra.mxu0 %v2996
        %3222 = vmatprep.subr.mxu0 %v2993
        %3223 = vmatpush1.msra.mxu0 %v2992
        %3224 = vmatprep.subr.mxu0 %v2989
        %3225 = vmatpush1.msra.mxu0 %v2988
        %3226 = vmatprep.subr.mxu0 %v2985
        %3227 = vmatpush1.msra.mxu0 %v2984
        %3228 = vmatprep.subr.mxu0 %v2981
        %3229 = vmatpush1.msra.mxu0 %v2980
        %3230 = vmatprep.subr.mxu0 %v2977
        %3231 = vmatpush1.msra.mxu0 %v2976
        %3232 = vmatprep.subr.mxu0 %v2973
        %3233 = vmatpush1.msra.mxu0 %v2972
        %3234 = vmatprep.subr.mxu0 %v2969
        %3235 = vmatpush1.msra.mxu0 %v2968
        %3236 = vmatprep.subr.mxu0 %v2965
        %3237 = vmatpush1.msra.mxu0 %v2964
        %3238 = vmatprep.subr.mxu0 %v2961
        %3239 = vmatpush1.msra.mxu0 %v2960
        %3240 = vmatprep.subr.mxu0 %v2957
        %3241 = vmatpush1.msra.mxu0 %v2956
        %3242 = vmatprep.subr.mxu0 %v2953
        %3243 = vmatpush1.msra.mxu0 %v2952
        %3244 = vmatprep.subr.mxu0 %v2949
        %3245 = vmatpush1.msra.mxu0 %v2948
        %3246 = vmatprep.subr.mxu0 %v2945
        %3247 = vmatpush1.msra.mxu0 %v2944
        %3248 = vmatprep.subr.mxu0 %v2941
        %3249 = vmatpush1.msra.mxu0 %v2940
        %3250 = vmatprep.subr.mxu0 %v3065
        %3251 = vmatpush2.msra.mxu0 %v3064
        %3252 = vmatprep.subr.mxu0 %v3061
        %3253 = vmatpush2.msra.mxu0 %v3060
        %3254 = vmatprep.subr.mxu0 %v3057
        %3255 = vmatpush2.msra.mxu0 %v3056
        %3256 = vmatprep.subr.mxu0 %v3053
        %3257 = vmatpush2.msra.mxu0 %v3052
        %3258 = vmatprep.subr.mxu0 %v3049
        %3259 = vmatpush2.msra.mxu0 %v3048
        %3260 = vmatprep.subr.mxu0 %v3045
        %3261 = vmatpush2.msra.mxu0 %v3044
        %3262 = vmatprep.subr.mxu0 %v3041
        %3263 = vmatpush2.msra.mxu0 %v3040
        %3264 = vmatprep.subr.mxu0 %v3037
        %3265 = vmatpush2.msra.mxu0 %v3036
        %3266 = vmatprep.subr.mxu0 %v3033
        %3267 = vmatpush2.msra.mxu0 %v3032
        %3268 = vmatprep.subr.mxu0 %v3029
        %3269 = vmatpush2.msra.mxu0 %v3028
        %3270 = vmatprep.subr.mxu0 %v3025
        %3271 = vmatpush2.msra.mxu0 %v3024
        %3272 = vmatprep.subr.mxu0 %v3021
        %3273 = vmatpush2.msra.mxu0 %v3020
        %3274 = vmatprep.subr.mxu0 %v3017
        %3275 = vmatpush2.msra.mxu0 %v3016
        %3276 = vmatprep.subr.mxu0 %v3013
        %3277 = vmatpush2.msra.mxu0 %v3012
        %3278 = vmatprep.subr.mxu0 %v3009
        %3279 = vmatpush2.msra.mxu0 %v3008
        %3280 = vmatprep.subr.mxu0 %v3005
        %3281 = vmatpush2.msra.mxu0 %v3004
        %3282 = vmatprep.mubr.f32.mxu0 %v2933
        %3283 = vmatmul.mubr.f32.gmra.mxu0 %v2932
        %v3284 = vpop.f32.mrf.mxu0
        %v3285 = vadd.f32 %v3201, %v3284
        %v3286 = vpop.f32.mrf.mxu0
        %v3287 = vadd.f32 %v3205, %v3286
        %3288 = vmatprep.mubr.f32.mxu0 %v2937
        %3289 = vmatmul.mubr.f32.gmra.mxu0 %v2936
        %v3290 = vpop.f32.mrf.mxu0
        %v3291 = vadd.f32 %v3201, %v3290
        %v3292 = vpop.f32.mrf.mxu0
        %v3293 = vadd.f32 %v3205, %v3292
        %3294 = vdwg.mxu0
        %3295 = vmatprep.subr.mxu0 %v3129
        %3296 = vmatpush1.msra.mxu0 %v3128
        %3297 = vmatprep.subr.mxu0 %v3125
        %3298 = vmatpush1.msra.mxu0 %v3124
        %3299 = vmatprep.subr.mxu0 %v3121
        %3300 = vmatpush1.msra.mxu0 %v3120
        %3301 = vmatprep.subr.mxu0 %v3117
        %3302 = vmatpush1.msra.mxu0 %v3116
        %3303 = vmatprep.subr.mxu0 %v3113
        %3304 = vmatpush1.msra.mxu0 %v3112
        %3305 = vmatprep.subr.mxu0 %v3109
        %3306 = vmatpush1.msra.mxu0 %v3108
        %3307 = vmatprep.subr.mxu0 %v3105
        %3308 = vmatpush1.msra.mxu0 %v3104
        %3309 = vmatprep.subr.mxu0 %v3101
        %3310 = vmatpush1.msra.mxu0 %v3100
        %3311 = vmatprep.subr.mxu0 %v3097
        %3312 = vmatpush1.msra.mxu0 %v3096
        %3313 = vmatprep.subr.mxu0 %v3093
        %3314 = vmatpush1.msra.mxu0 %v3092
        %3315 = vmatprep.subr.mxu0 %v3089
        %3316 = vmatpush1.msra.mxu0 %v3088
        %3317 = vmatprep.subr.mxu0 %v3085
        %3318 = vmatpush1.msra.mxu0 %v3084
        %3319 = vmatprep.subr.mxu0 %v3081
        %3320 = vmatpush1.msra.mxu0 %v3080
        %3321 = vmatprep.subr.mxu0 %v3077
        %3322 = vmatpush1.msra.mxu0 %v3076
        %3323 = vmatprep.subr.mxu0 %v3073
        %3324 = vmatpush1.msra.mxu0 %v3072
        %3325 = vmatprep.subr.mxu0 %v3069
        %3326 = vmatpush1.msra.mxu0 %v3068
        %3327 = vmatprep.subr.mxu0 %v3193
        %3328 = vmatpush2.msra.mxu0 %v3192
        %3329 = vmatprep.subr.mxu0 %v3189
        %3330 = vmatpush2.msra.mxu0 %v3188
        %3331 = vmatprep.subr.mxu0 %v3185
        %3332 = vmatpush2.msra.mxu0 %v3184
        %3333 = vmatprep.subr.mxu0 %v3181
        %3334 = vmatpush2.msra.mxu0 %v3180
        %3335 = vmatprep.subr.mxu0 %v3177
        %3336 = vmatpush2.msra.mxu0 %v3176
        %3337 = vmatprep.subr.mxu0 %v3173
        %3338 = vmatpush2.msra.mxu0 %v3172
        %3339 = vmatprep.subr.mxu0 %v3169
        %3340 = vmatpush2.msra.mxu0 %v3168
        %3341 = vmatprep.subr.mxu0 %v3165
        %3342 = vmatpush2.msra.mxu0 %v3164
        %3343 = vmatprep.subr.mxu0 %v3161
        %3344 = vmatpush2.msra.mxu0 %v3160
        %3345 = vmatprep.subr.mxu0 %v3157
        %3346 = vmatpush2.msra.mxu0 %v3156
        %3347 = vmatprep.subr.mxu0 %v3153
        %3348 = vmatpush2.msra.mxu0 %v3152
        %3349 = vmatprep.subr.mxu0 %v3149
        %3350 = vmatpush2.msra.mxu0 %v3148
        %3351 = vmatprep.subr.mxu0 %v3145
        %3352 = vmatpush2.msra.mxu0 %v3144
        %3353 = vmatprep.subr.mxu0 %v3141
        %3354 = vmatpush2.msra.mxu0 %v3140
        %3355 = vmatprep.subr.mxu0 %v3137
        %3356 = vmatpush2.msra.mxu0 %v3136
        %3357 = vmatprep.subr.mxu0 %v3133
        %3358 = vmatpush2.msra.mxu0 %v3132
        %3359 = vmatprep.mubr.f32.mxu0 %v2935
        %3360 = vmatmul.mubr.f32.gmra.mxu0 %v2934
        %v3361 = vpop.f32.mrf.mxu0
        %v3362 = vadd.f32 %v3285, %v3361
        %v3363 = vpop.f32.mrf.mxu0
        %v3364 = vadd.f32 %v3287, %v3363
        %3365 = vmatprep.mubr.f32.mxu0 %v2939
        %3366 = vmatmul.mubr.f32.gmra.mxu0 %v2938
        %v3367 = vpop.f32.mrf.mxu0
        %v3368 = vadd.f32 %v3291, %v3367
        %v3369 = vpop.f32.mrf.mxu0
        %v3370 = vadd.f32 %v3293, %v3369
        %3371 = vdwg.mxu0
        %3372 = vmatprep.subr.mxu0 %v3003
        %3373 = vmatpush1.msra.mxu0 %v3002
        %3374 = vmatprep.subr.mxu0 %v2999
        %3375 = vmatpush1.msra.mxu0 %v2998
        %3376 = vmatprep.subr.mxu0 %v2995
        %3377 = vmatpush1.msra.mxu0 %v2994
        %3378 = vmatprep.subr.mxu0 %v2991
        %3379 = vmatpush1.msra.mxu0 %v2990
        %3380 = vmatprep.subr.mxu0 %v2987
        %3381 = vmatpush1.msra.mxu0 %v2986
        %3382 = vmatprep.subr.mxu0 %v2983
        %3383 = vmatpush1.msra.mxu0 %v2982
        %3384 = vmatprep.subr.mxu0 %v2979
        %3385 = vmatpush1.msra.mxu0 %v2978
        %3386 = vmatprep.subr.mxu0 %v2975
        %3387 = vmatpush1.msra.mxu0 %v2974
        %3388 = vmatprep.subr.mxu0 %v2971
        %3389 = vmatpush1.msra.mxu0 %v2970
        %3390 = vmatprep.subr.mxu0 %v2967
        %3391 = vmatpush1.msra.mxu0 %v2966
        %3392 = vmatprep.subr.mxu0 %v2963
        %3393 = vmatpush1.msra.mxu0 %v2962
        %3394 = vmatprep.subr.mxu0 %v2959
        %3395 = vmatpush1.msra.mxu0 %v2958
        %3396 = vmatprep.subr.mxu0 %v2955
        %3397 = vmatpush1.msra.mxu0 %v2954
        %3398 = vmatprep.subr.mxu0 %v2951
        %3399 = vmatpush1.msra.mxu0 %v2950
        %3400 = vmatprep.subr.mxu0 %v2947
        %3401 = vmatpush1.msra.mxu0 %v2946
        %3402 = vmatprep.subr.mxu0 %v2943
        %3403 = vmatpush1.msra.mxu0 %v2942
        %3404 = vmatprep.subr.mxu0 %v3067
        %3405 = vmatpush2.msra.mxu0 %v3066
        %3406 = vmatprep.subr.mxu0 %v3063
        %3407 = vmatpush2.msra.mxu0 %v3062
        %3408 = vmatprep.subr.mxu0 %v3059
        %3409 = vmatpush2.msra.mxu0 %v3058
        %3410 = vmatprep.subr.mxu0 %v3055
        %3411 = vmatpush2.msra.mxu0 %v3054
        %3412 = vmatprep.subr.mxu0 %v3051
        %3413 = vmatpush2.msra.mxu0 %v3050
        %3414 = vmatprep.subr.mxu0 %v3047
        %3415 = vmatpush2.msra.mxu0 %v3046
        %3416 = vmatprep.subr.mxu0 %v3043
        %3417 = vmatpush2.msra.mxu0 %v3042
        %3418 = vmatprep.subr.mxu0 %v3039
        %3419 = vmatpush2.msra.mxu0 %v3038
        %3420 = vmatprep.subr.mxu0 %v3035
        %3421 = vmatpush2.msra.mxu0 %v3034
        %3422 = vmatprep.subr.mxu0 %v3031
        %3423 = vmatpush2.msra.mxu0 %v3030
        %3424 = vmatprep.subr.mxu0 %v3027
        %3425 = vmatpush2.msra.mxu0 %v3026
        %3426 = vmatprep.subr.mxu0 %v3023
        %3427 = vmatpush2.msra.mxu0 %v3022
        %3428 = vmatprep.subr.mxu0 %v3019
        %3429 = vmatpush2.msra.mxu0 %v3018
        %3430 = vmatprep.subr.mxu0 %v3015
        %3431 = vmatpush2.msra.mxu0 %v3014
        %3432 = vmatprep.subr.mxu0 %v3011
        %3433 = vmatpush2.msra.mxu0 %v3010
        %3434 = vmatprep.subr.mxu0 %v3007
        %3435 = vmatpush2.msra.mxu0 %v3006
        %3436 = vmatprep.mubr.f32.mxu0 %v2933
        %3437 = vmatmul.mubr.f32.gmra.mxu0 %v2932
        %v3438 = vpop.f32.mrf.mxu0
        %v3439 = vadd.f32 %v3209, %v3438
        %v3440 = vpop.f32.mrf.mxu0
        %v3441 = vadd.f32 %v3213, %v3440
        %3442 = vmatprep.mubr.f32.mxu0 %v2937
        %3443 = vmatmul.mubr.f32.gmra.mxu0 %v2936
        %v3444 = vpop.f32.mrf.mxu0
        %v3445 = vadd.f32 %v3209, %v3444
        %v3446 = vpop.f32.mrf.mxu0
        %v3447 = vadd.f32 %v3213, %v3446
        %3448 = vdwg.mxu0
        %3449 = vmatprep.subr.mxu0 %v3131
        %3450 = vmatpush1.msra.mxu0 %v3130
        %3451 = vmatprep.subr.mxu0 %v3127
        %3452 = vmatpush1.msra.mxu0 %v3126
        %3453 = vmatprep.subr.mxu0 %v3123
        %3454 = vmatpush1.msra.mxu0 %v3122
        %3455 = vmatprep.subr.mxu0 %v3119
        %3456 = vmatpush1.msra.mxu0 %v3118
        %3457 = vmatprep.subr.mxu0 %v3115
        %3458 = vmatpush1.msra.mxu0 %v3114
        %3459 = vmatprep.subr.mxu0 %v3111
        %3460 = vmatpush1.msra.mxu0 %v3110
        %3461 = vmatprep.subr.mxu0 %v3107
        %3462 = vmatpush1.msra.mxu0 %v3106
        %3463 = vmatprep.subr.mxu0 %v3103
        %3464 = vmatpush1.msra.mxu0 %v3102
        %3465 = vmatprep.subr.mxu0 %v3099
        %3466 = vmatpush1.msra.mxu0 %v3098
        %3467 = vmatprep.subr.mxu0 %v3095
        %3468 = vmatpush1.msra.mxu0 %v3094
        %3469 = vmatprep.subr.mxu0 %v3091
        %3470 = vmatpush1.msra.mxu0 %v3090
        %3471 = vmatprep.subr.mxu0 %v3087
        %3472 = vmatpush1.msra.mxu0 %v3086
        %3473 = vmatprep.subr.mxu0 %v3083
        %3474 = vmatpush1.msra.mxu0 %v3082
        %3475 = vmatprep.subr.mxu0 %v3079
        %3476 = vmatpush1.msra.mxu0 %v3078
        %3477 = vmatprep.subr.mxu0 %v3075
        %3478 = vmatpush1.msra.mxu0 %v3074
        %3479 = vmatprep.subr.mxu0 %v3071
        %3480 = vmatpush1.msra.mxu0 %v3070
        %3481 = vmatprep.subr.mxu0 %v3195
        %3482 = vmatpush2.msra.mxu0 %v3194
        %3483 = vmatprep.subr.mxu0 %v3191
        %3484 = vmatpush2.msra.mxu0 %v3190
        %3485 = vmatprep.subr.mxu0 %v3187
        %3486 = vmatpush2.msra.mxu0 %v3186
        %3487 = vmatprep.subr.mxu0 %v3183
        %3488 = vmatpush2.msra.mxu0 %v3182
        %3489 = vmatprep.subr.mxu0 %v3179
        %3490 = vmatpush2.msra.mxu0 %v3178
        %3491 = vmatprep.subr.mxu0 %v3175
        %3492 = vmatpush2.msra.mxu0 %v3174
        %3493 = vmatprep.subr.mxu0 %v3171
        %3494 = vmatpush2.msra.mxu0 %v3170
        %3495 = vmatprep.subr.mxu0 %v3167
        %3496 = vmatpush2.msra.mxu0 %v3166
        %3497 = vmatprep.subr.mxu0 %v3163
        %3498 = vmatpush2.msra.mxu0 %v3162
        %3499 = vmatprep.subr.mxu0 %v3159
        %3500 = vmatpush2.msra.mxu0 %v3158
        %3501 = vmatprep.subr.mxu0 %v3155
        %3502 = vmatpush2.msra.mxu0 %v3154
        %3503 = vmatprep.subr.mxu0 %v3151
        %3504 = vmatpush2.msra.mxu0 %v3150
        %3505 = vmatprep.subr.mxu0 %v3147
        %3506 = vmatpush2.msra.mxu0 %v3146
        %3507 = vmatprep.subr.mxu0 %v3143
        %3508 = vmatpush2.msra.mxu0 %v3142
        %3509 = vmatprep.subr.mxu0 %v3139
        %3510 = vmatpush2.msra.mxu0 %v3138
        %3511 = vmatprep.subr.mxu0 %v3135
        %3512 = vmatpush2.msra.mxu0 %v3134
        %3513 = vmatprep.mubr.f32.mxu0 %v2935
        %3514 = vmatmul.mubr.f32.gmra.mxu0 %v2934
        %v3515 = vpop.f32.mrf.mxu0
        %v3516 = vadd.f32 %v3439, %v3515
        %v3517 = vpop.f32.mrf.mxu0
        %v3518 = vadd.f32 %v3441, %v3517
        %3519 = vmatprep.mubr.f32.mxu0 %v2939
        %3520 = vmatmul.mubr.f32.gmra.mxu0 %v2938
        %v3521 = vpop.f32.mrf.mxu0
        %v3522 = vadd.f32 %v3445, %v3521
        %v3523 = vpop.f32.mrf.mxu0
        %v3524 = vadd.f32 %v3447, %v3523
        %3525 = vdwg.mxu0
        %v3526 = vld [vmem:[%s23] sm:$0xf]
        %v3527 = vld [vmem:[%s24] sm:$0xf]
        %v3528 = vadd.f32 %v3362, %v3364
        %v3529 = vadd.f32 %v3528, %v3516
        %v3530 = vadd.f32 %v3529, %v3518
        %3531 = vadd.xlane.f32.xlu0 %v3530
        %v3532 = vpop.xlane.xlu0 %3531
        %v3533 = vadd.f32 %v3368, %v3370
        %v3534 = vadd.f32 %v3533, %v3522
        %v3535 = vadd.f32 %v3534, %v3524
        %3536 = vadd.xlane.f32.xlu0 %v3535
        %v3537 = vpop.xlane.xlu0 %3536
        %v3538 = vmul.f32 %v3532, %v1759
        %v3539 = vmul.f32 %v3537, %v1759
        %v3540 = vsub.f32 %v3362, %v3538
        %v3541 = vsub.f32 %v3364, %v3538
        %v3542 = vsub.f32 %v3516, %v3538
        %v3543 = vsub.f32 %v3518, %v3538
        %v3544 = vsub.f32 %v3368, %v3539
        %v3545 = vsub.f32 %v3370, %v3539
        %v3546 = vsub.f32 %v3522, %v3539
        %v3547 = vsub.f32 %v3524, %v3539
        %v3548 = vmul.f32 %v3540, %v3540
        %v3549 = vmul.f32 %v3541, %v3541
        %v3550 = vmul.f32 %v3542, %v3542
        %v3551 = vmul.f32 %v3543, %v3543
        %v3552 = vmul.f32 %v3544, %v3544
        %v3553 = vmul.f32 %v3545, %v3545
        %v3554 = vmul.f32 %v3546, %v3546
        %v3555 = vmul.f32 %v3547, %v3547
        %v3556 = vadd.f32 %v3548, %v3549
        %v3557 = vadd.f32 %v3556, %v3550
        %v3558 = vadd.f32 %v3557, %v3551
        %3559 = vadd.xlane.f32.xlu0 %v3558
        %v3560 = vpop.xlane.xlu0 %3559
        %v3561 = vadd.f32 %v3552, %v3553
        %v3562 = vadd.f32 %v3561, %v3554
        %v3563 = vadd.f32 %v3562, %v3555
        %3564 = vadd.xlane.f32.xlu0 %v3563
        %v3565 = vpop.xlane.xlu0 %3564
        %v3566 = vmul.f32 %v3560, %v1759
        %v3567 = vmul.f32 %v3565, %v1759
        %v3568 = vadd.f32 %v3566, 1e-05
        %v3569 = vadd.f32 %v3567, 1e-05
        %v3570 = vrsqrt.pop %v3568
        %v3571 = vrsqrt.pop %v3569
        %v3572 = vmul.f32 %v3540, %v3570
        %v3573 = vmul.f32 %v3541, %v3570
        %v3574 = vmul.f32 %v3542, %v3570
        %v3575 = vmul.f32 %v3543, %v3570
        %v3576 = vmul.f32 %v3544, %v3571
        %v3577 = vmul.f32 %v3545, %v3571
        %v3578 = vmul.f32 %v3546, %v3571
        %v3579 = vmul.f32 %v3547, %v3571
        %v3581 = vlaneseq
        %v3582 = vshrl.u32 %v3581, 7
        %v3583 = vsub.s32 0, %v3582
        %v3584 = vrot.slane %v3526, %v3583
        %v3585 = vlaneseq
        %v3586 = vshrl.u32 %v3585, 7
        %v3587 = vsub.s32 1, %v3586
        %v3588 = vrot.slane %v3526, %v3587
        %v3589 = vlaneseq
        %v3590 = vshrl.u32 %v3589, 7
        %v3591 = vsub.s32 2, %v3590
        %v3592 = vrot.slane %v3526, %v3591
        %v3593 = vlaneseq
        %v3594 = vshrl.u32 %v3593, 7
        %v3595 = vsub.s32 3, %v3594
        %v3596 = vrot.slane %v3526, %v3595
        %v3601 = vmul.f32 %v3572, %v3584
        %v3602 = vmul.f32 %v3573, %v3588
        %v3603 = vmul.f32 %v3574, %v3592
        %v3604 = vmul.f32 %v3575, %v3596
        %v3605 = vmul.f32 %v3576, %v3584
        %v3606 = vmul.f32 %v3577, %v3588
        %v3607 = vmul.f32 %v3578, %v3592
        %v3608 = vmul.f32 %v3579, %v3596
        %v3610 = vlaneseq
        %v3611 = vshrl.u32 %v3610, 7
        %v3612 = vsub.s32 0, %v3611
        %v3613 = vrot.slane %v3527, %v3612
        %v3614 = vlaneseq
        %v3615 = vshrl.u32 %v3614, 7
        %v3616 = vsub.s32 1, %v3615
        %v3617 = vrot.slane %v3527, %v3616
        %v3618 = vlaneseq
        %v3619 = vshrl.u32 %v3618, 7
        %v3620 = vsub.s32 2, %v3619
        %v3621 = vrot.slane %v3527, %v3620
        %v3622 = vlaneseq
        %v3623 = vshrl.u32 %v3622, 7
        %v3624 = vsub.s32 3, %v3623
        %v3625 = vrot.slane %v3527, %v3624
        %v3630 = vadd.f32 %v3601, %v3613
        %v3631 = vadd.f32 %v3602, %v3617
        %v3632 = vadd.f32 %v3603, %v3621
        %v3633 = vadd.f32 %v3604, %v3625
        %v3634 = vadd.f32 %v3605, %v3613
        %v3635 = vadd.f32 %v3606, %v3617
        %v3636 = vadd.f32 %v3607, %v3621
        %v3637 = vadd.f32 %v3608, %v3625
        %v3638 = vmul.f32 %v3630, 0.5
        %v3639 = vmul.f32 %v3631, 0.5
        %v3640 = vmul.f32 %v3632, 0.5
        %v3641 = vmul.f32 %v3633, 0.5
        %v3642 = vmul.f32 %v3634, 0.5
        %v3643 = vmul.f32 %v3635, 0.5
        %v3644 = vmul.f32 %v3636, 0.5
        %v3645 = vmul.f32 %v3637, 0.5
        %v3646 = vmul.f32 %v3630, 0.70710677
        %v3647 = vmul.f32 %v3631, 0.70710677
        %v3648 = vmul.f32 %v3632, 0.70710677
        %v3649 = vmul.f32 %v3633, 0.70710677
        %v3650 = vmul.f32 %v3634, 0.70710677
        %v3651 = vmul.f32 %v3635, 0.70710677
        %v3652 = vmul.f32 %v3636, 0.70710677
        %v3653 = vmul.f32 %v3637, 0.70710677
        %v3654 = verf.f32.pop %v3646
        %v3655 = verf.f32.pop %v3647
        %v3656 = verf.f32.pop %v3648
        %v3657 = verf.f32.pop %v3649
        %v3658 = verf.f32.pop %v3650
        %v3659 = verf.f32.pop %v3651
        %v3660 = verf.f32.pop %v3652
        %v3661 = verf.f32.pop %v3653
        %v3662 = vadd.f32 %v3654, 1.0
        %v3663 = vadd.f32 %v3655, 1.0
        %v3664 = vadd.f32 %v3656, 1.0
        %v3665 = vadd.f32 %v3657, 1.0
        %v3666 = vadd.f32 %v3658, 1.0
        %v3667 = vadd.f32 %v3659, 1.0
        %v3668 = vadd.f32 %v3660, 1.0
        %v3669 = vadd.f32 %v3661, 1.0
        %v3670 = vmul.f32 %v3638, %v3662
        %v3671 = vmul.f32 %v3639, %v3663
        %v3672 = vmul.f32 %v3640, %v3664
        %v3673 = vmul.f32 %v3641, %v3665
        %v3674 = vmul.f32 %v3642, %v3666
        %v3675 = vmul.f32 %v3643, %v3667
        %v3676 = vmul.f32 %v3644, %v3668
        %v3677 = vmul.f32 %v3645, %v3669
        %v3678 = vadd.f32 %v3670, %v2932
        %v3679 = vadd.f32 %v3671, %v2933
        %v3680 = vadd.f32 %v3672, %v2934
        %v3681 = vadd.f32 %v3673, %v2935
        %v3682 = vadd.f32 %v3674, %v2936
        %v3683 = vadd.f32 %v3675, %v2937
        %v3684 = vadd.f32 %v3676, %v2938
        %v3685 = vadd.f32 %v3677, %v2939
        %v3686 = vld [vmem:[#allocation17] sm:$0xff]
        %v3687 = vld [vmem:[#allocation17 + $0x8] sm:$0xff]
        %v3688 = vld [vmem:[#allocation17 + $0x10] sm:$0xff]
        %v3689 = vld [vmem:[#allocation17 + $0x18] sm:$0xff]
        %v3690 = vld [vmem:[#allocation17 + $0x20] sm:$0xff]
        %v3691 = vld [vmem:[#allocation17 + $0x28] sm:$0xff]
        %v3692 = vld [vmem:[#allocation17 + $0x30] sm:$0xff]
        %v3693 = vld [vmem:[#allocation17 + $0x38] sm:$0xff]
        %v3694 = vld [vmem:[#allocation17 + $0x40] sm:$0xff]
        %v3695 = vld [vmem:[#allocation17 + $0x48] sm:$0xff]
        %v3696 = vld [vmem:[#allocation17 + $0x50] sm:$0xff]
        %v3697 = vld [vmem:[#allocation17 + $0x58] sm:$0xff]
        %v3698 = vld [vmem:[#allocation17 + $0x60] sm:$0xff]
        %v3699 = vld [vmem:[#allocation17 + $0x68] sm:$0xff]
        %v3700 = vld [vmem:[#allocation17 + $0x70] sm:$0xff]
        %v3701 = vld [vmem:[#allocation17 + $0x78] sm:$0xff]
        %v3702 = vld [vmem:[#allocation17 + $0x80] sm:$0xff]
        %v3703 = vld [vmem:[#allocation17 + $0x88] sm:$0xff]
        %v3704 = vld [vmem:[#allocation17 + $0x90] sm:$0xff]
        %v3705 = vld [vmem:[#allocation17 + $0x98] sm:$0xff]
        %v3706 = vld [vmem:[#allocation17 + $0xa0] sm:$0xff]
        %v3707 = vld [vmem:[#allocation17 + $0xa8] sm:$0xff]
        %v3708 = vld [vmem:[#allocation17 + $0xb0] sm:$0xff]
        %v3709 = vld [vmem:[#allocation17 + $0xb8] sm:$0xff]
        %v3710 = vld [vmem:[#allocation17 + $0xc0] sm:$0xff]
        %v3711 = vld [vmem:[#allocation17 + $0xc8] sm:$0xff]
        %v3712 = vld [vmem:[#allocation17 + $0xd0] sm:$0xff]
        %v3713 = vld [vmem:[#allocation17 + $0xd8] sm:$0xff]
        %v3714 = vld [vmem:[#allocation17 + $0xe0] sm:$0xff]
        %v3715 = vld [vmem:[#allocation17 + $0xe8] sm:$0xff]
        %v3716 = vld [vmem:[#allocation17 + $0xf0] sm:$0xff]
        %v3717 = vld [vmem:[#allocation17 + $0xf8] sm:$0xff]
        %v3718 = vld [vmem:[#allocation17 + $0x100] sm:$0xff]
        %v3719 = vld [vmem:[#allocation17 + $0x108] sm:$0xff]
        %v3720 = vld [vmem:[#allocation17 + $0x110] sm:$0xff]
        %v3721 = vld [vmem:[#allocation17 + $0x118] sm:$0xff]
        %v3722 = vld [vmem:[#allocation17 + $0x120] sm:$0xff]
        %v3723 = vld [vmem:[#allocation17 + $0x128] sm:$0xff]
        %v3724 = vld [vmem:[#allocation17 + $0x130] sm:$0xff]
        %v3725 = vld [vmem:[#allocation17 + $0x138] sm:$0xff]
        %v3726 = vld [vmem:[#allocation17 + $0x140] sm:$0xff]
        %v3727 = vld [vmem:[#allocation17 + $0x148] sm:$0xff]
        %v3728 = vld [vmem:[#allocation17 + $0x150] sm:$0xff]
        %v3729 = vld [vmem:[#allocation17 + $0x158] sm:$0xff]
        %v3730 = vld [vmem:[#allocation17 + $0x160] sm:$0xff]
        %v3731 = vld [vmem:[#allocation17 + $0x168] sm:$0xff]
        %v3732 = vld [vmem:[#allocation17 + $0x170] sm:$0xff]
        %v3733 = vld [vmem:[#allocation17 + $0x178] sm:$0xff]
        %v3734 = vld [vmem:[#allocation17 + $0x180] sm:$0xff]
        %v3735 = vld [vmem:[#allocation17 + $0x188] sm:$0xff]
        %v3736 = vld [vmem:[#allocation17 + $0x190] sm:$0xff]
        %v3737 = vld [vmem:[#allocation17 + $0x198] sm:$0xff]
        %v3738 = vld [vmem:[#allocation17 + $0x1a0] sm:$0xff]
        %v3739 = vld [vmem:[#allocation17 + $0x1a8] sm:$0xff]
        %v3740 = vld [vmem:[#allocation17 + $0x1b0] sm:$0xff]
        %v3741 = vld [vmem:[#allocation17 + $0x1b8] sm:$0xff]
        %v3742 = vld [vmem:[#allocation17 + $0x1c0] sm:$0xff]
        %v3743 = vld [vmem:[#allocation17 + $0x1c8] sm:$0xff]
        %v3744 = vld [vmem:[#allocation17 + $0x1d0] sm:$0xff]
        %v3745 = vld [vmem:[#allocation17 + $0x1d8] sm:$0xff]
        %v3746 = vld [vmem:[#allocation17 + $0x1e0] sm:$0xff]
        %v3747 = vld [vmem:[#allocation17 + $0x1e8] sm:$0xff]
        %v3748 = vld [vmem:[#allocation17 + $0x1f0] sm:$0xff]
        %v3749 = vld [vmem:[#allocation17 + $0x1f8] sm:$0xff]
        %v3750 = vld [vmem:[#allocation17 + $0x200] sm:$0xff]
        %v3751 = vld [vmem:[#allocation17 + $0x208] sm:$0xff]
        %v3752 = vld [vmem:[#allocation17 + $0x210] sm:$0xff]
        %v3753 = vld [vmem:[#allocation17 + $0x218] sm:$0xff]
        %v3754 = vld [vmem:[#allocation17 + $0x220] sm:$0xff]
        %v3755 = vld [vmem:[#allocation17 + $0x228] sm:$0xff]
        %v3756 = vld [vmem:[#allocation17 + $0x230] sm:$0xff]
        %v3757 = vld [vmem:[#allocation17 + $0x238] sm:$0xff]
        %v3758 = vld [vmem:[#allocation17 + $0x240] sm:$0xff]
        %v3759 = vld [vmem:[#allocation17 + $0x248] sm:$0xff]
        %v3760 = vld [vmem:[#allocation17 + $0x250] sm:$0xff]
        %v3761 = vld [vmem:[#allocation17 + $0x258] sm:$0xff]
        %v3762 = vld [vmem:[#allocation17 + $0x260] sm:$0xff]
        %v3763 = vld [vmem:[#allocation17 + $0x268] sm:$0xff]
        %v3764 = vld [vmem:[#allocation17 + $0x270] sm:$0xff]
        %v3765 = vld [vmem:[#allocation17 + $0x278] sm:$0xff]
        %v3766 = vld [vmem:[#allocation17 + $0x280] sm:$0xff]
        %v3767 = vld [vmem:[#allocation17 + $0x288] sm:$0xff]
        %v3768 = vld [vmem:[#allocation17 + $0x290] sm:$0xff]
        %v3769 = vld [vmem:[#allocation17 + $0x298] sm:$0xff]
        %v3770 = vld [vmem:[#allocation17 + $0x2a0] sm:$0xff]
        %v3771 = vld [vmem:[#allocation17 + $0x2a8] sm:$0xff]
        %v3772 = vld [vmem:[#allocation17 + $0x2b0] sm:$0xff]
        %v3773 = vld [vmem:[#allocation17 + $0x2b8] sm:$0xff]
        %v3774 = vld [vmem:[#allocation17 + $0x2c0] sm:$0xff]
        %v3775 = vld [vmem:[#allocation17 + $0x2c8] sm:$0xff]
        %v3776 = vld [vmem:[#allocation17 + $0x2d0] sm:$0xff]
        %v3777 = vld [vmem:[#allocation17 + $0x2d8] sm:$0xff]
        %v3778 = vld [vmem:[#allocation17 + $0x2e0] sm:$0xff]
        %v3779 = vld [vmem:[#allocation17 + $0x2e8] sm:$0xff]
        %v3780 = vld [vmem:[#allocation17 + $0x2f0] sm:$0xff]
        %v3781 = vld [vmem:[#allocation17 + $0x2f8] sm:$0xff]
        %v3782 = vld [vmem:[#allocation17 + $0x300] sm:$0xff]
        %v3783 = vld [vmem:[#allocation17 + $0x308] sm:$0xff]
        %v3784 = vld [vmem:[#allocation17 + $0x310] sm:$0xff]
        %v3785 = vld [vmem:[#allocation17 + $0x318] sm:$0xff]
        %v3786 = vld [vmem:[#allocation17 + $0x320] sm:$0xff]
        %v3787 = vld [vmem:[#allocation17 + $0x328] sm:$0xff]
        %v3788 = vld [vmem:[#allocation17 + $0x330] sm:$0xff]
        %v3789 = vld [vmem:[#allocation17 + $0x338] sm:$0xff]
        %v3790 = vld [vmem:[#allocation17 + $0x340] sm:$0xff]
        %v3791 = vld [vmem:[#allocation17 + $0x348] sm:$0xff]
        %v3792 = vld [vmem:[#allocation17 + $0x350] sm:$0xff]
        %v3793 = vld [vmem:[#allocation17 + $0x358] sm:$0xff]
        %v3794 = vld [vmem:[#allocation17 + $0x360] sm:$0xff]
        %v3795 = vld [vmem:[#allocation17 + $0x368] sm:$0xff]
        %v3796 = vld [vmem:[#allocation17 + $0x370] sm:$0xff]
        %v3797 = vld [vmem:[#allocation17 + $0x378] sm:$0xff]
        %v3798 = vld [vmem:[#allocation17 + $0x380] sm:$0xff]
        %v3799 = vld [vmem:[#allocation17 + $0x388] sm:$0xff]
        %v3800 = vld [vmem:[#allocation17 + $0x390] sm:$0xff]
        %v3801 = vld [vmem:[#allocation17 + $0x398] sm:$0xff]
        %v3802 = vld [vmem:[#allocation17 + $0x3a0] sm:$0xff]
        %v3803 = vld [vmem:[#allocation17 + $0x3a8] sm:$0xff]
        %v3804 = vld [vmem:[#allocation17 + $0x3b0] sm:$0xff]
        %v3805 = vld [vmem:[#allocation17 + $0x3b8] sm:$0xff]
        %v3806 = vld [vmem:[#allocation17 + $0x3c0] sm:$0xff]
        %v3807 = vld [vmem:[#allocation17 + $0x3c8] sm:$0xff]
        %v3808 = vld [vmem:[#allocation17 + $0x3d0] sm:$0xff]
        %v3809 = vld [vmem:[#allocation17 + $0x3d8] sm:$0xff]
        %v3810 = vld [vmem:[#allocation17 + $0x3e0] sm:$0xff]
        %v3811 = vld [vmem:[#allocation17 + $0x3e8] sm:$0xff]
        %v3812 = vld [vmem:[#allocation17 + $0x3f0] sm:$0xff]
        %v3813 = vld [vmem:[#allocation17 + $0x3f8] sm:$0xff]
        %v3814 = vld [vmem:[%s26] sm:$0x3]
        %v3816 = vlaneseq
        %v3817 = vshrl.u32 %v3816, 7
        %v3818 = vsub.s32 0, %v3817
        %v3819 = vrot.slane %v3814, %v3818
        %v3820 = vlaneseq
        %v3821 = vshrl.u32 %v3820, 7
        %v3822 = vsub.s32 1, %v3821
        %v3823 = vrot.slane %v3814, %v3822
        %3826 = vmatprep.subr.mxu0 %v3717
        %3827 = vmatpush1.msra.mxu0 %v3716
        %3828 = vmatprep.subr.mxu0 %v3715
        %3829 = vmatpush1.msra.mxu0 %v3714
        %3830 = vmatprep.subr.mxu0 %v3713
        %3831 = vmatpush1.msra.mxu0 %v3712
        %3832 = vmatprep.subr.mxu0 %v3711
        %3833 = vmatpush1.msra.mxu0 %v3710
        %3834 = vmatprep.subr.mxu0 %v3709
        %3835 = vmatpush1.msra.mxu0 %v3708
        %3836 = vmatprep.subr.mxu0 %v3707
        %3837 = vmatpush1.msra.mxu0 %v3706
        %3838 = vmatprep.subr.mxu0 %v3705
        %3839 = vmatpush1.msra.mxu0 %v3704
        %3840 = vmatprep.subr.mxu0 %v3703
        %3841 = vmatpush1.msra.mxu0 %v3702
        %3842 = vmatprep.subr.mxu0 %v3701
        %3843 = vmatpush1.msra.mxu0 %v3700
        %3844 = vmatprep.subr.mxu0 %v3699
        %3845 = vmatpush1.msra.mxu0 %v3698
        %3846 = vmatprep.subr.mxu0 %v3697
        %3847 = vmatpush1.msra.mxu0 %v3696
        %3848 = vmatprep.subr.mxu0 %v3695
        %3849 = vmatpush1.msra.mxu0 %v3694
        %3850 = vmatprep.subr.mxu0 %v3693
        %3851 = vmatpush1.msra.mxu0 %v3692
        %3852 = vmatprep.subr.mxu0 %v3691
        %3853 = vmatpush1.msra.mxu0 %v3690
        %3854 = vmatprep.subr.mxu0 %v3689
        %3855 = vmatpush1.msra.mxu0 %v3688
        %3856 = vmatprep.subr.mxu0 %v3687
        %3857 = vmatpush1.msra.mxu0 %v3686
        %3858 = vmatprep.subr.mxu0 %v3749
        %3859 = vmatpush2.msra.mxu0 %v3748
        %3860 = vmatprep.subr.mxu0 %v3747
        %3861 = vmatpush2.msra.mxu0 %v3746
        %3862 = vmatprep.subr.mxu0 %v3745
        %3863 = vmatpush2.msra.mxu0 %v3744
        %3864 = vmatprep.subr.mxu0 %v3743
        %3865 = vmatpush2.msra.mxu0 %v3742
        %3866 = vmatprep.subr.mxu0 %v3741
        %3867 = vmatpush2.msra.mxu0 %v3740
        %3868 = vmatprep.subr.mxu0 %v3739
        %3869 = vmatpush2.msra.mxu0 %v3738
        %3870 = vmatprep.subr.mxu0 %v3737
        %3871 = vmatpush2.msra.mxu0 %v3736
        %3872 = vmatprep.subr.mxu0 %v3735
        %3873 = vmatpush2.msra.mxu0 %v3734
        %3874 = vmatprep.subr.mxu0 %v3733
        %3875 = vmatpush2.msra.mxu0 %v3732
        %3876 = vmatprep.subr.mxu0 %v3731
        %3877 = vmatpush2.msra.mxu0 %v3730
        %3878 = vmatprep.subr.mxu0 %v3729
        %3879 = vmatpush2.msra.mxu0 %v3728
        %3880 = vmatprep.subr.mxu0 %v3727
        %3881 = vmatpush2.msra.mxu0 %v3726
        %3882 = vmatprep.subr.mxu0 %v3725
        %3883 = vmatpush2.msra.mxu0 %v3724
        %3884 = vmatprep.subr.mxu0 %v3723
        %3885 = vmatpush2.msra.mxu0 %v3722
        %3886 = vmatprep.subr.mxu0 %v3721
        %3887 = vmatpush2.msra.mxu0 %v3720
        %3888 = vmatprep.subr.mxu0 %v3719
        %3889 = vmatpush2.msra.mxu0 %v3718
        %3890 = vmatprep.mubr.f32.mxu0 %v3679
        %3891 = vmatmul.mubr.f32.gmra.mxu0 %v3678
        %v3892 = vpop.f32.mrf.mxu0
        %v3893 = vadd.f32 %v3819, %v3892
        %v3894 = vpop.f32.mrf.mxu0
        %v3895 = vadd.f32 %v3823, %v3894
        %3896 = vmatprep.mubr.f32.mxu0 %v3683
        %3897 = vmatmul.mubr.f32.gmra.mxu0 %v3682
        %v3898 = vpop.f32.mrf.mxu0
        %v3899 = vadd.f32 %v3819, %v3898
        %v3900 = vpop.f32.mrf.mxu0
        %v3901 = vadd.f32 %v3823, %v3900
        %3902 = vdwg.mxu0
        %3903 = vmatprep.subr.mxu0 %v3781
        %3904 = vmatpush1.msra.mxu0 %v3780
        %3905 = vmatprep.subr.mxu0 %v3779
        %3906 = vmatpush1.msra.mxu0 %v3778
        %3907 = vmatprep.subr.mxu0 %v3777
        %3908 = vmatpush1.msra.mxu0 %v3776
        %3909 = vmatprep.subr.mxu0 %v3775
        %3910 = vmatpush1.msra.mxu0 %v3774
        %3911 = vmatprep.subr.mxu0 %v3773
        %3912 = vmatpush1.msra.mxu0 %v3772
        %3913 = vmatprep.subr.mxu0 %v3771
        %3914 = vmatpush1.msra.mxu0 %v3770
        %3915 = vmatprep.subr.mxu0 %v3769
        %3916 = vmatpush1.msra.mxu0 %v3768
        %3917 = vmatprep.subr.mxu0 %v3767
        %3918 = vmatpush1.msra.mxu0 %v3766
        %3919 = vmatprep.subr.mxu0 %v3765
        %3920 = vmatpush1.msra.mxu0 %v3764
        %3921 = vmatprep.subr.mxu0 %v3763
        %3922 = vmatpush1.msra.mxu0 %v3762
        %3923 = vmatprep.subr.mxu0 %v3761
        %3924 = vmatpush1.msra.mxu0 %v3760
        %3925 = vmatprep.subr.mxu0 %v3759
        %3926 = vmatpush1.msra.mxu0 %v3758
        %3927 = vmatprep.subr.mxu0 %v3757
        %3928 = vmatpush1.msra.mxu0 %v3756
        %3929 = vmatprep.subr.mxu0 %v3755
        %3930 = vmatpush1.msra.mxu0 %v3754
        %3931 = vmatprep.subr.mxu0 %v3753
        %3932 = vmatpush1.msra.mxu0 %v3752
        %3933 = vmatprep.subr.mxu0 %v3751
        %3934 = vmatpush1.msra.mxu0 %v3750
        %3935 = vmatprep.subr.mxu0 %v3813
        %3936 = vmatpush2.msra.mxu0 %v3812
        %3937 = vmatprep.subr.mxu0 %v3811
        %3938 = vmatpush2.msra.mxu0 %v3810
        %3939 = vmatprep.subr.mxu0 %v3809
        %3940 = vmatpush2.msra.mxu0 %v3808
        %3941 = vmatprep.subr.mxu0 %v3807
        %3942 = vmatpush2.msra.mxu0 %v3806
        %3943 = vmatprep.subr.mxu0 %v3805
        %3944 = vmatpush2.msra.mxu0 %v3804
        %3945 = vmatprep.subr.mxu0 %v3803
        %3946 = vmatpush2.msra.mxu0 %v3802
        %3947 = vmatprep.subr.mxu0 %v3801
        %3948 = vmatpush2.msra.mxu0 %v3800
        %3949 = vmatprep.subr.mxu0 %v3799
        %3950 = vmatpush2.msra.mxu0 %v3798
        %3951 = vmatprep.subr.mxu0 %v3797
        %3952 = vmatpush2.msra.mxu0 %v3796
        %3953 = vmatprep.subr.mxu0 %v3795
        %3954 = vmatpush2.msra.mxu0 %v3794
        %3955 = vmatprep.subr.mxu0 %v3793
        %3956 = vmatpush2.msra.mxu0 %v3792
        %3957 = vmatprep.subr.mxu0 %v3791
        %3958 = vmatpush2.msra.mxu0 %v3790
        %3959 = vmatprep.subr.mxu0 %v3789
        %3960 = vmatpush2.msra.mxu0 %v3788
        %3961 = vmatprep.subr.mxu0 %v3787
        %3962 = vmatpush2.msra.mxu0 %v3786
        %3963 = vmatprep.subr.mxu0 %v3785
        %3964 = vmatpush2.msra.mxu0 %v3784
        %3965 = vmatprep.subr.mxu0 %v3783
        %3966 = vmatpush2.msra.mxu0 %v3782
        %3967 = vmatprep.mubr.f32.mxu0 %v3681
        %3968 = vmatmul.mubr.f32.gmra.mxu0 %v3680
        %v3969 = vpop.f32.mrf.mxu0
        %v3970 = vadd.f32 %v3893, %v3969
        %v3971 = vpop.f32.mrf.mxu0
        %v3972 = vadd.f32 %v3895, %v3971
        %3973 = vmatprep.mubr.f32.mxu0 %v3685
        %3974 = vmatmul.mubr.f32.gmra.mxu0 %v3684
        %v3975 = vpop.f32.mrf.mxu0
        %v3976 = vadd.f32 %v3899, %v3975
        %v3977 = vpop.f32.mrf.mxu0
        %v3978 = vadd.f32 %v3901, %v3977
        %3979 = vdwg.mxu0
        %v3980 = vlaneseq
        %v3981 = vand.u32 %v3980, 127
        %v3982 = vadd.s32 %v3981, 128
        %vm3983 = vcmp.eq.s32.totalorder %v3981, 0
        %vm3984 = vcmp.eq.s32.totalorder %v3982, 0
        %v3985 = vsel %vm3983, 1, 0
        %v3986 = vsel %vm3984, 1, 0
        %v3987 = vcvt.s32.f32 %v3985
        %v3988 = vcvt.s32.f32 %v3986
        %3990 = vset.pattern.permute.xlu0 0
        %3991 = vperm.xlu0 %3990, %v2200
        %v3992 = vpop.permute.xlu0 %3991
        %3995 = vset.pattern.permute.xlu0 0
        %3996 = vperm.xlu0 %3995, %v2201
        %v3997 = vpop.permute.xlu0 %3996
        %v3999 = vmul.f32 %v3992, %v3987
        %v4000 = vmul.f32 %v3992, %v3988
        %v4001 = vmul.f32 %v3997, %v3987
        %v4002 = vmul.f32 %v3997, %v3988
        %v4003 = vadd.f32 %v3970, %v3999
        %v4004 = vadd.f32 %v3972, %v4000
        %v4005 = vadd.f32 %v3976, %v4001
        %v4006 = vadd.f32 %v3978, %v4002
        %4007 = vst [vmem:[%s939] sm:$0xff] %v4003
        %4008 = vst [vmem:[%s939 + $0x8] sm:$0xff] %v4004
        %4009 = vst [vmem:[%s939 + $0x10] sm:$0xff] %v4005
        %4010 = vst [vmem:[%s939 + $0x18] sm:$0xff] %v4006
        %s4011 = sand.u32 %s628, 1
        %s4012 = scalar_lea.sflag [#allocation5], %s4011
        %s4013 = sand.u32 %s628, 1
        %s4014 = smul.addr %s4013, 32
        %s4015 = scalar_lea.vmem [#allocation18], %s4014
        // Predicated region
        $region165: #{tpu_custom_call.1} parent=127 // pred_check
          %p4016 = pneg %p638
        $region166: #{tpu_custom_call.1} parent=127 // pred_check_branch
          %4018 = sbr.rel (%p4016) target = $region168
        $region167: #{tpu_custom_call.1} parent=127 // pred_region
          %s4019 = smul.u32 2, %s48
          %s4021 = ssub.s32 512, 512
          %4022 = vsyncadd %s4012, %s4021
          %s4023 = smul.addr %s4019, 2
          %s4024 = smul.addr %s4023, 128
          %s4025 = scalar_lea.hbm %s27, %s4024
          %s4026 = sshll.u32 %s4015, 4
          %s4027 = int_to_ptr.vmem [resolvable:$true] %s4026
          %4032 = dma.vmem_to_hbm [thread:$0]  %s4027, 512, %s4025, %s4012, 256, 256, 16
        $region168: #{tpu_custom_call.1} parent=127 // pred_fallthru
          _
      $region128: #{tpu_custom_call.1} parent=5 // pred_fallthru
        _
      %p4033 = scmp.le.s32.totalorder 2, %s43
      // Predicated region
      $region169: #{tpu_custom_call.1} parent=5 // pred_check
        %p4034 = pneg %p4033
      $region170: #{tpu_custom_call.1} parent=5 // pred_check_branch
        %4036 = sbr.rel (%p4034) target = $region172
      $region171: #{tpu_custom_call.1} parent=5 // pred_region
        %s4037 = ssub.s32 %s43, 2
        // Predicated region
        $region173: #{tpu_custom_call.1} parent=171 // pred_check
          %p4038 = pneg %p644
        $region174: #{tpu_custom_call.1} parent=171 // pred_check_branch
          %4040 = sbr.rel (%p4038) target = $region176
        $region175: #{tpu_custom_call.1} parent=171 // pred_region
          %s4041 = sand.u32 %s629, 1
          %s4042 = scalar_lea.sflag [#allocation5], %s4041
          %s4043 = sand.u32 %s629, 1
          %s4044 = smul.addr %s4043, 32
          %s4045 = scalar_lea.vmem [#allocation18], %s4044
          %4046 = dma.done %s4042, 512
        $region176: #{tpu_custom_call.1} parent=171 // pred_fallthru
          _
      $region172: #{tpu_custom_call.1} parent=5 // pred_fallthru
        _
    $region6: #{tpu_custom_call.1} parent=1 // loop_footer
      %s47 = sadd.s32 1, %s43
    $region7: #{tpu_custom_call.1} parent=1 // loop_footer_branch
      %42 = sbr.rel target = $region3
    $region8: #{tpu_custom_call.1} parent=1 // loop_exit
      _
    %4047 = vsyncpa [#allocation4], 1
    %s4048 = scalar_lea.sflag [#allocation4], 1
    %4049 = vsyncpa %s4048, 1
    %4050 = vsyncpa [#allocation7], 1
    %4051 = vsyncpa [#allocation10], 1
    %4052 = vsyncpa [#allocation13], 1
    %4053 = vsyncpa [#allocation16], 1
    %4054 = vsyncpa [#allocation5], 1
    %s4055 = scalar_lea.sflag [#allocation5], 1
    %4056 = vsyncpa %s4055, 1

</llo_original>
